<compile_context>
chip_gen: v6e
topology: v6e:2x2x1
jax: 0.10.0
libtpu: 0.0.40
codegen_flags: <defaults>
</compile_context>

<pallas_src>
import functools
import math

import jax
import jax.numpy as jnp
from jax.experimental import pallas as pl
from jax.experimental.pallas import tpu as pltpu


def _round_up(x, m):
    return ((x + m - 1) // m) * m


def _full_spec(shape):
    """BlockSpec covering the whole array (grid=(1,))."""
    nd = len(shape)
    return pl.BlockSpec(tuple(shape), lambda i, nd=nd: (0,) * nd)


# ---------------------------------------------------------------------------
# Kernel 1: lane-dense conv-as-matmul (+ bias + ReLU) for conv1..conv4
#   out (Cout, TM) = relu(W (Cout, K) @ Xcols (K, TM) + b (Cout, 1))
# ---------------------------------------------------------------------------
def _conv_mm_kernel(w_ref, b_ref, x_ref, o_ref):
    w = w_ref[...].astype(jnp.bfloat16)   # bf16 MXU operands,
    x = x_ref[...].astype(jnp.bfloat16)
    y = jnp.dot(w, x, preferred_element_type=jnp.float32)   # f32 accumulate
    y = y + b_ref[...]                    # (Cout, 1) broadcasts over lanes
    o_ref[...] = jnp.maximum(y, 0.0)      # ReLU in f32


def conv2d_relu_lane_dense(xc, wm, b2, *, ksize, stride):
    """xc: (Cin, B, H, W); wm: (Cout, KH*KW*Cin) cols ordered (kh, kw, ci);
    b2: (Cout, 1).  Returns (Cout, B, OH, OW)."""
    Cin, B, H, W = xc.shape
    Cout, K = wm.shape
    OH = (H - ksize) // stride + 1
    OW = (W - ksize) // stride + 1
    M = B * OH * OW

    # TODO(synk): patch extraction stays as lean XLA glue (strided slice + concat);
    # folding it into the kernel needs in-kernel reshapes of odd spatial sizes.
    slabs = []
    for kh in range(ksize):
        for kw in range(ksize):
            s = xc[:, :, kh:kh + stride * OH:stride, kw:kw + stride * OW:stride]
            slabs.append(s.reshape(Cin, M))            # contiguous reshape
    xcols = jnp.concatenate(slabs, axis=0)             # (K, M), rows (kh, kw, ci)

    TM = min(512, _round_up(M, 128))                   # multiple of 128 (and 256)
    grid = (pl.cdiv(M, TM),)                           # ragged tail handled by Pallas

    out = pl.pallas_call(
        _conv_mm_kernel,
        out_shape=jax.ShapeDtypeStruct((Cout, M), jnp.float32),
        grid=grid,
        in_specs=[
            pl.BlockSpec((Cout, K), lambda i: (0, 0)),
            pl.BlockSpec((Cout, 1), lambda i: (0, 0)),
            pl.BlockSpec((K, TM), lambda i: (0, i)),
        ],
        out_specs=pl.BlockSpec((Cout, TM), lambda i: (0, i)),
        compiler_params=pltpu.CompilerParams(dimension_semantics=("parallel",)),
    )(wm, b2, xcols)
    return out.reshape(Cout, B, OH, OW)


# ---------------------------------------------------------------------------
# Kernel 2: fused tail = conv5 + conv6 + fc + (steer | acceleration) heads
# ---------------------------------------------------------------------------
def _tail_kernel(a5_ref, w5_ref, b5_ref, w6_ref, b6_ref,
                 wf_ref, bf_ref, wh_ref, bh_ref, o_ref, *, batch, steer_dim):
    bf16, f32 = jnp.bfloat16, jnp.float32

    # conv5 (3x3, stride 1, 5x5 -> 3x3) as a single matmul on its im2col matrix.
    a5 = a5_ref[...]                                               # (9B, 576)
    h5 = jnp.dot(a5.astype(bf16), w5_ref[...].astype(bf16),
                 preferred_element_type=f32)
    h5 = jnp.maximum(h5 + b5_ref[...], 0.0)                        # (9B, 128)

    # conv6 (3x3 over a 3x3 map -> 1x1) == FC over the 9 spatial positions.
    acc = jnp.zeros((batch, 256), f32)
    for p in range(9):
        xp = h5[p * batch:(p + 1) * batch, :].astype(bf16)         # (B, 128)
        acc = acc + jnp.dot(xp, w6_ref[p].astype(bf16),
                            preferred_element_type=f32)
    h6 = jnp.maximum(acc + b6_ref[...], 0.0)                       # (B, 256)

    # fc + ReLU
    hf = jnp.dot(h6.astype(bf16), wf_ref[...].astype(bf16),
                 preferred_element_type=f32)
    hf = jnp.maximum(hf + bf_ref[...], 0.0)                        # (B, 100)

    # fused heads: tanh on first steer_dim columns, sigmoid on the rest.
    z = jnp.dot(hf.astype(bf16), wh_ref[...].astype(bf16),
                preferred_element_type=f32) + bh_ref[...]          # (B, steer+acc)
    col = jax.lax.broadcasted_iota(jnp.int32, z.shape, 1)
    o_ref[...] = jnp.where(col < steer_dim, jnp.tanh(z), jax.nn.sigmoid(z))


def tail_forward(params, x4, *, steer_dim):
    """x4: (64, B, 5, 5) conv4 output (CNHW). Returns (B, steer_dim + acc_dim)."""
    _, B, _, _ = x4.shape
    # conv5 im2col (tiny: ~6 KB): rows ordered (oh, ow, b), cols ordered (kh, kw, ci)
    slabs = []
    for kh in range(3):
        for kw in range(3):
            s = x4[:, :, kh:kh + 3, kw:kw + 3]                     # (64, B, 3, 3)
            slabs.append(jnp.transpose(s, (2, 3, 1, 0)).reshape(9 * B, 64))
    a5 = jnp.concatenate(slabs, axis=1)                            # (9B, 576)

    n_out = params["wh"].shape[1]
    return pl.pallas_call(
        functools.partial(_tail_kernel, batch=B, steer_dim=steer_dim),
        out_shape=jax.ShapeDtypeStruct((B, n_out), jnp.float32),
        grid=(1,),
        in_specs=[
            _full_spec(a5.shape),
            _full_spec(params["w5"].shape), _full_spec(params["b5"].shape),
            _full_spec(params["w6"].shape), _full_spec(params["b6"].shape),
            _full_spec(params["wf"].shape), _full_spec(params["bf"].shape),
            _full_spec(params["wh"].shape), _full_spec(params["bh"].shape),
        ],
        out_specs=_full_spec((B, n_out)),
        compiler_params=pltpu.CompilerParams(dimension_semantics=("arbitrary",)),
    )(a5, params["w5"], params["b5"], params["w6"], params["b6"],
      params["wf"], params["bf"], params["wh"], params["bh"])


# ---------------------------------------------------------------------------
# Parameter initialization (mirrors the PyTorch module's init), pre-arranged
# into kernel-friendly layouts.
# ---------------------------------------------------------------------------
_CONV_CFG = [(8, 4, 2), (16, 3, 2), (32, 3, 2), (64, 3, 2), (128, 3, 1), (256, 3, 1)]
_CONV_STATIC = [(4, 2), (3, 2), (3, 2), (3, 2)]   # (ksize, stride) for conv1..conv4


def _xavier_uniform_conv(key, shape, gain):
    cout, cin, kh, kw = shape
    fan_in, fan_out = cin * kh * kw, cout * kh * kw
    a = gain * math.sqrt(6.0 / (fan_in + fan_out))
    return jax.random.uniform(key, shape, jnp.float32, -a, a)


def _linear_default(key, in_f, out_f):
    kw_, kb_ = jax.random.split(key)
    bound = 1.0 / math.sqrt(in_f)
    w = jax.random.uniform(kw_, (out_f, in_f), jnp.float32, -bound, bound)  # (out, in)
    b = jax.random.uniform(kb_, (out_f,), jnp.float32, -bound, bound)
    return w, b


def init_actor_params(key, img_stack, steer_dim=1, acc_dim=2):
    gain = math.sqrt(2.0)   # calculate_gain('relu')
    keys = jax.random.split(key, len(_CONV_CFG) + 3)

    convs_raw, cin = [], img_stack
    for k, (cout, ks, st) in zip(keys[:len(_CONV_CFG)], _CONV_CFG):
        w = _xavier_uniform_conv(k, (cout, cin, ks, ks), gain)   # PyTorch layout
        b = jnp.full((cout,), 0.1, jnp.float32)
        convs_raw.append((w, b, ks))
        cin = cout

    params = {"convs": []}
    for (w, b, ks) in convs_raw[:4]:
        cout, ci = w.shape[0], w.shape[1]
        wm = jnp.transpose(w, (0, 2, 3, 1)).reshape(cout, ks * ks * ci)  # cols (kh,kw,ci)
        params["convs"].append({"w": wm, "b": b.reshape(cout, 1)})

    w5, b5, _ = convs_raw[4]
    params["w5"] = jnp.transpose(w5, (2, 3, 1, 0)).reshape(9 * 64, 128)  # (576, 128)
    params["b5"] = b5.reshape(1, 128)
    w6, b6, _ = convs_raw[5]
    params["w6"] = jnp.transpose(w6, (2, 3, 1, 0)).reshape(9, 128, 256)  # (p, ci, co)
    params["b6"] = b6.reshape(1, 256)

    wf, bf = _linear_default(keys[-3], 256, 100)
    params["wf"] = wf.T                                    # (256, 100)
    params["bf"] = bf.reshape(1, 100)

    ws, bs = _linear_default(keys[-2], 100, steer_dim)
    wa, ba = _linear_default(keys[-1], 100, acc_dim)
    params["wh"] = jnp.concatenate([ws, wa], axis=0).T     # (100, steer+acc)
    params["bh"] = jnp.concatenate([bs, ba], axis=0).reshape(1, steer_dim + acc_dim)
    return params


# ---------------------------------------------------------------------------
# Forward pass
# ---------------------------------------------------------------------------
def actor_forward(params, x, steer_dim=1):
    """x: (B, C, H, W) NCHW, H = W = 96.  Returns (B, steer_dim + acc_dim)."""
    xc = jnp.transpose(x.astype(jnp.float32), (1, 0, 2, 3))   # CNHW (C, B, H, W)
    for layer, (ks, st) in zip(params["convs"], _CONV_STATIC):
        xc = conv2d_relu_lane_dense(xc, layer["w"], layer["b"], ksize=ks, stride=st)
    # xc: (64, B, 5, 5) -> fused conv5 + conv6 + fc + heads in one kernel
    return tail_forward(params, xc, steer_dim=steer_dim)


# ---------------------------------------------------------------------------
if __name__ == "__main__":
    key = jax.random.PRNGKey(0)
    k_param, k_data = jax.random.split(key)

    img_stack, batch = 4, 2
    # 96x96 is required so the conv stack flattens to exactly 256 features.
    x = jax.random.normal(k_data, (batch, img_stack, 96, 96), jnp.float32)
    params = init_actor_params(k_param, img_stack, steer_dim=1, acc_dim=2)

    fwd = jax.jit(actor_forward, static_argnames=("steer_dim",))
    out = jax.block_until_ready(fwd(params, x))

    assert out.shape == (batch, 3), out.shape
    assert bool(jnp.all(jnp.isfinite(out)))
    # steer in [-1, 1], acceleration in [0, 1]
    assert bool(jnp.all(jnp.abs(out[:, 0]) <= 1.0))
    assert bool(jnp.all((out[:, 1:] >= 0.0) & (out[:, 1:] <= 1.0)))

    print("KERNEL_OK")
</pallas_src>

<mosaic_0001>
module attributes {stable_mosaic.version = 11 : i64} {
  func.func @_conv_mm_kernel(%arg0: i32, %arg1: memref<8x64xf32, #tpu.memory_space<vmem>>, %arg2: memref<8x1xf32, #tpu.memory_space<vmem>>, %arg3: memref<64x512xf32, #tpu.memory_space<vmem>>, %arg4: memref<8x512xf32, #tpu.memory_space<vmem>>) attributes {dimension_semantics = [#tpu.dimension_semantics<parallel>], iteration_bounds = array<i64: 9>, scalar_prefetch = 0 : i64, scratch_operands = 0 : i64, tpu.core_type = #tpu.core_type<tc>, window_params = [{pipeline_mode = #tpu.pipeline_mode<synchronous>, transform_indices = @transform_0, window_bounds = array<i64: 8, 64>}, {pipeline_mode = #tpu.pipeline_mode<synchronous>, transform_indices = @transform_1, window_bounds = array<i64: 8, 1>}, {transform_indices = @transform_2, window_bounds = array<i64: 64, 512>}, {transform_indices = @transform_3, window_bounds = array<i64: 8, 512>}]} {
    %c0 = arith.constant 0 : index
    %c0_0 = arith.constant 0 : index
    %0 = vector.load %arg1[%c0, %c0_0] : memref<8x64xf32, #tpu.memory_space<vmem>>, vector<8x64xf32>
    %1 = arith.truncf %0 : vector<8x64xf32> to vector<8x64xbf16>
    %c0_1 = arith.constant 0 : index
    %c0_2 = arith.constant 0 : index
    %2 = vector.load %arg3[%c0_1, %c0_2] : memref<64x512xf32, #tpu.memory_space<vmem>>, vector<64x512xf32>
    %3 = arith.truncf %2 : vector<64x512xf32> to vector<64x512xbf16>
    %cst = arith.constant dense<0.000000e+00> : vector<8x512xf32>
    %4 = tpu.matmul %1, %3, %cst {dimension_numbers = #tpu.dot_dimension_numbers<[1], [0], [0], [1], [0, 0, 1, 1], [], []>} : vector<8x64xbf16>, vector<64x512xbf16>, vector<8x512xf32> -> vector<8x512xf32>
    %c0_3 = arith.constant 0 : index
    %c0_4 = arith.constant 0 : index
    %5 = vector.load %arg2[%c0_3, %c0_4] : memref<8x1xf32, #tpu.memory_space<vmem>>, vector<8x1xf32>
    %6 = vector.broadcast %5 : vector<8x1xf32> to vector<8x512xf32>
    %7 = arith.addf %4, %6 : vector<8x512xf32>
    %cst_5 = arith.constant 0.000000e+00 : f32
    %8 = vector.broadcast %cst_5 : f32 to vector<8x512xf32>
    %9 = arith.maximumf %7, %8 : vector<8x512xf32>
    %c0_6 = arith.constant 0 : index
    %c0_7 = arith.constant 0 : index
    %10 = vector.load %arg4[%c0_6, %c0_7] : memref<8x512xf32, #tpu.memory_space<vmem>>, vector<8x512xf32>
    tpu.vector_store %arg4[%c0_6, %c0_7], %9 {strides = array<i32>} : memref<8x512xf32, #tpu.memory_space<vmem>>, vector<8x512xf32>,
    return
  }
  func.func @transform_0(%arg0: i32) -> (i32, i32) {
    %c0_i32 = arith.constant 0 : i32
    %c0_i32_0 = arith.constant 0 : i32
    %c0_i32_1 = arith.constant 0 : i32
    return %c0_i32, %c0_i32_0 : i32, i32
  }
  func.func @transform_1(%arg0: i32) -> (i32, i32) {
    %c0_i32 = arith.constant 0 : i32
    %c0_i32_0 = arith.constant 0 : i32
    %c0_i32_1 = arith.constant 0 : i32
    return %c0_i32, %c0_i32_0 : i32, i32
  }
  func.func @transform_2(%arg0: i32) -> (i32, i32) {
    %c0_i32 = arith.constant 0 : i32
    %c0_i32_0 = arith.constant 0 : i32
    return %c0_i32, %arg0 : i32, i32
  }
  func.func @transform_3(%arg0: i32) -> (i32, i32) {
    %c0_i32 = arith.constant 0 : i32
    %c0_i32_0 = arith.constant 0 : i32
    return %c0_i32, %arg0 : i32, i32
  }
}

module attributes {stable_mosaic.version = 11 : i64} {
  func.func @_conv_mm_kernel(%arg0: i32, %arg1: memref<16x72xf32, #tpu.memory_space<vmem>>, %arg2: memref<16x1xf32, #tpu.memory_space<vmem>>, %arg3: memref<72x512xf32, #tpu.memory_space<vmem>>, %arg4: memref<16x512xf32, #tpu.memory_space<vmem>>) attributes {dimension_semantics = [#tpu.dimension_semantics<parallel>], iteration_bounds = array<i64: 3>, scalar_prefetch = 0 : i64, scratch_operands = 0 : i64, tpu.core_type = #tpu.core_type<tc>, window_params = [{pipeline_mode = #tpu.pipeline_mode<synchronous>, transform_indices = @transform_0, window_bounds = array<i64: 16, 72>}, {pipeline_mode = #tpu.pipeline_mode<synchronous>, transform_indices = @transform_1, window_bounds = array<i64: 16, 1>}, {transform_indices = @transform_2, window_bounds = array<i64: 72, 512>}, {transform_indices = @transform_3, window_bounds = array<i64: 16, 512>}]} {
    %c0 = arith.constant 0 : index
    %c0_0 = arith.constant 0 : index
    %0 = vector.load %arg1[%c0, %c0_0] : memref<16x72xf32, #tpu.memory_space<vmem>>, vector<16x72xf32>
    %1 = arith.truncf %0 : vector<16x72xf32> to vector<16x72xbf16>
    %c0_1 = arith.constant 0 : index
    %c0_2 = arith.constant 0 : index
    %2 = vector.load %arg3[%c0_1, %c0_2] : memref<72x512xf32, #tpu.memory_space<vmem>>, vector<72x512xf32>
    %3 = arith.truncf %2 : vector<72x512xf32> to vector<72x512xbf16>
    %cst = arith.constant dense<0.000000e+00> : vector<16x512xf32>
    %4 = tpu.matmul %1, %3, %cst {dimension_numbers = #tpu.dot_dimension_numbers<[1], [0], [0], [1], [0, 0, 1, 1], [], []>} : vector<16x72xbf16>, vector<72x512xbf16>, vector<16x512xf32> -> vector<16x512xf32>
    %c0_3 = arith.constant 0 : index
    %c0_4 = arith.constant 0 : index
    %5 = vector.load %arg2[%c0_3, %c0_4] : memref<16x1xf32, #tpu.memory_space<vmem>>, vector<16x1xf32>
    %6 = vector.broadcast %5 : vector<16x1xf32> to vector<16x512xf32>
    %7 = arith.addf %4, %6 : vector<16x512xf32>
    %cst_5 = arith.constant 0.000000e+00 : f32
    %8 = vector.broadcast %cst_5 : f32 to vector<16x512xf32>
    %9 = arith.maximumf %7, %8 : vector<16x512xf32>
    %c0_6 = arith.constant 0 : index
    %c0_7 = arith.constant 0 : index
    %10 = vector.load %arg4[%c0_6, %c0_7] : memref<16x512xf32, #tpu.memory_space<vmem>>, vector<16x512xf32>
    tpu.vector_store %arg4[%c0_6, %c0_7], %9 {strides = array<i32>} : memref<16x512xf32, #tpu.memory_space<vmem>>, vector<16x512xf32>,
    return
  }
  func.func @transform_0(%arg0: i32) -> (i32, i32) {
    %c0_i32 = arith.constant 0 : i32
    %c0_i32_0 = arith.constant 0 : i32
    %c0_i32_1 = arith.constant 0 : i32
    return %c0_i32, %c0_i32_0 : i32, i32
  }
  func.func @transform_1(%arg0: i32) -> (i32, i32) {
    %c0_i32 = arith.constant 0 : i32
    %c0_i32_0 = arith.constant 0 : i32
    %c0_i32_1 = arith.constant 0 : i32
    return %c0_i32, %c0_i32_0 : i32, i32
  }
  func.func @transform_2(%arg0: i32) -> (i32, i32) {
    %c0_i32 = arith.constant 0 : i32
    %c0_i32_0 = arith.constant 0 : i32
    return %c0_i32, %arg0 : i32, i32
  }
  func.func @transform_3(%arg0: i32) -> (i32, i32) {
    %c0_i32 = arith.constant 0 : i32
    %c0_i32_0 = arith.constant 0 : i32
    return %c0_i32, %arg0 : i32, i32
  }
}

module attributes {stable_mosaic.version = 11 : i64} {
  func.func @_conv_mm_kernel(%arg0: i32, %arg1: memref<32x144xf32, #tpu.memory_space<vmem>>, %arg2: memref<32x1xf32, #tpu.memory_space<vmem>>, %arg3: memref<144x256xf32, #tpu.memory_space<vmem>>, %arg4: memref<32x256xf32, #tpu.memory_space<vmem>>) attributes {dimension_semantics = [#tpu.dimension_semantics<parallel>], iteration_bounds = array<i64: 1>, scalar_prefetch = 0 : i64, scratch_operands = 0 : i64, tpu.core_type = #tpu.core_type<tc>, window_params = [{pipeline_mode = #tpu.pipeline_mode<synchronous>, transform_indices = @transform_0, window_bounds = array<i64: 32, 144>}, {pipeline_mode = #tpu.pipeline_mode<synchronous>, transform_indices = @transform_1, window_bounds = array<i64: 32, 1>}, {transform_indices = @transform_2, window_bounds = array<i64: 144, 256>}, {transform_indices = @transform_3, window_bounds = array<i64: 32, 256>}]} {
    %c0 = arith.constant 0 : index
    %c0_0 = arith.constant 0 : index
    %0 = vector.load %arg1[%c0, %c0_0] : memref<32x144xf32, #tpu.memory_space<vmem>>, vector<32x144xf32>
    %1 = arith.truncf %0 : vector<32x144xf32> to vector<32x144xbf16>
    %c0_1 = arith.constant 0 : index
    %c0_2 = arith.constant 0 : index
    %2 = vector.load %arg3[%c0_1, %c0_2] : memref<144x256xf32, #tpu.memory_space<vmem>>, vector<144x256xf32>
    %3 = arith.truncf %2 : vector<144x256xf32> to vector<144x256xbf16>
    %cst = arith.constant dense<0.000000e+00> : vector<32x256xf32>
    %4 = tpu.matmul %1, %3, %cst {dimension_numbers = #tpu.dot_dimension_numbers<[1], [0], [0], [1], [0, 0, 1, 1], [], []>} : vector<32x144xbf16>, vector<144x256xbf16>, vector<32x256xf32> -> vector<32x256xf32>
    %c0_3 = arith.constant 0 : index
    %c0_4 = arith.constant 0 : index
    %5 = vector.load %arg2[%c0_3, %c0_4] : memref<32x1xf32, #tpu.memory_space<vmem>>, vector<32x1xf32>
    %6 = vector.broadcast %5 : vector<32x1xf32> to vector<32x256xf32>
    %7 = arith.addf %4, %6 : vector<32x256xf32>
    %cst_5 = arith.constant 0.000000e+00 : f32
    %8 = vector.broadcast %cst_5 : f32 to vector<32x256xf32>
    %9 = arith.maximumf %7, %8 : vector<32x256xf32>
    %c0_6 = arith.constant 0 : index
    %c0_7 = arith.constant 0 : index
    %10 = vector.load %arg4[%c0_6, %c0_7] : memref<32x256xf32, #tpu.memory_space<vmem>>, vector<32x256xf32>
    tpu.vector_store %arg4[%c0_6, %c0_7], %9 {strides = array<i32>} : memref<32x256xf32, #tpu.memory_space<vmem>>, vector<32x256xf32>,
    return
  }
  func.func @transform_0(%arg0: i32) -> (i32, i32) {
    %c0_i32 = arith.constant 0 : i32
    %c0_i32_0 = arith.constant 0 : i32
    %c0_i32_1 = arith.constant 0 : i32
    return %c0_i32, %c0_i32_0 : i32, i32
  }
  func.func @transform_1(%arg0: i32) -> (i32, i32) {
    %c0_i32 = arith.constant 0 : i32
    %c0_i32_0 = arith.constant 0 : i32
    %c0_i32_1 = arith.constant 0 : i32
    return %c0_i32, %c0_i32_0 : i32, i32
  }
  func.func @transform_2(%arg0: i32) -> (i32, i32) {
    %c0_i32 = arith.constant 0 : i32
    %c0_i32_0 = arith.constant 0 : i32
    return %c0_i32, %arg0 : i32, i32
  }
  func.func @transform_3(%arg0: i32) -> (i32, i32) {
    %c0_i32 = arith.constant 0 : i32
    %c0_i32_0 = arith.constant 0 : i32
    return %c0_i32, %arg0 : i32, i32
  }
}

module attributes {stable_mosaic.version = 11 : i64} {
  func.func @_conv_mm_kernel(%arg0: i32, %arg1: memref<64x288xf32, #tpu.memory_space<vmem>>, %arg2: memref<64x1xf32, #tpu.memory_space<vmem>>, %arg3: memref<288x128xf32, #tpu.memory_space<vmem>>, %arg4: memref<64x128xf32, #tpu.memory_space<vmem>>) attributes {dimension_semantics = [#tpu.dimension_semantics<parallel>], iteration_bounds = array<i64: 1>, scalar_prefetch = 0 : i64, scratch_operands = 0 : i64, tpu.core_type = #tpu.core_type<tc>, window_params = [{pipeline_mode = #tpu.pipeline_mode<synchronous>, transform_indices = @transform_0, window_bounds = array<i64: 64, 288>}, {pipeline_mode = #tpu.pipeline_mode<synchronous>, transform_indices = @transform_1, window_bounds = array<i64: 64, 1>}, {transform_indices = @transform_2, window_bounds = array<i64: 288, 128>}, {transform_indices = @transform_3, window_bounds = array<i64: 64, 128>}]} {
    %c0 = arith.constant 0 : index
    %c0_0 = arith.constant 0 : index
    %0 = vector.load %arg1[%c0, %c0_0] : memref<64x288xf32, #tpu.memory_space<vmem>>, vector<64x288xf32>
    %1 = arith.truncf %0 : vector<64x288xf32> to vector<64x288xbf16>
    %c0_1 = arith.constant 0 : index
    %c0_2 = arith.constant 0 : index
    %2 = vector.load %arg3[%c0_1, %c0_2] : memref<288x128xf32, #tpu.memory_space<vmem>>, vector<288x128xf32>
    %3 = arith.truncf %2 : vector<288x128xf32> to vector<288x128xbf16>
    %cst = arith.constant dense<0.000000e+00> : vector<64x128xf32>
    %4 = tpu.matmul %1, %3, %cst {dimension_numbers = #tpu.dot_dimension_numbers<[1], [0], [0], [1], [0, 0, 1, 1], [], []>} : vector<64x288xbf16>, vector<288x128xbf16>, vector<64x128xf32> -> vector<64x128xf32>
    %c0_3 = arith.constant 0 : index
    %c0_4 = arith.constant 0 : index
    %5 = vector.load %arg2[%c0_3, %c0_4] : memref<64x1xf32, #tpu.memory_space<vmem>>, vector<64x1xf32>
    %6 = vector.broadcast %5 : vector<64x1xf32> to vector<64x128xf32>
    %7 = arith.addf %4, %6 : vector<64x128xf32>
    %cst_5 = arith.constant 0.000000e+00 : f32
    %8 = vector.broadcast %cst_5 : f32 to vector<64x128xf32>
    %9 = arith.maximumf %7, %8 : vector<64x128xf32>
    %c0_6 = arith.constant 0 : index
    %c0_7 = arith.constant 0 : index
    %10 = vector.load %arg4[%c0_6, %c0_7] : memref<64x128xf32, #tpu.memory_space<vmem>>, vector<64x128xf32>
    tpu.vector_store %arg4[%c0_6, %c0_7], %9 {strides = array<i32>} : memref<64x128xf32, #tpu.memory_space<vmem>>, vector<64x128xf32>,
    return
  }
  func.func @transform_0(%arg0: i32) -> (i32, i32) {
    %c0_i32 = arith.constant 0 : i32
    %c0_i32_0 = arith.constant 0 : i32
    %c0_i32_1 = arith.constant 0 : i32
    return %c0_i32, %c0_i32_0 : i32, i32
  }
  func.func @transform_1(%arg0: i32) -> (i32, i32) {
    %c0_i32 = arith.constant 0 : i32
    %c0_i32_0 = arith.constant 0 : i32
    %c0_i32_1 = arith.constant 0 : i32
    return %c0_i32, %c0_i32_0 : i32, i32
  }
  func.func @transform_2(%arg0: i32) -> (i32, i32) {
    %c0_i32 = arith.constant 0 : i32
    %c0_i32_0 = arith.constant 0 : i32
    return %c0_i32, %arg0 : i32, i32
  }
  func.func @transform_3(%arg0: i32) -> (i32, i32) {
    %c0_i32 = arith.constant 0 : i32
    %c0_i32_0 = arith.constant 0 : i32
    return %c0_i32, %arg0 : i32, i32
  }
}

module attributes {stable_mosaic.version = 11 : i64} {
  func.func @_tail_kernel(%arg0: i32, %arg1: memref<18x576xf32, #tpu.memory_space<vmem>>, %arg2: memref<576x128xf32, #tpu.memory_space<vmem>>, %arg3: memref<1x128xf32, #tpu.memory_space<vmem>>, %arg4: memref<9x128x256xf32, #tpu.memory_space<vmem>>, %arg5: memref<1x256xf32, #tpu.memory_space<vmem>>, %arg6: memref<256x100xf32, #tpu.memory_space<vmem>>, %arg7: memref<1x100xf32, #tpu.memory_space<vmem>>, %arg8: memref<100x3xf32, #tpu.memory_space<vmem>>, %arg9: memref<1x3xf32, #tpu.memory_space<vmem>>, %arg10: memref<2x3xf32, #tpu.memory_space<vmem>>) attributes {dimension_semantics = [#tpu.dimension_semantics<arbitrary>], iteration_bounds = array<i64: 1>, scalar_prefetch = 0 : i64, scratch_operands = 0 : i64, tpu.core_type = #tpu.core_type<tc>, window_params = [{pipeline_mode = #tpu.pipeline_mode<synchronous>, transform_indices = @transform_0, window_bounds = array<i64: 18, 576>}, {pipeline_mode = #tpu.pipeline_mode<synchronous>, transform_indices = @transform_1, window_bounds = array<i64: 576, 128>}, {pipeline_mode = #tpu.pipeline_mode<synchronous>, transform_indices = @transform_2, window_bounds = array<i64: 1, 128>}, {pipeline_mode = #tpu.pipeline_mode<synchronous>, transform_indices = @transform_3, window_bounds = array<i64: 9, 128, 256>}, {pipeline_mode = #tpu.pipeline_mode<synchronous>, transform_indices = @transform_4, window_bounds = array<i64: 1, 256>}, {pipeline_mode = #tpu.pipeline_mode<synchronous>, transform_indices = @transform_5, window_bounds = array<i64: 256, 100>}, {pipeline_mode = #tpu.pipeline_mode<synchronous>, transform_indices = @transform_6, window_bounds = array<i64: 1, 100>}, {pipeline_mode = #tpu.pipeline_mode<synchronous>, transform_indices = @transform_7, window_bounds = array<i64: 100, 3>}, {pipeline_mode = #tpu.pipeline_mode<synchronous>, transform_indices = @transform_8, window_bounds = array<i64: 1, 3>}, {pipeline_mode = #tpu.pipeline_mode<synchronous>, transform_indices = @transform_9, window_bounds = array<i64: 2, 3>}]} {
    %c0 = arith.constant 0 : index
    %c0_0 = arith.constant 0 : index
    %0 = vector.load %arg1[%c0, %c0_0] : memref<18x576xf32, #tpu.memory_space<vmem>>, vector<18x576xf32>
    %1 = arith.truncf %0 : vector<18x576xf32> to vector<18x576xbf16>
    %c0_1 = arith.constant 0 : index
    %c0_2 = arith.constant 0 : index
    %2 = vector.load %arg2[%c0_1, %c0_2] : memref<576x128xf32, #tpu.memory_space<vmem>>, vector<576x128xf32>
    %3 = arith.truncf %2 : vector<576x128xf32> to vector<576x128xbf16>
    %cst = arith.constant dense<0.000000e+00> : vector<18x128xf32>
    %4 = tpu.matmul %1, %3, %cst {dimension_numbers = #tpu.dot_dimension_numbers<[1], [0], [0], [1], [0, 0, 1, 1], [], []>} : vector<18x576xbf16>, vector<576x128xbf16>, vector<18x128xf32> -> vector<18x128xf32>
    %c0_3 = arith.constant 0 : index
    %c0_4 = arith.constant 0 : index
    %5 = vector.load %arg3[%c0_3, %c0_4] : memref<1x128xf32, #tpu.memory_space<vmem>>, vector<1x128xf32>
    %6 = vector.broadcast %5 : vector<1x128xf32> to vector<18x128xf32>
    %7 = arith.addf %4, %6 : vector<18x128xf32>
    %cst_5 = arith.constant 0.000000e+00 : f32
    %8 = vector.broadcast %cst_5 : f32 to vector<18x128xf32>
    %9 = arith.maximumf %7, %8 : vector<18x128xf32>
    %cst_6 = arith.constant 0.000000e+00 : f32
    %10 = vector.broadcast %cst_6 : f32 to vector<2x256xf32>
    %11 = vector.extract_strided_slice %9 {offsets = [0, 0], sizes = [2, 128], strides = [1, 1]} : vector<18x128xf32> to vector<2x128xf32>
    %12 = arith.truncf %11 : vector<2x128xf32> to vector<2x128xbf16>
    %c0_7 = arith.constant 0 : index
    %c0_8 = arith.constant 0 : index
    %c0_9 = arith.constant 0 : index
    %13 = vector.load %arg4[%c0_7, %c0_8, %c0_9] : memref<9x128x256xf32, #tpu.memory_space<vmem>>, vector<1x128x256xf32>
    %14 = vector.shape_cast %13 : vector<1x128x256xf32> to vector<128x256xf32>
    %15 = arith.truncf %14 : vector<128x256xf32> to vector<128x256xbf16>
    %cst_10 = arith.constant dense<0.000000e+00> : vector<2x256xf32>
    %16 = tpu.matmul %12, %15, %cst_10 {dimension_numbers = #tpu.dot_dimension_numbers<[1], [0], [0], [1], [0, 0, 1, 1], [], []>} : vector<2x128xbf16>, vector<128x256xbf16>, vector<2x256xf32> -> vector<2x256xf32>
    %17 = arith.addf %10, %16 : vector<2x256xf32>
    %18 = vector.extract_strided_slice %9 {offsets = [2, 0], sizes = [2, 128], strides = [1, 1]} : vector<18x128xf32> to vector<2x128xf32>
    %19 = arith.truncf %18 : vector<2x128xf32> to vector<2x128xbf16>
    %c1 = arith.constant 1 : index
    %c0_11 = arith.constant 0 : index
    %c0_12 = arith.constant 0 : index
    %20 = vector.load %arg4[%c1, %c0_11, %c0_12] : memref<9x128x256xf32, #tpu.memory_space<vmem>>, vector<1x128x256xf32>
    %21 = vector.shape_cast %20 : vector<1x128x256xf32> to vector<128x256xf32>
    %22 = arith.truncf %21 : vector<128x256xf32> to vector<128x256xbf16>
    %cst_13 = arith.constant dense<0.000000e+00> : vector<2x256xf32>
    %23 = tpu.matmul %19, %22, %cst_13 {dimension_numbers = #tpu.dot_dimension_numbers<[1], [0], [0], [1], [0, 0, 1, 1], [], []>} : vector<2x128xbf16>, vector<128x256xbf16>, vector<2x256xf32> -> vector<2x256xf32>
    %24 = arith.addf %17, %23 : vector<2x256xf32>
    %25 = vector.extract_strided_slice %9 {offsets = [4, 0], sizes = [2, 128], strides = [1, 1]} : vector<18x128xf32> to vector<2x128xf32>
    %26 = arith.truncf %25 : vector<2x128xf32> to vector<2x128xbf16>
    %c2 = arith.constant 2 : index
    %c0_14 = arith.constant 0 : index
    %c0_15 = arith.constant 0 : index
    %27 = vector.load %arg4[%c2, %c0_14, %c0_15] : memref<9x128x256xf32, #tpu.memory_space<vmem>>, vector<1x128x256xf32>
    %28 = vector.shape_cast %27 : vector<1x128x256xf32> to vector<128x256xf32>
    %29 = arith.truncf %28 : vector<128x256xf32> to vector<128x256xbf16>
    %cst_16 = arith.constant dense<0.000000e+00> : vector<2x256xf32>
    %30 = tpu.matmul %26, %29, %cst_16 {dimension_numbers = #tpu.dot_dimension_numbers<[1], [0], [0], [1], [0, 0, 1, 1], [], []>} : vector<2x128xbf16>, vector<128x256xbf16>, vector<2x256xf32> -> vector<2x256xf32>
    %31 = arith.addf %24, %30 : vector<2x256xf32>
    %32 = vector.extract_strided_slice %9 {offsets = [6, 0], sizes = [2, 128], strides = [1, 1]} : vector<18x128xf32> to vector<2x128xf32>
    %33 = arith.truncf %32 : vector<2x128xf32> to vector<2x128xbf16>
    %c3 = arith.constant 3 : index
    %c0_17 = arith.constant 0 : index
    %c0_18 = arith.constant 0 : index
    %34 = vector.load %arg4[%c3, %c0_17, %c0_18] : memref<9x128x256xf32, #tpu.memory_space<vmem>>, vector<1x128x256xf32>
    %35 = vector.shape_cast %34 : vector<1x128x256xf32> to vector<128x256xf32>
    %36 = arith.truncf %35 : vector<128x256xf32> to vector<128x256xbf16>
    %cst_19 = arith.constant dense<0.000000e+00> : vector<2x256xf32>
    %37 = tpu.matmul %33, %36, %cst_19 {dimension_numbers = #tpu.dot_dimension_numbers<[1], [0], [0], [1], [0, 0, 1, 1], [], []>} : vector<2x128xbf16>, vector<128x256xbf16>, vector<2x256xf32> -> vector<2x256xf32>
    %38 = arith.addf %31, %37 : vector<2x256xf32>
    %39 = vector.extract_strided_slice %9 {offsets = [8, 0], sizes = [2, 128], strides = [1, 1]} : vector<18x128xf32> to vector<2x128xf32>
    %40 = arith.truncf %39 : vector<2x128xf32> to vector<2x128xbf16>
    %c4 = arith.constant 4 : index
    %c0_20 = arith.constant 0 : index
    %c0_21 = arith.constant 0 : index
    %41 = vector.load %arg4[%c4, %c0_20, %c0_21] : memref<9x128x256xf32, #tpu.memory_space<vmem>>, vector<1x128x256xf32>
    %42 = vector.shape_cast %41 : vector<1x128x256xf32> to vector<128x256xf32>
    %43 = arith.truncf %42 : vector<128x256xf32> to vector<128x256xbf16>
    %cst_22 = arith.constant dense<0.000000e+00> : vector<2x256xf32>
    %44 = tpu.matmul %40, %43, %cst_22 {dimension_numbers = #tpu.dot_dimension_numbers<[1], [0], [0], [1], [0, 0, 1, 1], [], []>} : vector<2x128xbf16>, vector<128x256xbf16>, vector<2x256xf32> -> vector<2x256xf32>
    %45 = arith.addf %38, %44 : vector<2x256xf32>
    %46 = vector.extract_strided_slice %9 {offsets = [10, 0], sizes = [2, 128], strides = [1, 1]} : vector<18x128xf32> to vector<2x128xf32>
    %47 = arith.truncf %46 : vector<2x128xf32> to vector<2x128xbf16>
    %c5 = arith.constant 5 : index
    %c0_23 = arith.constant 0 : index
    %c0_24 = arith.constant 0 : index
    %48 = vector.load %arg4[%c5, %c0_23, %c0_24] : memref<9x128x256xf32, #tpu.memory_space<vmem>>, vector<1x128x256xf32>
    %49 = vector.shape_cast %48 : vector<1x128x256xf32> to vector<128x256xf32>
    %50 = arith.truncf %49 : vector<128x256xf32> to vector<128x256xbf16>
    %cst_25 = arith.constant dense<0.000000e+00> : vector<2x256xf32>
    %51 = tpu.matmul %47, %50, %cst_25 {dimension_numbers = #tpu.dot_dimension_numbers<[1], [0], [0], [1], [0, 0, 1, 1], [], []>} : vector<2x128xbf16>, vector<128x256xbf16>, vector<2x256xf32> -> vector<2x256xf32>
    %52 = arith.addf %45, %51 : vector<2x256xf32>
    %53 = vector.extract_strided_slice %9 {offsets = [12, 0], sizes = [2, 128], strides = [1, 1]} : vector<18x128xf32> to vector<2x128xf32>
    %54 = arith.truncf %53 : vector<2x128xf32> to vector<2x128xbf16>
    %c6 = arith.constant 6 : index
    %c0_26 = arith.constant 0 : index
    %c0_27 = arith.constant 0 : index
    %55 = vector.load %arg4[%c6, %c0_26, %c0_27] : memref<9x128x256xf32, #tpu.memory_space<vmem>>, vector<1x128x256xf32>
    %56 = vector.shape_cast %55 : vector<1x128x256xf32> to vector<128x256xf32>
    %57 = arith.truncf %56 : vector<128x256xf32> to vector<128x256xbf16>
    %cst_28 = arith.constant dense<0.000000e+00> : vector<2x256xf32>
    %58 = tpu.matmul %54, %57, %cst_28 {dimension_numbers = #tpu.dot_dimension_numbers<[1], [0], [0], [1], [0, 0, 1, 1], [], []>} : vector<2x128xbf16>, vector<128x256xbf16>, vector<2x256xf32> -> vector<2x256xf32>
    %59 = arith.addf %52, %58 : vector<2x256xf32>
    %60 = vector.extract_strided_slice %9 {offsets = [14, 0], sizes = [2, 128], strides = [1, 1]} : vector<18x128xf32> to vector<2x128xf32>
    %61 = arith.truncf %60 : vector<2x128xf32> to vector<2x128xbf16>
    %c7 = arith.constant 7 : index
    %c0_29 = arith.constant 0 : index
    %c0_30 = arith.constant 0 : index
    %62 = vector.load %arg4[%c7, %c0_29, %c0_30] : memref<9x128x256xf32, #tpu.memory_space<vmem>>, vector<1x128x256xf32>
    %63 = vector.shape_cast %62 : vector<1x128x256xf32> to vector<128x256xf32>
    %64 = arith.truncf %63 : vector<128x256xf32> to vector<128x256xbf16>
    %cst_31 = arith.constant dense<0.000000e+00> : vector<2x256xf32>
    %65 = tpu.matmul %61, %64, %cst_31 {dimension_numbers = #tpu.dot_dimension_numbers<[1], [0], [0], [1], [0, 0, 1, 1], [], []>} : vector<2x128xbf16>, vector<128x256xbf16>, vector<2x256xf32> -> vector<2x256xf32>
    %66 = arith.addf %59, %65 : vector<2x256xf32>
    %67 = vector.extract_strided_slice %9 {offsets = [16, 0], sizes = [2, 128], strides = [1, 1]} : vector<18x128xf32> to vector<2x128xf32>
    %68 = arith.truncf %67 : vector<2x128xf32> to vector<2x128xbf16>
    %c8 = arith.constant 8 : index
    %c0_32 = arith.constant 0 : index
    %c0_33 = arith.constant 0 : index
    %69 = vector.load %arg4[%c8, %c0_32, %c0_33] : memref<9x128x256xf32, #tpu.memory_space<vmem>>, vector<1x128x256xf32>
    %70 = vector.shape_cast %69 : vector<1x128x256xf32> to vector<128x256xf32>
    %71 = arith.truncf %70 : vector<128x256xf32> to vector<128x256xbf16>
    %cst_34 = arith.constant dense<0.000000e+00> : vector<2x256xf32>
    %72 = tpu.matmul %68, %71, %cst_34 {dimension_numbers = #tpu.dot_dimension_numbers<[1], [0], [0], [1], [0, 0, 1, 1], [], []>} : vector<2x128xbf16>, vector<128x256xbf16>, vector<2x256xf32> -> vector<2x256xf32>
    %73 = arith.addf %66, %72 : vector<2x256xf32>
    %c0_35 = arith.constant 0 : index
    %c0_36 = arith.constant 0 : index
    %74 = vector.load %arg5[%c0_35, %c0_36] : memref<1x256xf32, #tpu.memory_space<vmem>>, vector<1x256xf32>
    %75 = vector.broadcast %74 : vector<1x256xf32> to vector<2x256xf32>
    %76 = arith.addf %73, %75 : vector<2x256xf32>
    %cst_37 = arith.constant 0.000000e+00 : f32
    %77 = vector.broadcast %cst_37 : f32 to vector<2x256xf32>
    %78 = arith.maximumf %76, %77 : vector<2x256xf32>
    %79 = arith.truncf %78 : vector<2x256xf32> to vector<2x256xbf16>
    %c0_38 = arith.constant 0 : index
    %c0_39 = arith.constant 0 : index
    %80 = vector.load %arg6[%c0_38, %c0_39] : memref<256x100xf32, #tpu.memory_space<vmem>>, vector<256x100xf32>
    %81 = arith.truncf %80 : vector<256x100xf32> to vector<256x100xbf16>
    %cst_40 = arith.constant dense<0.000000e+00> : vector<2x100xf32>
    %82 = tpu.matmul %79, %81, %cst_40 {dimension_numbers = #tpu.dot_dimension_numbers<[1], [0], [0], [1], [0, 0, 1, 1], [], []>} : vector<2x256xbf16>, vector<256x100xbf16>, vector<2x100xf32> -> vector<2x100xf32>
    %c0_41 = arith.constant 0 : index
    %c0_42 = arith.constant 0 : index
    %83 = vector.load %arg7[%c0_41, %c0_42] : memref<1x100xf32, #tpu.memory_space<vmem>>, vector<1x100xf32>
    %84 = vector.broadcast %83 : vector<1x100xf32> to vector<2x100xf32>
    %85 = arith.addf %82, %84 : vector<2x100xf32>
    %cst_43 = arith.constant 0.000000e+00 : f32
    %86 = vector.broadcast %cst_43 : f32 to vector<2x100xf32>
    %87 = arith.maximumf %85, %86 : vector<2x100xf32>
    %88 = arith.truncf %87 : vector<2x100xf32> to vector<2x100xbf16>
    %c0_44 = arith.constant 0 : index
    %c0_45 = arith.constant 0 : index
    %89 = vector.load %arg8[%c0_44, %c0_45] : memref<100x3xf32, #tpu.memory_space<vmem>>, vector<100x3xf32>
    %90 = arith.truncf %89 : vector<100x3xf32> to vector<100x3xbf16>
    %cst_46 = arith.constant dense<0.000000e+00> : vector<2x3xf32>
    %91 = tpu.matmul %88, %90, %cst_46 {dimension_numbers = #tpu.dot_dimension_numbers<[1], [0], [0], [1], [0, 0, 1, 1], [], []>} : vector<2x100xbf16>, vector<100x3xbf16>, vector<2x3xf32> -> vector<2x3xf32>
    %c0_47 = arith.constant 0 : index
    %c0_48 = arith.constant 0 : index
    %92 = vector.load %arg9[%c0_47, %c0_48] : memref<1x3xf32, #tpu.memory_space<vmem>>, vector<1x3xf32>
    %93 = vector.broadcast %92 : vector<1x3xf32> to vector<2x3xf32>
    %94 = arith.addf %91, %93 : vector<2x3xf32>
    %95 = tpu.iota {dimensions = array<i32: 1>} : vector<2x3xi32>
    %c1_i32 = arith.constant 1 : i32
    %96 = vector.broadcast %c1_i32 : i32 to vector<2x3xi32>
    %97 = arith.cmpi slt, %95, %96 : vector<2x3xi32>
    %98 = math.tanh %94 : vector<2x3xf32>
    %99 = arith.negf %94 : vector<2x3xf32>
    %100 = math.exp %99 : vector<2x3xf32>
    %cst_49 = arith.constant 1.000000e+00 : f32
    %101 = vector.broadcast %cst_49 : f32 to vector<2x3xf32>
    %102 = arith.addf %101, %100 : vector<2x3xf32>
    %103 = arith.divf %101, %102 : vector<2x3xf32>
    %104 = arith.select %97, %98, %103 : vector<2x3xi1>, vector<2x3xf32>
    %c0_50 = arith.constant 0 : index
    %c0_51 = arith.constant 0 : index
    %105 = vector.load %arg10[%c0_50, %c0_51] : memref<2x3xf32, #tpu.memory_space<vmem>>, vector<2x3xf32>
    tpu.vector_store %arg10[%c0_50, %c0_51], %104 {strides = array<i32>} : memref<2x3xf32, #tpu.memory_space<vmem>>, vector<2x3xf32>,
    return
  }
  func.func @transform_0(%arg0: i32) -> (i32, i32) {
    %c0_i32 = arith.constant 0 : i32
    %c0_i32_0 = arith.constant 0 : i32
    %c0_i32_1 = arith.constant 0 : i32
    return %c0_i32, %c0_i32_0 : i32, i32
  }
  func.func @transform_1(%arg0: i32) -> (i32, i32) {
    %c0_i32 = arith.constant 0 : i32
    %c0_i32_0 = arith.constant 0 : i32
    %c0_i32_1 = arith.constant 0 : i32
    return %c0_i32, %c0_i32_0 : i32, i32
  }
  func.func @transform_2(%arg0: i32) -> (i32, i32) {
    %c0_i32 = arith.constant 0 : i32
    %c0_i32_0 = arith.constant 0 : i32
    %c0_i32_1 = arith.constant 0 : i32
    return %c0_i32, %c0_i32_0 : i32, i32
  }
  func.func @transform_3(%arg0: i32) -> (i32, i32, i32) {
    %c0_i32 = arith.constant 0 : i32
    %c0_i32_0 = arith.constant 0 : i32
    %c0_i32_1 = arith.constant 0 : i32
    %c0_i32_2 = arith.constant 0 : i32
    return %c0_i32, %c0_i32_0, %c0_i32_1 : i32, i32, i32
  }
  func.func @transform_4(%arg0: i32) -> (i32, i32) {
    %c0_i32 = arith.constant 0 : i32
    %c0_i32_0 = arith.constant 0 : i32
    %c0_i32_1 = arith.constant 0 : i32
    return %c0_i32, %c0_i32_0 : i32, i32
  }
  func.func @transform_5(%arg0: i32) -> (i32, i32) {
    %c0_i32 = arith.constant 0 : i32
    %c0_i32_0 = arith.constant 0 : i32
    %c0_i32_1 = arith.constant 0 : i32
    return %c0_i32, %c0_i32_0 : i32, i32
  }
  func.func @transform_6(%arg0: i32) -> (i32, i32) {
    %c0_i32 = arith.constant 0 : i32
    %c0_i32_0 = arith.constant 0 : i32
    %c0_i32_1 = arith.constant 0 : i32
    return %c0_i32, %c0_i32_0 : i32, i32
  }
  func.func @transform_7(%arg0: i32) -> (i32, i32) {
    %c0_i32 = arith.constant 0 : i32
    %c0_i32_0 = arith.constant 0 : i32
    %c0_i32_1 = arith.constant 0 : i32
    return %c0_i32, %c0_i32_0 : i32, i32
  }
  func.func @transform_8(%arg0: i32) -> (i32, i32) {
    %c0_i32 = arith.constant 0 : i32
    %c0_i32_0 = arith.constant 0 : i32
    %c0_i32_1 = arith.constant 0 : i32
    return %c0_i32, %c0_i32_0 : i32, i32
  }
  func.func @transform_9(%arg0: i32) -> (i32, i32) {
    %c0_i32 = arith.constant 0 : i32
    %c0_i32_0 = arith.constant 0 : i32
    %c0_i32_1 = arith.constant 0 : i32
    return %c0_i32, %c0_i32_0 : i32, i32
  }
}

</mosaic_0001>

<llo_original>
// kernel: actor_forward.5
$region0: #{actor_forward.5}
  #allocation0 [shape = 'u32[]', space=smem, size = 0x4, offset = 0x4, fixed_abs, tag = 'smem constant byte address 0x4 - core index']
  #allocation1 [shape = 'u32[144,128]{1,0:T(1,128)}', space=vmem, size = 0x12000, scoped, tag = 'internal scratch']
  %s0 = inlined_call_operand.vmem [shape: f32[8,64], index: 0, kind: input, shape index: {}]
  %s1 = inlined_call_operand.vmem [shape: f32[8,1], index: 1, kind: input, shape index: {}]
  %s2 = inlined_call_operand.vmem [shape: f32[64,4418], index: 2, kind: input, shape index: {}]
  %s3 = inlined_call_operand.vmem [shape: f32[8,4418], index: 3, kind: output, shape index: {}]
  %s4 = sld [smem:[#allocation0]]
  $region173: #{actor_forward.5} parent=0
    _
  %s6 = ssub.s32 1, %s4
  %s7 = scalar_select 0, %s6, %s4
  $region1: #{actor_forward.5} parent=0
    #allocation2 [shape = 'u8[262144]{0}', space=vmem, size = 0x40000, scoped, tag = 'input window, operand 2']
    #allocation3 [shape = 'u8[32768]{0}', space=vmem, size = 0x8000, scoped, tag = 'output window, operand 0']
    loop: start=0, step=1, limit=11
    $region2: #{actor_forward.5} parent=1 // loop_pre_header
      _
    $region3: #{actor_forward.5} parent=1 // loop_header
      %s9 = sphi 0, %s13
      %p10 = scmp.ge.s32.totalorder %s9, 11
      %s17 = sphi 0, %s17
      %s19 = sphi 0, %s17
      %s20 = sphi 0, %s19
      %s34 = sphi 0, %s20
      %s38 = sphi 0, %s38
      %s40 = sphi 0, %s38
      %s41 = sphi 0, %s40
      %s55 = sphi 0, %s41
      %s61 = sphi 0, %s63
      %s64 = sphi 0, %s61
      %s65 = sphi 0, %s64
      %s81 = sphi 0, %s65
      %s87 = sphi 0, %s89
      %s90 = sphi 0, %s87
      %s91 = sphi 0, %s90
      %s107 = sphi 0, %s91
    $region4: #{actor_forward.5} parent=1 // loop_header_branch
      %12 = sbr.rel (%p10) target = $region8
    $region5: #{actor_forward.5} parent=1 // loop_body
      %s14 = ssub.s32 %s9, 1
      %s15 = ssub.s32 %s9, 2
      %s16 = sadd.s32 %s9, 1
      %s18 = sadd.s32 %s17, 1
      %p21 = scmp.eq.s32.totalorder %s9, 8
      %p22 = scmp.ne.s32.totalorder %s17, %s19
      %p23 = scmp.eq.s32.totalorder %s9, 0
      %p24 = por %p22, %p23
      %p25 = scmp.ne.s32.totalorder %s17, %s19
      %p26 = scmp.eq.s32.totalorder %s14, 8
      %p27 = por %p25, %p26
      %p28 = scmp.ne.s32.totalorder %s19, %s20
      %p29 = scmp.eq.s32.totalorder %s14, 0
      %p30 = por %p28, %p29
      %p31 = scmp.ne.s32.totalorder %s19, %s20
      %p32 = scmp.eq.s32.totalorder %s15, 8
      %p33 = por %p31, %p32
      %p35 = scmp.ne.s32.totalorder %s20, %s34
      %p36 = scmp.eq.s32.totalorder %s15, 0
      %p37 = por %p35, %p36
      %s39 = sadd.s32 %s38, 1
      %p42 = scmp.eq.s32.totalorder %s9, 8
      %p43 = scmp.ne.s32.totalorder %s38, %s40
      %p44 = scmp.eq.s32.totalorder %s9, 0
      %p45 = por %p43, %p44
      %p46 = scmp.ne.s32.totalorder %s38, %s40
      %p47 = scmp.eq.s32.totalorder %s14, 8
      %p48 = por %p46, %p47
      %p49 = scmp.ne.s32.totalorder %s40, %s41
      %p50 = scmp.eq.s32.totalorder %s14, 0
      %p51 = por %p49, %p50
      %p52 = scmp.ne.s32.totalorder %s40, %s41
      %p53 = scmp.eq.s32.totalorder %s15, 8
      %p54 = por %p52, %p53
      %p56 = scmp.ne.s32.totalorder %s41, %s55
      %p57 = scmp.eq.s32.totalorder %s15, 0
      %p58 = por %p56, %p57
      %s59 = ssub.s32 %s9, %s16
      %p60 = scmp.eq.s32.totalorder %s59, 0
      %s62 = sadd.s32 %s61, 1
      %s63 = scalar_select %p60, %s61, %s62
      %p66 = pneg %p60
      %p67 = scmp.eq.s32.totalorder %s9, 8
      %p68 = por %p66, %p67
      %p69 = scmp.ne.s32.totalorder %s61, %s64
      %p70 = scmp.eq.s32.totalorder %s9, 0
      %p71 = por %p69, %p70
      %p72 = scmp.ne.s32.totalorder %s61, %s64
      %p73 = scmp.eq.s32.totalorder %s14, 8
      %p74 = por %p72, %p73
      %p75 = scmp.ne.s32.totalorder %s64, %s65
      %p76 = scmp.eq.s32.totalorder %s14, 0
      %p77 = por %p75, %p76
      %p78 = scmp.ne.s32.totalorder %s64, %s65
      %p79 = scmp.eq.s32.totalorder %s15, 8
      %p80 = por %p78, %p79
      %p82 = scmp.ne.s32.totalorder %s65, %s81
      %p83 = scmp.eq.s32.totalorder %s15, 0
      %p84 = por %p82, %p83
      %s85 = ssub.s32 %s9, %s16
      %p86 = scmp.eq.s32.totalorder %s85, 0
      %s88 = sadd.s32 %s87, 1
      %s89 = scalar_select %p86, %s87, %s88
      %p92 = pneg %p86
      %p93 = scmp.eq.s32.totalorder %s9, 8
      %p94 = por %p92, %p93
      %p95 = scmp.ne.s32.totalorder %s87, %s90
      %p96 = scmp.eq.s32.totalorder %s9, 0
      %p97 = por %p95, %p96
      %p98 = scmp.ne.s32.totalorder %s87, %s90
      %p99 = scmp.eq.s32.totalorder %s14, 8
      %p100 = por %p98, %p99
      %p101 = scmp.ne.s32.totalorder %s90, %s91
      %p102 = scmp.eq.s32.totalorder %s14, 0
      %p103 = por %p101, %p102
      %p104 = scmp.ne.s32.totalorder %s90, %s91
      %p105 = scmp.eq.s32.totalorder %s15, 8
      %p106 = por %p104, %p105
      %p108 = scmp.ne.s32.totalorder %s91, %s107
      %p109 = scmp.eq.s32.totalorder %s15, 0
      %p110 = por %p108, %p109
      %p111 = scmp.le.s32.totalorder 1, %s9
      %p112 = scmp.lt.s32.totalorder %s9, 10
      %p113 = pnand %p111, %p112
      %p114 = pneg %p113
      // Predicated region
      $region9: #{actor_forward.5} parent=5 // pred_check
        _
      $region10: #{actor_forward.5} parent=5 // pred_check_branch
        %116 = sbr.rel (%p113) target = $region12
      $region11: #{actor_forward.5} parent=5 // pred_region
        %s117 = ssub.s32 %s9, 1
        // Predicated region
        $region13: #{actor_forward.5} parent=11 // pred_check
          %p118 = pneg %p30
        $region14: #{actor_forward.5} parent=11 // pred_check_branch
          %120 = sbr.rel (%p118) target = $region16
        $region15: #{actor_forward.5} parent=11 // pred_region
          _
        $region16: #{actor_forward.5} parent=11 // pred_fallthru
          _
        // Predicated region
        $region17: #{actor_forward.5} parent=11 // pred_check
          %p121 = pneg %p51
        $region18: #{actor_forward.5} parent=11 // pred_check_branch
          %123 = sbr.rel (%p121) target = $region20
        $region19: #{actor_forward.5} parent=11 // pred_region
          _
        $region20: #{actor_forward.5} parent=11 // pred_fallthru
          _
      $region12: #{actor_forward.5} parent=5 // pred_fallthru
        _
      %p124 = scmp.lt.s32.totalorder %s9, 9
      // Predicated region
      $region21: #{actor_forward.5} parent=5 // pred_check
        %p125 = pneg %p124
      $region22: #{actor_forward.5} parent=5 // pred_check_branch
        %127 = sbr.rel (%p125) target = $region24
      $region23: #{actor_forward.5} parent=5 // pred_region
        // Predicated region
        $region25: #{actor_forward.5} parent=23 // pred_check
          %p128 = pneg %p71
        $region26: #{actor_forward.5} parent=23 // pred_check_branch
          %130 = sbr.rel (%p128) target = $region28
        $region27: #{actor_forward.5} parent=23 // pred_region
          %s131 = sand.u32 %s61, 1
          %s132 = sand.u32 %s61, 1
          %s133 = smul.addr %s132, 256
          %s134 = scalar_lea.vmem [#allocation2], %s133
          %s135 = smul.u32 4, %s9
          %s136 = ssub.s32 35, %s135
          %p137 = scmp.lt.s32.totalorder %s136, 4
          %s138 = scalar_select %p137, %s136, 4
          %s139 = smul.u32 1024, %s138
          %p140 = scmp.ne.s32.totalorder 0, %s139
          %s141 = smul.addr %s135, 8
          %s142 = scalar_lea.vmem %s2, %s141
          %s143 = smul.u32 %s138, 8
          // Predicated region
          $region29: #{actor_forward.5} parent=27 // pred_check
            %p144 = pneg %p140
          $region30: #{actor_forward.5} parent=27 // pred_check_branch
            %146 = sbr.rel (%p144) target = $region32
          $region31: #{actor_forward.5} parent=27 // pred_region
            %p147 = scmp.lt.u32.totalorder %s143, 8
            %p148 = pneg %p147
            // Predicated region
            $region33: #{actor_forward.5} parent=31 // pred_check
              _
            $region34: #{actor_forward.5} parent=31 // pred_check_branch
              %150 = sbr.rel (%p147) target = $region36
            $region35: #{actor_forward.5} parent=31 // pred_region
              %s180 = sand.u32 %s143, 7
              %p181 = scmp.eq.s32.totalorder %s180, 0
              // Predicated region
              $region48: #{actor_forward.5} parent=35 // pred_check
                %p182 = pneg %p181
              $region49: #{actor_forward.5} parent=35 // pred_check_branch
                %184 = sbr.rel (%p182) target = $region51
              $region50: #{actor_forward.5} parent=35 // pred_region
                %s185 = sshrl.u32 %s143, 3
                %s186 = sshrl.u32 %s185, 3
                // While loop
                $region52: #{actor_forward.5} parent=50 // loop_pre_header
                  _
                $region53: #{actor_forward.5} parent=50 // loop_header
                  %s190 = sphi 0, %s192
                  %p191 = scmp.ge.s32.totalorder %s190, %s186
                  %s195 = sphi 0, %s328
                  %s196 = sphi %s142, %s331
                  %s197 = sphi %s134, %s332
                $region54: #{actor_forward.5} parent=50 // loop_header_branch
                  %194 = sbr.rel (%p191) target = $region58
                $region55: #{actor_forward.5} parent=50 // loop_body
                  %v198 = vld [vmem:[%s196] sm:$0xff]
                  %199 = vst [vmem:[%s197] sm:$0xff] %v198
                  %v200 = vld [vmem:[%s196 + $0x8] sm:$0xff]
                  %201 = vst [vmem:[%s197 + $0x8] sm:$0xff] %v200
                  %v202 = vld [vmem:[%s196 + $0x10] sm:$0xff]
                  %203 = vst [vmem:[%s197 + $0x10] sm:$0xff] %v202
                  %v204 = vld [vmem:[%s196 + $0x18] sm:$0xff]
                  %205 = vst [vmem:[%s197 + $0x18] sm:$0xff] %v204
                  %v206 = vld [vmem:[%s196 + $0x20] sm:$0xff]
                  %207 = vst [vmem:[%s197 + $0x20] sm:$0xff] %v206
                  %v208 = vld [vmem:[%s196 + $0x28] sm:$0xff]
                  %209 = vst [vmem:[%s197 + $0x28] sm:$0xff] %v208
                  %v210 = vld [vmem:[%s196 + $0x30] sm:$0xff]
                  %211 = vst [vmem:[%s197 + $0x30] sm:$0xff] %v210
                  %v212 = vld [vmem:[%s196 + $0x38] sm:$0xff]
                  %213 = vst [vmem:[%s197 + $0x38] sm:$0xff] %v212
                  %v214 = vld [vmem:[%s196 + $0x118] sm:$0xff]
                  %215 = vst [vmem:[%s197 + $0x20] sm:$0xff] %v214
                  %v216 = vld [vmem:[%s196 + $0x120] sm:$0xff]
                  %217 = vst [vmem:[%s197 + $0x28] sm:$0xff] %v216
                  %v218 = vld [vmem:[%s196 + $0x128] sm:$0xff]
                  %219 = vst [vmem:[%s197 + $0x30] sm:$0xff] %v218
                  %v220 = vld [vmem:[%s196 + $0x130] sm:$0xff]
                  %221 = vst [vmem:[%s197 + $0x38] sm:$0xff] %v220
                  %v222 = vld [vmem:[%s196 + $0x138] sm:$0xff]
                  %223 = vst [vmem:[%s197 + $0x40] sm:$0xff] %v222
                  %v224 = vld [vmem:[%s196 + $0x140] sm:$0xff]
                  %225 = vst [vmem:[%s197 + $0x48] sm:$0xff] %v224
                  %v226 = vld [vmem:[%s196 + $0x148] sm:$0xff]
                  %227 = vst [vmem:[%s197 + $0x50] sm:$0xff] %v226
                  %v228 = vld [vmem:[%s196 + $0x150] sm:$0xff]
                  %229 = vst [vmem:[%s197 + $0x58] sm:$0xff] %v228
                  %v230 = vld [vmem:[%s196 + $0x230] sm:$0xff]
                  %231 = vst [vmem:[%s197 + $0x40] sm:$0xff] %v230
                  %v232 = vld [vmem:[%s196 + $0x238] sm:$0xff]
                  %233 = vst [vmem:[%s197 + $0x48] sm:$0xff] %v232
                  %v234 = vld [vmem:[%s196 + $0x240] sm:$0xff]
                  %235 = vst [vmem:[%s197 + $0x50] sm:$0xff] %v234
                  %v236 = vld [vmem:[%s196 + $0x248] sm:$0xff]
                  %237 = vst [vmem:[%s197 + $0x58] sm:$0xff] %v236
                  %v238 = vld [vmem:[%s196 + $0x250] sm:$0xff]
                  %239 = vst [vmem:[%s197 + $0x60] sm:$0xff] %v238
                  %v240 = vld [vmem:[%s196 + $0x258] sm:$0xff]
                  %241 = vst [vmem:[%s197 + $0x68] sm:$0xff] %v240
                  %v242 = vld [vmem:[%s196 + $0x260] sm:$0xff]
                  %243 = vst [vmem:[%s197 + $0x70] sm:$0xff] %v242
                  %v244 = vld [vmem:[%s196 + $0x268] sm:$0xff]
                  %245 = vst [vmem:[%s197 + $0x78] sm:$0xff] %v244
                  %v246 = vld [vmem:[%s196 + $0x348] sm:$0xff]
                  %247 = vst [vmem:[%s197 + $0x60] sm:$0xff] %v246
                  %v248 = vld [vmem:[%s196 + $0x350] sm:$0xff]
                  %249 = vst [vmem:[%s197 + $0x68] sm:$0xff] %v248
                  %v250 = vld [vmem:[%s196 + $0x358] sm:$0xff]
                  %251 = vst [vmem:[%s197 + $0x70] sm:$0xff] %v250
                  %v252 = vld [vmem:[%s196 + $0x360] sm:$0xff]
                  %253 = vst [vmem:[%s197 + $0x78] sm:$0xff] %v252
                  %v254 = vld [vmem:[%s196 + $0x368] sm:$0xff]
                  %255 = vst [vmem:[%s197 + $0x80] sm:$0xff] %v254
                  %v256 = vld [vmem:[%s196 + $0x370] sm:$0xff]
                  %257 = vst [vmem:[%s197 + $0x88] sm:$0xff] %v256
                  %v258 = vld [vmem:[%s196 + $0x378] sm:$0xff]
                  %259 = vst [vmem:[%s197 + $0x90] sm:$0xff] %v258
                  %v260 = vld [vmem:[%s196 + $0x380] sm:$0xff]
                  %261 = vst [vmem:[%s197 + $0x98] sm:$0xff] %v260
                  %v262 = vld [vmem:[%s196 + $0x460] sm:$0xff]
                  %263 = vst [vmem:[%s197 + $0x80] sm:$0xff] %v262
                  %v264 = vld [vmem:[%s196 + $0x468] sm:$0xff]
                  %265 = vst [vmem:[%s197 + $0x88] sm:$0xff] %v264
                  %v266 = vld [vmem:[%s196 + $0x470] sm:$0xff]
                  %267 = vst [vmem:[%s197 + $0x90] sm:$0xff] %v266
                  %v268 = vld [vmem:[%s196 + $0x478] sm:$0xff]
                  %269 = vst [vmem:[%s197 + $0x98] sm:$0xff] %v268
                  %v270 = vld [vmem:[%s196 + $0x480] sm:$0xff]
                  %271 = vst [vmem:[%s197 + $0xa0] sm:$0xff] %v270
                  %v272 = vld [vmem:[%s196 + $0x488] sm:$0xff]
                  %273 = vst [vmem:[%s197 + $0xa8] sm:$0xff] %v272
                  %v274 = vld [vmem:[%s196 + $0x490] sm:$0xff]
                  %275 = vst [vmem:[%s197 + $0xb0] sm:$0xff] %v274
                  %v276 = vld [vmem:[%s196 + $0x498] sm:$0xff]
                  %277 = vst [vmem:[%s197 + $0xb8] sm:$0xff] %v276
                  %v278 = vld [vmem:[%s196 + $0x578] sm:$0xff]
                  %279 = vst [vmem:[%s197 + $0xa0] sm:$0xff] %v278
                  %v280 = vld [vmem:[%s196 + $0x580] sm:$0xff]
                  %281 = vst [vmem:[%s197 + $0xa8] sm:$0xff] %v280
                  %v282 = vld [vmem:[%s196 + $0x588] sm:$0xff]
                  %283 = vst [vmem:[%s197 + $0xb0] sm:$0xff] %v282
                  %v284 = vld [vmem:[%s196 + $0x590] sm:$0xff]
                  %285 = vst [vmem:[%s197 + $0xb8] sm:$0xff] %v284
                  %v286 = vld [vmem:[%s196 + $0x598] sm:$0xff]
                  %287 = vst [vmem:[%s197 + $0xc0] sm:$0xff] %v286
                  %v288 = vld [vmem:[%s196 + $0x5a0] sm:$0xff]
                  %289 = vst [vmem:[%s197 + $0xc8] sm:$0xff] %v288
                  %v290 = vld [vmem:[%s196 + $0x5a8] sm:$0xff]
                  %291 = vst [vmem:[%s197 + $0xd0] sm:$0xff] %v290
                  %v292 = vld [vmem:[%s196 + $0x5b0] sm:$0xff]
                  %293 = vst [vmem:[%s197 + $0xd8] sm:$0xff] %v292
                  %v294 = vld [vmem:[%s196 + $0x690] sm:$0xff]
                  %295 = vst [vmem:[%s197 + $0xc0] sm:$0xff] %v294
                  %v296 = vld [vmem:[%s196 + $0x698] sm:$0xff]
                  %297 = vst [vmem:[%s197 + $0xc8] sm:$0xff] %v296
                  %v298 = vld [vmem:[%s196 + $0x6a0] sm:$0xff]
                  %299 = vst [vmem:[%s197 + $0xd0] sm:$0xff] %v298
                  %v300 = vld [vmem:[%s196 + $0x6a8] sm:$0xff]
                  %301 = vst [vmem:[%s197 + $0xd8] sm:$0xff] %v300
                  %v302 = vld [vmem:[%s196 + $0x6b0] sm:$0xff]
                  %303 = vst [vmem:[%s197 + $0xe0] sm:$0xff] %v302
                  %v304 = vld [vmem:[%s196 + $0x6b8] sm:$0xff]
                  %305 = vst [vmem:[%s197 + $0xe8] sm:$0xff] %v304
                  %v306 = vld [vmem:[%s196 + $0x6c0] sm:$0xff]
                  %307 = vst [vmem:[%s197 + $0xf0] sm:$0xff] %v306
                  %v308 = vld [vmem:[%s196 + $0x6c8] sm:$0xff]
                  %309 = vst [vmem:[%s197 + $0xf8] sm:$0xff] %v308
                  %v310 = vld [vmem:[%s196 + $0x7a8] sm:$0xff]
                  %311 = vst [vmem:[%s197 + $0xe0] sm:$0xff] %v310
                  %v312 = vld [vmem:[%s196 + $0x7b0] sm:$0xff]
                  %313 = vst [vmem:[%s197 + $0xe8] sm:$0xff] %v312
                  %v314 = vld [vmem:[%s196 + $0x7b8] sm:$0xff]
                  %315 = vst [vmem:[%s197 + $0xf0] sm:$0xff] %v314
                  %v316 = vld [vmem:[%s196 + $0x7c0] sm:$0xff]
                  %317 = vst [vmem:[%s197 + $0xf8] sm:$0xff] %v316
                  %v318 = vld [vmem:[%s196 + $0x7c8] sm:$0xff]
                  %319 = vst [vmem:[%s197 + $0x100] sm:$0xff] %v318
                  %v320 = vld [vmem:[%s196 + $0x7d0] sm:$0xff]
                  %321 = vst [vmem:[%s197 + $0x108] sm:$0xff] %v320
                  %v322 = vld [vmem:[%s196 + $0x7d8] sm:$0xff]
                  %323 = vst [vmem:[%s197 + $0x110] sm:$0xff] %v322
                  %v324 = vld [vmem:[%s196 + $0x7e0] sm:$0xff]
                  %325 = vst [vmem:[%s197 + $0x118] sm:$0xff] %v324
                  %s326 = sadd.s32 1, %s195
                  %p327 = scmp.ge.s32.totalorder %s326, %s186
                  %s328 = scalar_select %p327, 0, %s326
                  %s329 = smul.u32 %s328, 64
                  %s330 = smul.u32 %s328, 64
                  %s331 = scalar_lea.vmem %s142, %s329
                  %s332 = scalar_lea.vmem %s134, %s330 [#allocation2]
                $region56: #{actor_forward.5} parent=50 // loop_footer
                  %s192 = sadd.s32 %s190, 1
                $region57: #{actor_forward.5} parent=50 // loop_footer_branch
                  %189 = sbr.rel target = $region53
                $region58: #{actor_forward.5} parent=50 // loop_exit
                  _
                %s333 = sshrl.u32 %s185, 3
                %s334 = sand.u32 %s185, 7
                %s335 = smul.u32 %s333, 8
                %s336 = smul.u32 128, %s335
                %s337 = sshra.s32 %s336, 4
                %s338 = scalar_lea.vmem %s142, %s337
                %s339 = smul.u32 128, %s335
                %s340 = sshra.s32 %s339, 4
                %s341 = scalar_lea.vmem %s134, %s340 [#allocation2]
                // While loop
                $region59: #{actor_forward.5} parent=50 // loop_pre_header
                  _
                $region60: #{actor_forward.5} parent=50 // loop_header
                  %s345 = sphi 0, %s347
                  %p346 = scmp.ge.s32.totalorder %s345, %s334
                  %s350 = sphi 0, %s371
                  %s351 = sphi %s338, %s374
                  %s352 = sphi %s341, %s375
                $region61: #{actor_forward.5} parent=50 // loop_header_branch
                  %349 = sbr.rel (%p346) target = $region65
                $region62: #{actor_forward.5} parent=50 // loop_body
                  %v353 = vld [vmem:[%s351] sm:$0xff]
                  %354 = vst [vmem:[%s352] sm:$0xff] %v353
                  %v355 = vld [vmem:[%s351 + $0x118] sm:$0xff]
                  %356 = vst [vmem:[%s352 + $0x20] sm:$0xff] %v355
                  %v357 = vld [vmem:[%s351 + $0x230] sm:$0xff]
                  %358 = vst [vmem:[%s352 + $0x40] sm:$0xff] %v357
                  %v359 = vld [vmem:[%s351 + $0x348] sm:$0xff]
                  %360 = vst [vmem:[%s352 + $0x60] sm:$0xff] %v359
                  %v361 = vld [vmem:[%s351 + $0x460] sm:$0xff]
                  %362 = vst [vmem:[%s352 + $0x80] sm:$0xff] %v361
                  %v363 = vld [vmem:[%s351 + $0x578] sm:$0xff]
                  %364 = vst [vmem:[%s352 + $0xa0] sm:$0xff] %v363
                  %v365 = vld [vmem:[%s351 + $0x690] sm:$0xff]
                  %366 = vst [vmem:[%s352 + $0xc0] sm:$0xff] %v365
                  %v367 = vld [vmem:[%s351 + $0x7a8] sm:$0xff]
                  %368 = vst [vmem:[%s352 + $0xe0] sm:$0xff] %v367
                  %s369 = sadd.s32 1, %s350
                  %p370 = scmp.ge.s32.totalorder %s369, %s334
                  %s371 = scalar_select %p370, 0, %s369
                  %s372 = smul.u32 %s371, 8
                  %s373 = smul.u32 %s371, 8
                  %s374 = scalar_lea.vmem %s338, %s372
                  %s375 = scalar_lea.vmem %s341, %s373 [#allocation2]
                $region63: #{actor_forward.5} parent=50 // loop_footer
                  %s347 = sadd.s32 %s345, 1
                $region64: #{actor_forward.5} parent=50 // loop_footer_branch
                  %344 = sbr.rel target = $region60
                $region65: #{actor_forward.5} parent=50 // loop_exit
                  _
              $region51: #{actor_forward.5} parent=35 // pred_fallthru
                _
              %p376 = pneg %p181
              // Predicated region
              $region66: #{actor_forward.5} parent=35 // pred_check
                _
              $region67: #{actor_forward.5} parent=35 // pred_check_branch
                %378 = sbr.rel (%p181) target = $region69
              $region68: #{actor_forward.5} parent=35 // pred_region
                %s379 = sand.u32 %s143, 7
                %s380 = ssub.s32 %s143, %s379
                %s381 = scalar_lea.vmem %s142, %s380
                %s382 = ssub.s32 %s143, %s379
                %s383 = scalar_lea.vmem %s134, %s382 [#allocation2]
                %s384 = sshrl.u32 %s143, 3
                %s385 = sshrl.u32 %s384, 3
                // While loop
                $region70: #{actor_forward.5} parent=68 // loop_pre_header
                  _
                $region71: #{actor_forward.5} parent=68 // loop_header
                  %s389 = sphi 0, %s391
                  %p390 = scmp.ge.s32.totalorder %s389, %s385
                  %s394 = sphi 0, %s527
                  %s395 = sphi %s142, %s530
                  %s396 = sphi %s134, %s531
                $region72: #{actor_forward.5} parent=68 // loop_header_branch
                  %393 = sbr.rel (%p390) target = $region76
                $region73: #{actor_forward.5} parent=68 // loop_body
                  %v397 = vld [vmem:[%s395] sm:$0xff]
                  %398 = vst [vmem:[%s396] sm:$0xff] %v397
                  %v399 = vld [vmem:[%s395 + $0x8] sm:$0xff]
                  %400 = vst [vmem:[%s396 + $0x8] sm:$0xff] %v399
                  %v401 = vld [vmem:[%s395 + $0x10] sm:$0xff]
                  %402 = vst [vmem:[%s396 + $0x10] sm:$0xff] %v401
                  %v403 = vld [vmem:[%s395 + $0x18] sm:$0xff]
                  %404 = vst [vmem:[%s396 + $0x18] sm:$0xff] %v403
                  %v405 = vld [vmem:[%s395 + $0x20] sm:$0xff]
                  %406 = vst [vmem:[%s396 + $0x20] sm:$0xff] %v405
                  %v407 = vld [vmem:[%s395 + $0x28] sm:$0xff]
                  %408 = vst [vmem:[%s396 + $0x28] sm:$0xff] %v407
                  %v409 = vld [vmem:[%s395 + $0x30] sm:$0xff]
                  %410 = vst [vmem:[%s396 + $0x30] sm:$0xff] %v409
                  %v411 = vld [vmem:[%s395 + $0x38] sm:$0xff]
                  %412 = vst [vmem:[%s396 + $0x38] sm:$0xff] %v411
                  %v413 = vld [vmem:[%s395 + $0x118] sm:$0xff]
                  %414 = vst [vmem:[%s396 + $0x20] sm:$0xff] %v413
                  %v415 = vld [vmem:[%s395 + $0x120] sm:$0xff]
                  %416 = vst [vmem:[%s396 + $0x28] sm:$0xff] %v415
                  %v417 = vld [vmem:[%s395 + $0x128] sm:$0xff]
                  %418 = vst [vmem:[%s396 + $0x30] sm:$0xff] %v417
                  %v419 = vld [vmem:[%s395 + $0x130] sm:$0xff]
                  %420 = vst [vmem:[%s396 + $0x38] sm:$0xff] %v419
                  %v421 = vld [vmem:[%s395 + $0x138] sm:$0xff]
                  %422 = vst [vmem:[%s396 + $0x40] sm:$0xff] %v421
                  %v423 = vld [vmem:[%s395 + $0x140] sm:$0xff]
                  %424 = vst [vmem:[%s396 + $0x48] sm:$0xff] %v423
                  %v425 = vld [vmem:[%s395 + $0x148] sm:$0xff]
                  %426 = vst [vmem:[%s396 + $0x50] sm:$0xff] %v425
                  %v427 = vld [vmem:[%s395 + $0x150] sm:$0xff]
                  %428 = vst [vmem:[%s396 + $0x58] sm:$0xff] %v427
                  %v429 = vld [vmem:[%s395 + $0x230] sm:$0xff]
                  %430 = vst [vmem:[%s396 + $0x40] sm:$0xff] %v429
                  %v431 = vld [vmem:[%s395 + $0x238] sm:$0xff]
                  %432 = vst [vmem:[%s396 + $0x48] sm:$0xff] %v431
                  %v433 = vld [vmem:[%s395 + $0x240] sm:$0xff]
                  %434 = vst [vmem:[%s396 + $0x50] sm:$0xff] %v433
                  %v435 = vld [vmem:[%s395 + $0x248] sm:$0xff]
                  %436 = vst [vmem:[%s396 + $0x58] sm:$0xff] %v435
                  %v437 = vld [vmem:[%s395 + $0x250] sm:$0xff]
                  %438 = vst [vmem:[%s396 + $0x60] sm:$0xff] %v437
                  %v439 = vld [vmem:[%s395 + $0x258] sm:$0xff]
                  %440 = vst [vmem:[%s396 + $0x68] sm:$0xff] %v439
                  %v441 = vld [vmem:[%s395 + $0x260] sm:$0xff]
                  %442 = vst [vmem:[%s396 + $0x70] sm:$0xff] %v441
                  %v443 = vld [vmem:[%s395 + $0x268] sm:$0xff]
                  %444 = vst [vmem:[%s396 + $0x78] sm:$0xff] %v443
                  %v445 = vld [vmem:[%s395 + $0x348] sm:$0xff]
                  %446 = vst [vmem:[%s396 + $0x60] sm:$0xff] %v445
                  %v447 = vld [vmem:[%s395 + $0x350] sm:$0xff]
                  %448 = vst [vmem:[%s396 + $0x68] sm:$0xff] %v447
                  %v449 = vld [vmem:[%s395 + $0x358] sm:$0xff]
                  %450 = vst [vmem:[%s396 + $0x70] sm:$0xff] %v449
                  %v451 = vld [vmem:[%s395 + $0x360] sm:$0xff]
                  %452 = vst [vmem:[%s396 + $0x78] sm:$0xff] %v451
                  %v453 = vld [vmem:[%s395 + $0x368] sm:$0xff]
                  %454 = vst [vmem:[%s396 + $0x80] sm:$0xff] %v453
                  %v455 = vld [vmem:[%s395 + $0x370] sm:$0xff]
                  %456 = vst [vmem:[%s396 + $0x88] sm:$0xff] %v455
                  %v457 = vld [vmem:[%s395 + $0x378] sm:$0xff]
                  %458 = vst [vmem:[%s396 + $0x90] sm:$0xff] %v457
                  %v459 = vld [vmem:[%s395 + $0x380] sm:$0xff]
                  %460 = vst [vmem:[%s396 + $0x98] sm:$0xff] %v459
                  %v461 = vld [vmem:[%s395 + $0x460] sm:$0xff]
                  %462 = vst [vmem:[%s396 + $0x80] sm:$0xff] %v461
                  %v463 = vld [vmem:[%s395 + $0x468] sm:$0xff]
                  %464 = vst [vmem:[%s396 + $0x88] sm:$0xff] %v463
                  %v465 = vld [vmem:[%s395 + $0x470] sm:$0xff]
                  %466 = vst [vmem:[%s396 + $0x90] sm:$0xff] %v465
                  %v467 = vld [vmem:[%s395 + $0x478] sm:$0xff]
                  %468 = vst [vmem:[%s396 + $0x98] sm:$0xff] %v467
                  %v469 = vld [vmem:[%s395 + $0x480] sm:$0xff]
                  %470 = vst [vmem:[%s396 + $0xa0] sm:$0xff] %v469
                  %v471 = vld [vmem:[%s395 + $0x488] sm:$0xff]
                  %472 = vst [vmem:[%s396 + $0xa8] sm:$0xff] %v471
                  %v473 = vld [vmem:[%s395 + $0x490] sm:$0xff]
                  %474 = vst [vmem:[%s396 + $0xb0] sm:$0xff] %v473
                  %v475 = vld [vmem:[%s395 + $0x498] sm:$0xff]
                  %476 = vst [vmem:[%s396 + $0xb8] sm:$0xff] %v475
                  %v477 = vld [vmem:[%s395 + $0x578] sm:$0xff]
                  %478 = vst [vmem:[%s396 + $0xa0] sm:$0xff] %v477
                  %v479 = vld [vmem:[%s395 + $0x580] sm:$0xff]
                  %480 = vst [vmem:[%s396 + $0xa8] sm:$0xff] %v479
                  %v481 = vld [vmem:[%s395 + $0x588] sm:$0xff]
                  %482 = vst [vmem:[%s396 + $0xb0] sm:$0xff] %v481
                  %v483 = vld [vmem:[%s395 + $0x590] sm:$0xff]
                  %484 = vst [vmem:[%s396 + $0xb8] sm:$0xff] %v483
                  %v485 = vld [vmem:[%s395 + $0x598] sm:$0xff]
                  %486 = vst [vmem:[%s396 + $0xc0] sm:$0xff] %v485
                  %v487 = vld [vmem:[%s395 + $0x5a0] sm:$0xff]
                  %488 = vst [vmem:[%s396 + $0xc8] sm:$0xff] %v487
                  %v489 = vld [vmem:[%s395 + $0x5a8] sm:$0xff]
                  %490 = vst [vmem:[%s396 + $0xd0] sm:$0xff] %v489
                  %v491 = vld [vmem:[%s395 + $0x5b0] sm:$0xff]
                  %492 = vst [vmem:[%s396 + $0xd8] sm:$0xff] %v491
                  %v493 = vld [vmem:[%s395 + $0x690] sm:$0xff]
                  %494 = vst [vmem:[%s396 + $0xc0] sm:$0xff] %v493
                  %v495 = vld [vmem:[%s395 + $0x698] sm:$0xff]
                  %496 = vst [vmem:[%s396 + $0xc8] sm:$0xff] %v495
                  %v497 = vld [vmem:[%s395 + $0x6a0] sm:$0xff]
                  %498 = vst [vmem:[%s396 + $0xd0] sm:$0xff] %v497
                  %v499 = vld [vmem:[%s395 + $0x6a8] sm:$0xff]
                  %500 = vst [vmem:[%s396 + $0xd8] sm:$0xff] %v499
                  %v501 = vld [vmem:[%s395 + $0x6b0] sm:$0xff]
                  %502 = vst [vmem:[%s396 + $0xe0] sm:$0xff] %v501
                  %v503 = vld [vmem:[%s395 + $0x6b8] sm:$0xff]
                  %504 = vst [vmem:[%s396 + $0xe8] sm:$0xff] %v503
                  %v505 = vld [vmem:[%s395 + $0x6c0] sm:$0xff]
                  %506 = vst [vmem:[%s396 + $0xf0] sm:$0xff] %v505
                  %v507 = vld [vmem:[%s395 + $0x6c8] sm:$0xff]
                  %508 = vst [vmem:[%s396 + $0xf8] sm:$0xff] %v507
                  %v509 = vld [vmem:[%s395 + $0x7a8] sm:$0xff]
                  %510 = vst [vmem:[%s396 + $0xe0] sm:$0xff] %v509
                  %v511 = vld [vmem:[%s395 + $0x7b0] sm:$0xff]
                  %512 = vst [vmem:[%s396 + $0xe8] sm:$0xff] %v511
                  %v513 = vld [vmem:[%s395 + $0x7b8] sm:$0xff]
                  %514 = vst [vmem:[%s396 + $0xf0] sm:$0xff] %v513
                  %v515 = vld [vmem:[%s395 + $0x7c0] sm:$0xff]
                  %516 = vst [vmem:[%s396 + $0xf8] sm:$0xff] %v515
                  %v517 = vld [vmem:[%s395 + $0x7c8] sm:$0xff]
                  %518 = vst [vmem:[%s396 + $0x100] sm:$0xff] %v517
                  %v519 = vld [vmem:[%s395 + $0x7d0] sm:$0xff]
                  %520 = vst [vmem:[%s396 + $0x108] sm:$0xff] %v519
                  %v521 = vld [vmem:[%s395 + $0x7d8] sm:$0xff]
                  %522 = vst [vmem:[%s396 + $0x110] sm:$0xff] %v521
                  %v523 = vld [vmem:[%s395 + $0x7e0] sm:$0xff]
                  %524 = vst [vmem:[%s396 + $0x118] sm:$0xff] %v523
                  %s525 = sadd.s32 1, %s394
                  %p526 = scmp.ge.s32.totalorder %s525, %s385
                  %s527 = scalar_select %p526, 0, %s525
                  %s528 = smul.u32 %s527, 64
                  %s529 = smul.u32 %s527, 64
                  %s530 = scalar_lea.vmem %s142, %s528
                  %s531 = scalar_lea.vmem %s134, %s529 [#allocation2]
                $region74: #{actor_forward.5} parent=68 // loop_footer
                  %s391 = sadd.s32 %s389, 1
                $region75: #{actor_forward.5} parent=68 // loop_footer_branch
                  %388 = sbr.rel target = $region71
                $region76: #{actor_forward.5} parent=68 // loop_exit
                  _
                %s532 = sshrl.u32 %s384, 3
                %s533 = sand.u32 %s384, 7
                %s534 = smul.u32 %s532, 8
                %s535 = smul.u32 128, %s534
                %s536 = sshra.s32 %s535, 4
                %s537 = scalar_lea.vmem %s142, %s536
                %s538 = smul.u32 128, %s534
                %s539 = sshra.s32 %s538, 4
                %s540 = scalar_lea.vmem %s134, %s539 [#allocation2]
                // While loop
                $region77: #{actor_forward.5} parent=68 // loop_pre_header
                  _
                $region78: #{actor_forward.5} parent=68 // loop_header
                  %s544 = sphi 0, %s546
                  %p545 = scmp.ge.s32.totalorder %s544, %s533
                  %s549 = sphi 0, %s570
                  %s550 = sphi %s537, %s573
                  %s551 = sphi %s540, %s574
                $region79: #{actor_forward.5} parent=68 // loop_header_branch
                  %548 = sbr.rel (%p545) target = $region83
                $region80: #{actor_forward.5} parent=68 // loop_body
                  %v552 = vld [vmem:[%s550] sm:$0xff]
                  %553 = vst [vmem:[%s551] sm:$0xff] %v552
                  %v554 = vld [vmem:[%s550 + $0x118] sm:$0xff]
                  %555 = vst [vmem:[%s551 + $0x20] sm:$0xff] %v554
                  %v556 = vld [vmem:[%s550 + $0x230] sm:$0xff]
                  %557 = vst [vmem:[%s551 + $0x40] sm:$0xff] %v556
                  %v558 = vld [vmem:[%s550 + $0x348] sm:$0xff]
                  %559 = vst [vmem:[%s551 + $0x60] sm:$0xff] %v558
                  %v560 = vld [vmem:[%s550 + $0x460] sm:$0xff]
                  %561 = vst [vmem:[%s551 + $0x80] sm:$0xff] %v560
                  %v562 = vld [vmem:[%s550 + $0x578] sm:$0xff]
                  %563 = vst [vmem:[%s551 + $0xa0] sm:$0xff] %v562
                  %v564 = vld [vmem:[%s550 + $0x690] sm:$0xff]
                  %565 = vst [vmem:[%s551 + $0xc0] sm:$0xff] %v564
                  %v566 = vld [vmem:[%s550 + $0x7a8] sm:$0xff]
                  %567 = vst [vmem:[%s551 + $0xe0] sm:$0xff] %v566
                  %s568 = sadd.s32 1, %s549
                  %p569 = scmp.ge.s32.totalorder %s568, %s533
                  %s570 = scalar_select %p569, 0, %s568
                  %s571 = smul.u32 %s570, 8
                  %s572 = smul.u32 %s570, 8
                  %s573 = scalar_lea.vmem %s537, %s571
                  %s574 = scalar_lea.vmem %s540, %s572 [#allocation2]
                $region81: #{actor_forward.5} parent=68 // loop_footer
                  %s546 = sadd.s32 %s544, 1
                $region82: #{actor_forward.5} parent=68 // loop_footer_branch
                  %543 = sbr.rel target = $region78
                $region83: #{actor_forward.5} parent=68 // loop_exit
                  _
                %s575 = sshll.u32 1, %s379
                %s576 = ssub.s32 %s575, 1
                loop: start=0, step=1, limit=1
                $region84: #{actor_forward.5} parent=68 // loop_pre_header
                  _
                $region85: #{actor_forward.5} parent=68 // loop_header
                  %s578 = sphi 0, %s582
                  %p579 = scmp.ge.s32.totalorder %s578, 1
                  %s583 = sphi %s381, %s381
                  %s584 = sphi %s383, %s383
                $region86: #{actor_forward.5} parent=68 // loop_header_branch
                  %581 = sbr.rel (%p579) target = $region90
                $region87: #{actor_forward.5} parent=68 // loop_body
                  %v585 = vld [vmem:[%s583] sm:%s576]
                  %586 = vst [vmem:[%s584] sm:%s576] %v585
                  %v587 = vld [vmem:[%s583 + $0x118] sm:%s576]
                  %588 = vst [vmem:[%s584 + $0x20] sm:%s576] %v587
                  %v589 = vld [vmem:[%s583 + $0x230] sm:%s576]
                  %590 = vst [vmem:[%s584 + $0x40] sm:%s576] %v589
                  %v591 = vld [vmem:[%s583 + $0x348] sm:%s576]
                  %592 = vst [vmem:[%s584 + $0x60] sm:%s576] %v591
                  %v593 = vld [vmem:[%s583 + $0x460] sm:%s576]
                  %594 = vst [vmem:[%s584 + $0x80] sm:%s576] %v593
                  %v595 = vld [vmem:[%s583 + $0x578] sm:%s576]
                  %596 = vst [vmem:[%s584 + $0xa0] sm:%s576] %v595
                  %v597 = vld [vmem:[%s583 + $0x690] sm:%s576]
                  %598 = vst [vmem:[%s584 + $0xc0] sm:%s576] %v597
                  %v599 = vld [vmem:[%s583 + $0x7a8] sm:%s576]
                  %600 = vst [vmem:[%s584 + $0xe0] sm:%s576] %v599
                $region88: #{actor_forward.5} parent=68 // loop_footer
                  %s582 = sadd.s32 1, %s578
                $region89: #{actor_forward.5} parent=68 // loop_footer_branch
                  %577 = sbr.rel target = $region85
                $region90: #{actor_forward.5} parent=68 // loop_exit
                  _
              $region69: #{actor_forward.5} parent=35 // pred_fallthru
                _
            $region36: #{actor_forward.5} parent=31 // pred_fallthru
              _
            // Predicated region
            $region37: #{actor_forward.5} parent=31 // pred_check
              %p151 = pneg %p147
            $region38: #{actor_forward.5} parent=31 // pred_check_branch
              %153 = sbr.rel (%p151) target = $region40
            $region39: #{actor_forward.5} parent=31 // pred_region
              %s154 = sshll.u32 1, %s143
              %s155 = ssub.s32 %s154, 1
              loop: start=0, step=1, limit=1
              $region41: #{actor_forward.5} parent=39 // loop_pre_header
                _
              $region42: #{actor_forward.5} parent=39 // loop_header
                %s157 = sphi 0, %s161
                %p158 = scmp.ge.s32.totalorder %s157, 1
                %s162 = sphi %s142, %s142
                %s163 = sphi %s134, %s134
              $region43: #{actor_forward.5} parent=39 // loop_header_branch
                %160 = sbr.rel (%p158) target = $region47
              $region44: #{actor_forward.5} parent=39 // loop_body
                %v164 = vld [vmem:[%s162] sm:%s155]
                %165 = vst [vmem:[%s163] sm:%s155] %v164
                %v166 = vld [vmem:[%s162 + $0x118] sm:%s155]
                %167 = vst [vmem:[%s163 + $0x20] sm:%s155] %v166
                %v168 = vld [vmem:[%s162 + $0x230] sm:%s155]
                %169 = vst [vmem:[%s163 + $0x40] sm:%s155] %v168
                %v170 = vld [vmem:[%s162 + $0x348] sm:%s155]
                %171 = vst [vmem:[%s163 + $0x60] sm:%s155] %v170
                %v172 = vld [vmem:[%s162 + $0x460] sm:%s155]
                %173 = vst [vmem:[%s163 + $0x80] sm:%s155] %v172
                %v174 = vld [vmem:[%s162 + $0x578] sm:%s155]
                %175 = vst [vmem:[%s163 + $0xa0] sm:%s155] %v174
                %v176 = vld [vmem:[%s162 + $0x690] sm:%s155]
                %177 = vst [vmem:[%s163 + $0xc0] sm:%s155] %v176
                %v178 = vld [vmem:[%s162 + $0x7a8] sm:%s155]
                %179 = vst [vmem:[%s163 + $0xe0] sm:%s155] %v178
              $region45: #{actor_forward.5} parent=39 // loop_footer
                %s161 = sadd.s32 1, %s157
              $region46: #{actor_forward.5} parent=39 // loop_footer_branch
                %156 = sbr.rel target = $region42
              $region47: #{actor_forward.5} parent=39 // loop_exit
                _
            $region40: #{actor_forward.5} parent=31 // pred_fallthru
              _
          $region32: #{actor_forward.5} parent=27 // pred_fallthru
            _
          %601 = vnop
        $region28: #{actor_forward.5} parent=23 // pred_fallthru
          _
      $region24: #{actor_forward.5} parent=5 // pred_fallthru
        _
      %p602 = scmp.le.s32.totalorder 1, %s9
      %p603 = scmp.lt.s32.totalorder %s9, 10
      %p604 = pnand %p602, %p603
      %p605 = pneg %p604
      // Predicated region
      $region91: #{actor_forward.5} parent=5 // pred_check
        _
      $region92: #{actor_forward.5} parent=5 // pred_check_branch
        %607 = sbr.rel (%p604) target = $region94
      $region93: #{actor_forward.5} parent=5 // pred_region
        %s608 = ssub.s32 %s9, 1
        %s609 = sand.u32 %s64, 1
        %s610 = sand.u32 %s64, 1
        %s611 = smul.addr %s610, 256
        %s612 = scalar_lea.vmem [#allocation2], %s611
        // Predicated region
        $region95: #{actor_forward.5} parent=93 // pred_check
          %p613 = pneg %p77
        $region96: #{actor_forward.5} parent=93 // pred_check_branch
          %615 = sbr.rel (%p613) target = $region98
        $region97: #{actor_forward.5} parent=93 // pred_region
          _
        $region98: #{actor_forward.5} parent=93 // pred_fallthru
          _
        %p616 = pneg %p30
        %p617 = pneg %p27
        %p618 = pneg %p51
        %p619 = pneg %p48
        %s620 = sand.u32 %s64, 1
        %s621 = sand.u32 %s64, 1
        %s622 = smul.addr %s621, 256
        %s623 = scalar_lea.vmem [#allocation2], %s622
        %p624 = pneg %p77
        %p625 = pneg %p74
        %p626 = pneg %p103
        %p627 = pneg %p100
        %s628 = sand.u32 %s90, 1
        %s629 = sand.u32 %s90, 1
        %s630 = smul.addr %s629, 32
        %s631 = scalar_lea.vmem [#allocation3], %s630
        %s632 = smul.u32 4, %s14
        %s633 = ssub.s32 35, %s632
        %p634 = scmp.lt.s32.totalorder %s633, 4
        %s635 = scalar_select %p634, %s633, 4
        %s636 = smul.u32 1024, %s635
        %s637 = smul.u32 4, %s14
        %s638 = ssub.s32 35, %s637
        %p639 = scmp.lt.s32.totalorder %s638, 4
        %s640 = scalar_select %p639, %s638, 4
        %s641 = smul.u32 128, %s640
        %v643 = vld [vmem:[%s0] sm:$0xff]
        %v644 = vpack.c.bf16 %v643, %v643
        %v645 = vld [vmem:[%s612] sm:$0xff]
        %v646 = vld [vmem:[%s612 + $0x8] sm:$0xff]
        %v647 = vld [vmem:[%s612 + $0x10] sm:$0xff]
        %v648 = vld [vmem:[%s612 + $0x18] sm:$0xff]
        %v649 = vld [vmem:[%s612 + $0x20] sm:$0xff]
        %v650 = vld [vmem:[%s612 + $0x28] sm:$0xff]
        %v651 = vld [vmem:[%s612 + $0x30] sm:$0xff]
        %v652 = vld [vmem:[%s612 + $0x38] sm:$0xff]
        %v653 = vld [vmem:[%s612 + $0x40] sm:$0xff]
        %v654 = vld [vmem:[%s612 + $0x48] sm:$0xff]
        %v655 = vld [vmem:[%s612 + $0x50] sm:$0xff]
        %v656 = vld [vmem:[%s612 + $0x58] sm:$0xff]
        %v657 = vld [vmem:[%s612 + $0x60] sm:$0xff]
        %v658 = vld [vmem:[%s612 + $0x68] sm:$0xff]
        %v659 = vld [vmem:[%s612 + $0x70] sm:$0xff]
        %v660 = vld [vmem:[%s612 + $0x78] sm:$0xff]
        %v661 = vld [vmem:[%s612 + $0x80] sm:$0xff]
        %v662 = vld [vmem:[%s612 + $0x88] sm:$0xff]
        %v663 = vld [vmem:[%s612 + $0x90] sm:$0xff]
        %v664 = vld [vmem:[%s612 + $0x98] sm:$0xff]
        %v665 = vld [vmem:[%s612 + $0xa0] sm:$0xff]
        %v666 = vld [vmem:[%s612 + $0xa8] sm:$0xff]
        %v667 = vld [vmem:[%s612 + $0xb0] sm:$0xff]
        %v668 = vld [vmem:[%s612 + $0xb8] sm:$0xff]
        %v669 = vld [vmem:[%s612 + $0xc0] sm:$0xff]
        %v670 = vld [vmem:[%s612 + $0xc8] sm:$0xff]
        %v671 = vld [vmem:[%s612 + $0xd0] sm:$0xff]
        %v672 = vld [vmem:[%s612 + $0xd8] sm:$0xff]
        %v673 = vld [vmem:[%s612 + $0xe0] sm:$0xff]
        %v674 = vld [vmem:[%s612 + $0xe8] sm:$0xff]
        %v675 = vld [vmem:[%s612 + $0xf0] sm:$0xff]
        %v676 = vld [vmem:[%s612 + $0xf8] sm:$0xff]
        %v677 = vpack.c.bf16 %v649, %v645
        %v678 = vpack.c.bf16 %v650, %v646
        %v679 = vpack.c.bf16 %v651, %v647
        %v680 = vpack.c.bf16 %v652, %v648
        %v681 = vpack.c.bf16 %v657, %v653
        %v682 = vpack.c.bf16 %v658, %v654
        %v683 = vpack.c.bf16 %v659, %v655
        %v684 = vpack.c.bf16 %v660, %v656
        %v685 = vpack.c.bf16 %v665, %v661
        %v686 = vpack.c.bf16 %v666, %v662
        %v687 = vpack.c.bf16 %v667, %v663
        %v688 = vpack.c.bf16 %v668, %v664
        %v689 = vpack.c.bf16 %v673, %v669
        %v690 = vpack.c.bf16 %v674, %v670
        %v691 = vpack.c.bf16 %v675, %v671
        %v692 = vpack.c.bf16 %v676, %v672
        %v693 = vld [vmem:[%s1] sm:$0xff]
        %695 = vset.pattern.permute.xlu0 0
        %696 = vperm.xlu0 %695, %v693
        %v697 = vpop.permute.xlu0 %696
        %vm699 = vcmask 523264
        %v701 = vsel %vm699, %v644, 0
        %703 = vmatprep.subr.bf16.mxu0 0
        %704 = vmatpush1.bf16.msra.mxu0 0
        %705 = vmatprep.subr.bf16.mxu0 0
        %706 = vmatpush1.bf16.msra.mxu0 0
        %707 = vmatprep.subr.bf16.mxu0 0
        %708 = vmatpush1.bf16.msra.mxu0 0
        %709 = vmatprep.subr.bf16.mxu0 0
        %710 = vmatpush1.bf16.msra.mxu0 0
        %711 = vmatprep.subr.bf16.mxu0 %v690
        %712 = vmatpush1.bf16.msra.mxu0 %v689
        %713 = vmatprep.subr.bf16.mxu0 %v686
        %714 = vmatpush1.bf16.msra.mxu0 %v685
        %715 = vmatprep.subr.bf16.mxu0 %v682
        %716 = vmatpush1.bf16.msra.mxu0 %v681
        %717 = vmatprep.subr.bf16.mxu0 %v678
        %718 = vmatpush1.bf16.msra.mxu0 %v677
        %719 = vmatprep.subr.bf16.mxu0 0
        %720 = vmatpush2.bf16.msra.mxu0 0
        %721 = vmatprep.subr.bf16.mxu0 0
        %722 = vmatpush2.bf16.msra.mxu0 0
        %723 = vmatprep.subr.bf16.mxu0 0
        %724 = vmatpush2.bf16.msra.mxu0 0
        %725 = vmatprep.subr.bf16.mxu0 0
        %726 = vmatpush2.bf16.msra.mxu0 0
        %727 = vmatprep.subr.bf16.mxu0 0
        %728 = vmatpush2.bf16.msra.mxu0 0
        %729 = vmatprep.subr.bf16.mxu0 0
        %730 = vmatpush2.bf16.msra.mxu0 0
        %731 = vmatprep.subr.bf16.mxu0 0
        %732 = vmatpush2.bf16.msra.mxu0 0
        %733 = vmatprep.subr.bf16.mxu0 0
        %734 = vmatpush2.bf16.msra.mxu0 0
        %735 = vmatprep.mubr.bf16.mxu0 0
        %736 = vmatmul.mubr.bf16.gmra.mxu0 %v701
        %v737 = vpop.f32.mrf.mxu0
        %v738 = vadd.f32 %v697, %v737
        %v739 = vpop.f32.mrf.mxu0
        %v740 = vadd.f32 %v697, %v739
        %v741 = vpop.f32.mrf.mxu0
        %v742 = vpop.f32.mrf.mxu0
        %743 = vdwg.mxu0
        %744 = vmatprep.subr.bf16.mxu0 0
        %745 = vmatpush1.bf16.msra.mxu0 0
        %746 = vmatprep.subr.bf16.mxu0 0
        %747 = vmatpush1.bf16.msra.mxu0 0
        %748 = vmatprep.subr.bf16.mxu0 0
        %749 = vmatpush1.bf16.msra.mxu0 0
        %750 = vmatprep.subr.bf16.mxu0 0
        %751 = vmatpush1.bf16.msra.mxu0 0
        %752 = vmatprep.subr.bf16.mxu0 %v692
        %753 = vmatpush1.bf16.msra.mxu0 %v691
        %754 = vmatprep.subr.bf16.mxu0 %v688
        %755 = vmatpush1.bf16.msra.mxu0 %v687
        %756 = vmatprep.subr.bf16.mxu0 %v684
        %757 = vmatpush1.bf16.msra.mxu0 %v683
        %758 = vmatprep.subr.bf16.mxu0 %v680
        %759 = vmatpush1.bf16.msra.mxu0 %v679
        %760 = vmatprep.subr.bf16.mxu0 0
        %761 = vmatpush2.bf16.msra.mxu0 0
        %762 = vmatprep.subr.bf16.mxu0 0
        %763 = vmatpush2.bf16.msra.mxu0 0
        %764 = vmatprep.subr.bf16.mxu0 0
        %765 = vmatpush2.bf16.msra.mxu0 0
        %766 = vmatprep.subr.bf16.mxu0 0
        %767 = vmatpush2.bf16.msra.mxu0 0
        %768 = vmatprep.subr.bf16.mxu0 0
        %769 = vmatpush2.bf16.msra.mxu0 0
        %770 = vmatprep.subr.bf16.mxu0 0
        %771 = vmatpush2.bf16.msra.mxu0 0
        %772 = vmatprep.subr.bf16.mxu0 0
        %773 = vmatpush2.bf16.msra.mxu0 0
        %774 = vmatprep.subr.bf16.mxu0 0
        %775 = vmatpush2.bf16.msra.mxu0 0
        %776 = vmatprep.mubr.bf16.mxu0 0
        %777 = vmatmul.mubr.bf16.gmra.mxu0 %v701
        %v778 = vpop.f32.mrf.mxu0
        %v779 = vadd.f32 %v697, %v778
        %v780 = vpop.f32.mrf.mxu0
        %v781 = vadd.f32 %v697, %v780
        %v782 = vpop.f32.mrf.mxu0
        %v783 = vpop.f32.mrf.mxu0
        %784 = vdwg.mxu0
        %v785 = vmax.f32 %v738, 0.0
        %v786 = vmax.f32 %v740, 0.0
        %v787 = vmax.f32 %v779, 0.0
        %v788 = vmax.f32 %v781, 0.0
        %789 = vst [vmem:[%s631] sm:$0xff] %v785
        %790 = vst [vmem:[%s631 + $0x8] sm:$0xff] %v786
        %791 = vst [vmem:[%s631 + $0x10] sm:$0xff] %v787
        %792 = vst [vmem:[%s631 + $0x18] sm:$0xff] %v788
        %s793 = sand.u32 %s90, 1
        %s794 = sand.u32 %s90, 1
        %s795 = smul.addr %s794, 32
        %s796 = scalar_lea.vmem [#allocation3], %s795
        // Predicated region
        $region99: #{actor_forward.5} parent=93 // pred_check
          %p797 = pneg %p100
        $region100: #{actor_forward.5} parent=93 // pred_check_branch
          %799 = sbr.rel (%p797) target = $region102
        $region101: #{actor_forward.5} parent=93 // pred_region
          %s800 = smul.u32 4, %s14
          %s801 = ssub.s32 35, %s800
          %p802 = scmp.lt.s32.totalorder %s801, 4
          %s803 = scalar_select %p802, %s801, 4
          %s804 = smul.u32 128, %s803
          %p805 = scmp.ne.s32.totalorder 0, %s804
          %s806 = smul.addr %s800, 8
          %s807 = scalar_lea.vmem %s3, %s806
          %s808 = smul.u32 %s803, 8
          // Predicated region
          $region103: #{actor_forward.5} parent=101 // pred_check
            %p809 = pneg %p805
          $region104: #{actor_forward.5} parent=101 // pred_check_branch
            %811 = sbr.rel (%p809) target = $region106
          $region105: #{actor_forward.5} parent=101 // pred_region
            %p812 = scmp.lt.u32.totalorder %s808, 8
            %p813 = pneg %p812
            // Predicated region
            $region107: #{actor_forward.5} parent=105 // pred_check
              _
            $region108: #{actor_forward.5} parent=105 // pred_check_branch
              %815 = sbr.rel (%p812) target = $region110
            $region109: #{actor_forward.5} parent=105 // pred_region
              %s831 = sand.u32 %s808, 7
              %p832 = scmp.eq.s32.totalorder %s831, 0
              // Predicated region
              $region122: #{actor_forward.5} parent=109 // pred_check
                %p833 = pneg %p832
              $region123: #{actor_forward.5} parent=109 // pred_check_branch
                %835 = sbr.rel (%p833) target = $region125
              $region124: #{actor_forward.5} parent=109 // pred_region
                %s836 = sshrl.u32 %s808, 3
                %s837 = sshrl.u32 %s836, 6
                // While loop
                $region126: #{actor_forward.5} parent=124 // loop_pre_header
                  _
                $region127: #{actor_forward.5} parent=124 // loop_header
                  %s841 = sphi 0, %s843
                  %p842 = scmp.ge.s32.totalorder %s841, %s837
                  %s846 = sphi 0, %s979
                  %s847 = sphi %s796, %s982
                  %s848 = sphi %s807, %s983
                $region128: #{actor_forward.5} parent=124 // loop_header_branch
                  %845 = sbr.rel (%p842) target = $region132
                $region129: #{actor_forward.5} parent=124 // loop_body
                  %v849 = vld [vmem:[%s847] sm:$0xff]
                  %850 = vst [vmem:[%s848] sm:$0xff] %v849
                  %v851 = vld [vmem:[%s847 + $0x8] sm:$0xff]
                  %852 = vst [vmem:[%s848 + $0x8] sm:$0xff] %v851
                  %v853 = vld [vmem:[%s847 + $0x10] sm:$0xff]
                  %854 = vst [vmem:[%s848 + $0x10] sm:$0xff] %v853
                  %v855 = vld [vmem:[%s847 + $0x18] sm:$0xff]
                  %856 = vst [vmem:[%s848 + $0x18] sm:$0xff] %v855
                  %v857 = vld [vmem:[%s847 + $0x20] sm:$0xff]
                  %858 = vst [vmem:[%s848 + $0x20] sm:$0xff] %v857
                  %v859 = vld [vmem:[%s847 + $0x28] sm:$0xff]
                  %860 = vst [vmem:[%s848 + $0x28] sm:$0xff] %v859
                  %v861 = vld [vmem:[%s847 + $0x30] sm:$0xff]
                  %862 = vst [vmem:[%s848 + $0x30] sm:$0xff] %v861
                  %v863 = vld [vmem:[%s847 + $0x38] sm:$0xff]
                  %864 = vst [vmem:[%s848 + $0x38] sm:$0xff] %v863
                  %v865 = vld [vmem:[%s847 + $0x40] sm:$0xff]
                  %866 = vst [vmem:[%s848 + $0x40] sm:$0xff] %v865
                  %v867 = vld [vmem:[%s847 + $0x48] sm:$0xff]
                  %868 = vst [vmem:[%s848 + $0x48] sm:$0xff] %v867
                  %v869 = vld [vmem:[%s847 + $0x50] sm:$0xff]
                  %870 = vst [vmem:[%s848 + $0x50] sm:$0xff] %v869
                  %v871 = vld [vmem:[%s847 + $0x58] sm:$0xff]
                  %872 = vst [vmem:[%s848 + $0x58] sm:$0xff] %v871
                  %v873 = vld [vmem:[%s847 + $0x60] sm:$0xff]
                  %874 = vst [vmem:[%s848 + $0x60] sm:$0xff] %v873
                  %v875 = vld [vmem:[%s847 + $0x68] sm:$0xff]
                  %876 = vst [vmem:[%s848 + $0x68] sm:$0xff] %v875
                  %v877 = vld [vmem:[%s847 + $0x70] sm:$0xff]
                  %878 = vst [vmem:[%s848 + $0x70] sm:$0xff] %v877
                  %v879 = vld [vmem:[%s847 + $0x78] sm:$0xff]
                  %880 = vst [vmem:[%s848 + $0x78] sm:$0xff] %v879
                  %v881 = vld [vmem:[%s847 + $0x80] sm:$0xff]
                  %882 = vst [vmem:[%s848 + $0x80] sm:$0xff] %v881
                  %v883 = vld [vmem:[%s847 + $0x88] sm:$0xff]
                  %884 = vst [vmem:[%s848 + $0x88] sm:$0xff] %v883
                  %v885 = vld [vmem:[%s847 + $0x90] sm:$0xff]
                  %886 = vst [vmem:[%s848 + $0x90] sm:$0xff] %v885
                  %v887 = vld [vmem:[%s847 + $0x98] sm:$0xff]
                  %888 = vst [vmem:[%s848 + $0x98] sm:$0xff] %v887
                  %v889 = vld [vmem:[%s847 + $0xa0] sm:$0xff]
                  %890 = vst [vmem:[%s848 + $0xa0] sm:$0xff] %v889
                  %v891 = vld [vmem:[%s847 + $0xa8] sm:$0xff]
                  %892 = vst [vmem:[%s848 + $0xa8] sm:$0xff] %v891
                  %v893 = vld [vmem:[%s847 + $0xb0] sm:$0xff]
                  %894 = vst [vmem:[%s848 + $0xb0] sm:$0xff] %v893
                  %v895 = vld [vmem:[%s847 + $0xb8] sm:$0xff]
                  %896 = vst [vmem:[%s848 + $0xb8] sm:$0xff] %v895
                  %v897 = vld [vmem:[%s847 + $0xc0] sm:$0xff]
                  %898 = vst [vmem:[%s848 + $0xc0] sm:$0xff] %v897
                  %v899 = vld [vmem:[%s847 + $0xc8] sm:$0xff]
                  %900 = vst [vmem:[%s848 + $0xc8] sm:$0xff] %v899
                  %v901 = vld [vmem:[%s847 + $0xd0] sm:$0xff]
                  %902 = vst [vmem:[%s848 + $0xd0] sm:$0xff] %v901
                  %v903 = vld [vmem:[%s847 + $0xd8] sm:$0xff]
                  %904 = vst [vmem:[%s848 + $0xd8] sm:$0xff] %v903
                  %v905 = vld [vmem:[%s847 + $0xe0] sm:$0xff]
                  %906 = vst [vmem:[%s848 + $0xe0] sm:$0xff] %v905
                  %v907 = vld [vmem:[%s847 + $0xe8] sm:$0xff]
                  %908 = vst [vmem:[%s848 + $0xe8] sm:$0xff] %v907
                  %v909 = vld [vmem:[%s847 + $0xf0] sm:$0xff]
                  %910 = vst [vmem:[%s848 + $0xf0] sm:$0xff] %v909
                  %v911 = vld [vmem:[%s847 + $0xf8] sm:$0xff]
                  %912 = vst [vmem:[%s848 + $0xf8] sm:$0xff] %v911
                  %v913 = vld [vmem:[%s847 + $0x100] sm:$0xff]
                  %914 = vst [vmem:[%s848 + $0x100] sm:$0xff] %v913
                  %v915 = vld [vmem:[%s847 + $0x108] sm:$0xff]
                  %916 = vst [vmem:[%s848 + $0x108] sm:$0xff] %v915
                  %v917 = vld [vmem:[%s847 + $0x110] sm:$0xff]
                  %918 = vst [vmem:[%s848 + $0x110] sm:$0xff] %v917
                  %v919 = vld [vmem:[%s847 + $0x118] sm:$0xff]
                  %920 = vst [vmem:[%s848 + $0x118] sm:$0xff] %v919
                  %v921 = vld [vmem:[%s847 + $0x120] sm:$0xff]
                  %922 = vst [vmem:[%s848 + $0x120] sm:$0xff] %v921
                  %v923 = vld [vmem:[%s847 + $0x128] sm:$0xff]
                  %924 = vst [vmem:[%s848 + $0x128] sm:$0xff] %v923
                  %v925 = vld [vmem:[%s847 + $0x130] sm:$0xff]
                  %926 = vst [vmem:[%s848 + $0x130] sm:$0xff] %v925
                  %v927 = vld [vmem:[%s847 + $0x138] sm:$0xff]
                  %928 = vst [vmem:[%s848 + $0x138] sm:$0xff] %v927
                  %v929 = vld [vmem:[%s847 + $0x140] sm:$0xff]
                  %930 = vst [vmem:[%s848 + $0x140] sm:$0xff] %v929
                  %v931 = vld [vmem:[%s847 + $0x148] sm:$0xff]
                  %932 = vst [vmem:[%s848 + $0x148] sm:$0xff] %v931
                  %v933 = vld [vmem:[%s847 + $0x150] sm:$0xff]
                  %934 = vst [vmem:[%s848 + $0x150] sm:$0xff] %v933
                  %v935 = vld [vmem:[%s847 + $0x158] sm:$0xff]
                  %936 = vst [vmem:[%s848 + $0x158] sm:$0xff] %v935
                  %v937 = vld [vmem:[%s847 + $0x160] sm:$0xff]
                  %938 = vst [vmem:[%s848 + $0x160] sm:$0xff] %v937
                  %v939 = vld [vmem:[%s847 + $0x168] sm:$0xff]
                  %940 = vst [vmem:[%s848 + $0x168] sm:$0xff] %v939
                  %v941 = vld [vmem:[%s847 + $0x170] sm:$0xff]
                  %942 = vst [vmem:[%s848 + $0x170] sm:$0xff] %v941
                  %v943 = vld [vmem:[%s847 + $0x178] sm:$0xff]
                  %944 = vst [vmem:[%s848 + $0x178] sm:$0xff] %v943
                  %v945 = vld [vmem:[%s847 + $0x180] sm:$0xff]
                  %946 = vst [vmem:[%s848 + $0x180] sm:$0xff] %v945
                  %v947 = vld [vmem:[%s847 + $0x188] sm:$0xff]
                  %948 = vst [vmem:[%s848 + $0x188] sm:$0xff] %v947
                  %v949 = vld [vmem:[%s847 + $0x190] sm:$0xff]
                  %950 = vst [vmem:[%s848 + $0x190] sm:$0xff] %v949
                  %v951 = vld [vmem:[%s847 + $0x198] sm:$0xff]
                  %952 = vst [vmem:[%s848 + $0x198] sm:$0xff] %v951
                  %v953 = vld [vmem:[%s847 + $0x1a0] sm:$0xff]
                  %954 = vst [vmem:[%s848 + $0x1a0] sm:$0xff] %v953
                  %v955 = vld [vmem:[%s847 + $0x1a8] sm:$0xff]
                  %956 = vst [vmem:[%s848 + $0x1a8] sm:$0xff] %v955
                  %v957 = vld [vmem:[%s847 + $0x1b0] sm:$0xff]
                  %958 = vst [vmem:[%s848 + $0x1b0] sm:$0xff] %v957
                  %v959 = vld [vmem:[%s847 + $0x1b8] sm:$0xff]
                  %960 = vst [vmem:[%s848 + $0x1b8] sm:$0xff] %v959
                  %v961 = vld [vmem:[%s847 + $0x1c0] sm:$0xff]
                  %962 = vst [vmem:[%s848 + $0x1c0] sm:$0xff] %v961
                  %v963 = vld [vmem:[%s847 + $0x1c8] sm:$0xff]
                  %964 = vst [vmem:[%s848 + $0x1c8] sm:$0xff] %v963
                  %v965 = vld [vmem:[%s847 + $0x1d0] sm:$0xff]
                  %966 = vst [vmem:[%s848 + $0x1d0] sm:$0xff] %v965
                  %v967 = vld [vmem:[%s847 + $0x1d8] sm:$0xff]
                  %968 = vst [vmem:[%s848 + $0x1d8] sm:$0xff] %v967
                  %v969 = vld [vmem:[%s847 + $0x1e0] sm:$0xff]
                  %970 = vst [vmem:[%s848 + $0x1e0] sm:$0xff] %v969
                  %v971 = vld [vmem:[%s847 + $0x1e8] sm:$0xff]
                  %972 = vst [vmem:[%s848 + $0x1e8] sm:$0xff] %v971
                  %v973 = vld [vmem:[%s847 + $0x1f0] sm:$0xff]
                  %974 = vst [vmem:[%s848 + $0x1f0] sm:$0xff] %v973
                  %v975 = vld [vmem:[%s847 + $0x1f8] sm:$0xff]
                  %976 = vst [vmem:[%s848 + $0x1f8] sm:$0xff] %v975
                  %s977 = sadd.s32 1, %s846
                  %p978 = scmp.ge.s32.totalorder %s977, %s837
                  %s979 = scalar_select %p978, 0, %s977
                  %s980 = smul.u32 %s979, 512
                  %s981 = smul.u32 %s979, 512
                  %s982 = scalar_lea.vmem %s796, %s980 [#allocation3]
                  %s983 = scalar_lea.vmem %s807, %s981
                $region130: #{actor_forward.5} parent=124 // loop_footer
                  %s843 = sadd.s32 %s841, 1
                $region131: #{actor_forward.5} parent=124 // loop_footer_branch
                  %840 = sbr.rel target = $region127
                $region132: #{actor_forward.5} parent=124 // loop_exit
                  _
                %s984 = sshrl.u32 %s836, 6
                %s985 = sand.u32 %s836, 63
                %s986 = smul.u32 %s984, 64
                %s987 = smul.u32 128, %s986
                %s988 = sshra.s32 %s987, 4
                %s989 = scalar_lea.vmem %s796, %s988 [#allocation3]
                %s990 = smul.u32 128, %s986
                %s991 = sshra.s32 %s990, 4
                %s992 = scalar_lea.vmem %s807, %s991
                // While loop
                $region133: #{actor_forward.5} parent=124 // loop_pre_header
                  _
                $region134: #{actor_forward.5} parent=124 // loop_header
                  %s996 = sphi 0, %s998
                  %p997 = scmp.ge.s32.totalorder %s996, %s985
                  %s1001 = sphi 0, %s1008
                  %s1002 = sphi %s989, %s1011
                  %s1003 = sphi %s992, %s1012
                $region135: #{actor_forward.5} parent=124 // loop_header_branch
                  %1000 = sbr.rel (%p997) target = $region139
                $region136: #{actor_forward.5} parent=124 // loop_body
                  %v1004 = vld [vmem:[%s1002] sm:$0xff]
                  %1005 = vst [vmem:[%s1003] sm:$0xff] %v1004
                  %s1006 = sadd.s32 1, %s1001
                  %p1007 = scmp.ge.s32.totalorder %s1006, %s985
                  %s1008 = scalar_select %p1007, 0, %s1006
                  %s1009 = smul.u32 %s1008, 8
                  %s1010 = smul.u32 %s1008, 8
                  %s1011 = scalar_lea.vmem %s989, %s1009 [#allocation3]
                  %s1012 = scalar_lea.vmem %s992, %s1010
                $region137: #{actor_forward.5} parent=124 // loop_footer
                  %s998 = sadd.s32 %s996, 1
                $region138: #{actor_forward.5} parent=124 // loop_footer_branch
                  %995 = sbr.rel target = $region134
                $region139: #{actor_forward.5} parent=124 // loop_exit
                  _
              $region125: #{actor_forward.5} parent=109 // pred_fallthru
                _
              %p1013 = pneg %p832
              // Predicated region
              $region140: #{actor_forward.5} parent=109 // pred_check
                _
              $region141: #{actor_forward.5} parent=109 // pred_check_branch
                %1015 = sbr.rel (%p832) target = $region143
              $region142: #{actor_forward.5} parent=109 // pred_region
                %s1016 = sand.u32 %s808, 7
                %s1017 = ssub.s32 %s808, %s1016
                %s1018 = scalar_lea.vmem %s796, %s1017 [#allocation3]
                %s1019 = ssub.s32 %s808, %s1016
                %s1020 = scalar_lea.vmem %s807, %s1019
                %s1021 = sshrl.u32 %s808, 3
                %s1022 = sshrl.u32 %s1021, 6
                // While loop
                $region144: #{actor_forward.5} parent=142 // loop_pre_header
                  _
                $region145: #{actor_forward.5} parent=142 // loop_header
                  %s1026 = sphi 0, %s1028
                  %p1027 = scmp.ge.s32.totalorder %s1026, %s1022
                  %s1031 = sphi 0, %s1164
                  %s1032 = sphi %s796, %s1167
                  %s1033 = sphi %s807, %s1168
                $region146: #{actor_forward.5} parent=142 // loop_header_branch
                  %1030 = sbr.rel (%p1027) target = $region150
                $region147: #{actor_forward.5} parent=142 // loop_body
                  %v1034 = vld [vmem:[%s1032] sm:$0xff]
                  %1035 = vst [vmem:[%s1033] sm:$0xff] %v1034
                  %v1036 = vld [vmem:[%s1032 + $0x8] sm:$0xff]
                  %1037 = vst [vmem:[%s1033 + $0x8] sm:$0xff] %v1036
                  %v1038 = vld [vmem:[%s1032 + $0x10] sm:$0xff]
                  %1039 = vst [vmem:[%s1033 + $0x10] sm:$0xff] %v1038
                  %v1040 = vld [vmem:[%s1032 + $0x18] sm:$0xff]
                  %1041 = vst [vmem:[%s1033 + $0x18] sm:$0xff] %v1040
                  %v1042 = vld [vmem:[%s1032 + $0x20] sm:$0xff]
                  %1043 = vst [vmem:[%s1033 + $0x20] sm:$0xff] %v1042
                  %v1044 = vld [vmem:[%s1032 + $0x28] sm:$0xff]
                  %1045 = vst [vmem:[%s1033 + $0x28] sm:$0xff] %v1044
                  %v1046 = vld [vmem:[%s1032 + $0x30] sm:$0xff]
                  %1047 = vst [vmem:[%s1033 + $0x30] sm:$0xff] %v1046
                  %v1048 = vld [vmem:[%s1032 + $0x38] sm:$0xff]
                  %1049 = vst [vmem:[%s1033 + $0x38] sm:$0xff] %v1048
                  %v1050 = vld [vmem:[%s1032 + $0x40] sm:$0xff]
                  %1051 = vst [vmem:[%s1033 + $0x40] sm:$0xff] %v1050
                  %v1052 = vld [vmem:[%s1032 + $0x48] sm:$0xff]
                  %1053 = vst [vmem:[%s1033 + $0x48] sm:$0xff] %v1052
                  %v1054 = vld [vmem:[%s1032 + $0x50] sm:$0xff]
                  %1055 = vst [vmem:[%s1033 + $0x50] sm:$0xff] %v1054
                  %v1056 = vld [vmem:[%s1032 + $0x58] sm:$0xff]
                  %1057 = vst [vmem:[%s1033 + $0x58] sm:$0xff] %v1056
                  %v1058 = vld [vmem:[%s1032 + $0x60] sm:$0xff]
                  %1059 = vst [vmem:[%s1033 + $0x60] sm:$0xff] %v1058
                  %v1060 = vld [vmem:[%s1032 + $0x68] sm:$0xff]
                  %1061 = vst [vmem:[%s1033 + $0x68] sm:$0xff] %v1060
                  %v1062 = vld [vmem:[%s1032 + $0x70] sm:$0xff]
                  %1063 = vst [vmem:[%s1033 + $0x70] sm:$0xff] %v1062
                  %v1064 = vld [vmem:[%s1032 + $0x78] sm:$0xff]
                  %1065 = vst [vmem:[%s1033 + $0x78] sm:$0xff] %v1064
                  %v1066 = vld [vmem:[%s1032 + $0x80] sm:$0xff]
                  %1067 = vst [vmem:[%s1033 + $0x80] sm:$0xff] %v1066
                  %v1068 = vld [vmem:[%s1032 + $0x88] sm:$0xff]
                  %1069 = vst [vmem:[%s1033 + $0x88] sm:$0xff] %v1068
                  %v1070 = vld [vmem:[%s1032 + $0x90] sm:$0xff]
                  %1071 = vst [vmem:[%s1033 + $0x90] sm:$0xff] %v1070
                  %v1072 = vld [vmem:[%s1032 + $0x98] sm:$0xff]
                  %1073 = vst [vmem:[%s1033 + $0x98] sm:$0xff] %v1072
                  %v1074 = vld [vmem:[%s1032 + $0xa0] sm:$0xff]
                  %1075 = vst [vmem:[%s1033 + $0xa0] sm:$0xff] %v1074
                  %v1076 = vld [vmem:[%s1032 + $0xa8] sm:$0xff]
                  %1077 = vst [vmem:[%s1033 + $0xa8] sm:$0xff] %v1076
                  %v1078 = vld [vmem:[%s1032 + $0xb0] sm:$0xff]
                  %1079 = vst [vmem:[%s1033 + $0xb0] sm:$0xff] %v1078
                  %v1080 = vld [vmem:[%s1032 + $0xb8] sm:$0xff]
                  %1081 = vst [vmem:[%s1033 + $0xb8] sm:$0xff] %v1080
                  %v1082 = vld [vmem:[%s1032 + $0xc0] sm:$0xff]
                  %1083 = vst [vmem:[%s1033 + $0xc0] sm:$0xff] %v1082
                  %v1084 = vld [vmem:[%s1032 + $0xc8] sm:$0xff]
                  %1085 = vst [vmem:[%s1033 + $0xc8] sm:$0xff] %v1084
                  %v1086 = vld [vmem:[%s1032 + $0xd0] sm:$0xff]
                  %1087 = vst [vmem:[%s1033 + $0xd0] sm:$0xff] %v1086
                  %v1088 = vld [vmem:[%s1032 + $0xd8] sm:$0xff]
                  %1089 = vst [vmem:[%s1033 + $0xd8] sm:$0xff] %v1088
                  %v1090 = vld [vmem:[%s1032 + $0xe0] sm:$0xff]
                  %1091 = vst [vmem:[%s1033 + $0xe0] sm:$0xff] %v1090
                  %v1092 = vld [vmem:[%s1032 + $0xe8] sm:$0xff]
                  %1093 = vst [vmem:[%s1033 + $0xe8] sm:$0xff] %v1092
                  %v1094 = vld [vmem:[%s1032 + $0xf0] sm:$0xff]
                  %1095 = vst [vmem:[%s1033 + $0xf0] sm:$0xff] %v1094
                  %v1096 = vld [vmem:[%s1032 + $0xf8] sm:$0xff]
                  %1097 = vst [vmem:[%s1033 + $0xf8] sm:$0xff] %v1096
                  %v1098 = vld [vmem:[%s1032 + $0x100] sm:$0xff]
                  %1099 = vst [vmem:[%s1033 + $0x100] sm:$0xff] %v1098
                  %v1100 = vld [vmem:[%s1032 + $0x108] sm:$0xff]
                  %1101 = vst [vmem:[%s1033 + $0x108] sm:$0xff] %v1100
                  %v1102 = vld [vmem:[%s1032 + $0x110] sm:$0xff]
                  %1103 = vst [vmem:[%s1033 + $0x110] sm:$0xff] %v1102
                  %v1104 = vld [vmem:[%s1032 + $0x118] sm:$0xff]
                  %1105 = vst [vmem:[%s1033 + $0x118] sm:$0xff] %v1104
                  %v1106 = vld [vmem:[%s1032 + $0x120] sm:$0xff]
                  %1107 = vst [vmem:[%s1033 + $0x120] sm:$0xff] %v1106
                  %v1108 = vld [vmem:[%s1032 + $0x128] sm:$0xff]
                  %1109 = vst [vmem:[%s1033 + $0x128] sm:$0xff] %v1108
                  %v1110 = vld [vmem:[%s1032 + $0x130] sm:$0xff]
                  %1111 = vst [vmem:[%s1033 + $0x130] sm:$0xff] %v1110
                  %v1112 = vld [vmem:[%s1032 + $0x138] sm:$0xff]
                  %1113 = vst [vmem:[%s1033 + $0x138] sm:$0xff] %v1112
                  %v1114 = vld [vmem:[%s1032 + $0x140] sm:$0xff]
                  %1115 = vst [vmem:[%s1033 + $0x140] sm:$0xff] %v1114
                  %v1116 = vld [vmem:[%s1032 + $0x148] sm:$0xff]
                  %1117 = vst [vmem:[%s1033 + $0x148] sm:$0xff] %v1116
                  %v1118 = vld [vmem:[%s1032 + $0x150] sm:$0xff]
                  %1119 = vst [vmem:[%s1033 + $0x150] sm:$0xff] %v1118
                  %v1120 = vld [vmem:[%s1032 + $0x158] sm:$0xff]
                  %1121 = vst [vmem:[%s1033 + $0x158] sm:$0xff] %v1120
                  %v1122 = vld [vmem:[%s1032 + $0x160] sm:$0xff]
                  %1123 = vst [vmem:[%s1033 + $0x160] sm:$0xff] %v1122
                  %v1124 = vld [vmem:[%s1032 + $0x168] sm:$0xff]
                  %1125 = vst [vmem:[%s1033 + $0x168] sm:$0xff] %v1124
                  %v1126 = vld [vmem:[%s1032 + $0x170] sm:$0xff]
                  %1127 = vst [vmem:[%s1033 + $0x170] sm:$0xff] %v1126
                  %v1128 = vld [vmem:[%s1032 + $0x178] sm:$0xff]
                  %1129 = vst [vmem:[%s1033 + $0x178] sm:$0xff] %v1128
                  %v1130 = vld [vmem:[%s1032 + $0x180] sm:$0xff]
                  %1131 = vst [vmem:[%s1033 + $0x180] sm:$0xff] %v1130
                  %v1132 = vld [vmem:[%s1032 + $0x188] sm:$0xff]
                  %1133 = vst [vmem:[%s1033 + $0x188] sm:$0xff] %v1132
                  %v1134 = vld [vmem:[%s1032 + $0x190] sm:$0xff]
                  %1135 = vst [vmem:[%s1033 + $0x190] sm:$0xff] %v1134
                  %v1136 = vld [vmem:[%s1032 + $0x198] sm:$0xff]
                  %1137 = vst [vmem:[%s1033 + $0x198] sm:$0xff] %v1136
                  %v1138 = vld [vmem:[%s1032 + $0x1a0] sm:$0xff]
                  %1139 = vst [vmem:[%s1033 + $0x1a0] sm:$0xff] %v1138
                  %v1140 = vld [vmem:[%s1032 + $0x1a8] sm:$0xff]
                  %1141 = vst [vmem:[%s1033 + $0x1a8] sm:$0xff] %v1140
                  %v1142 = vld [vmem:[%s1032 + $0x1b0] sm:$0xff]
                  %1143 = vst [vmem:[%s1033 + $0x1b0] sm:$0xff] %v1142
                  %v1144 = vld [vmem:[%s1032 + $0x1b8] sm:$0xff]
                  %1145 = vst [vmem:[%s1033 + $0x1b8] sm:$0xff] %v1144
                  %v1146 = vld [vmem:[%s1032 + $0x1c0] sm:$0xff]
                  %1147 = vst [vmem:[%s1033 + $0x1c0] sm:$0xff] %v1146
                  %v1148 = vld [vmem:[%s1032 + $0x1c8] sm:$0xff]
                  %1149 = vst [vmem:[%s1033 + $0x1c8] sm:$0xff] %v1148
                  %v1150 = vld [vmem:[%s1032 + $0x1d0] sm:$0xff]
                  %1151 = vst [vmem:[%s1033 + $0x1d0] sm:$0xff] %v1150
                  %v1152 = vld [vmem:[%s1032 + $0x1d8] sm:$0xff]
                  %1153 = vst [vmem:[%s1033 + $0x1d8] sm:$0xff] %v1152
                  %v1154 = vld [vmem:[%s1032 + $0x1e0] sm:$0xff]
                  %1155 = vst [vmem:[%s1033 + $0x1e0] sm:$0xff] %v1154
                  %v1156 = vld [vmem:[%s1032 + $0x1e8] sm:$0xff]
                  %1157 = vst [vmem:[%s1033 + $0x1e8] sm:$0xff] %v1156
                  %v1158 = vld [vmem:[%s1032 + $0x1f0] sm:$0xff]
                  %1159 = vst [vmem:[%s1033 + $0x1f0] sm:$0xff] %v1158
                  %v1160 = vld [vmem:[%s1032 + $0x1f8] sm:$0xff]
                  %1161 = vst [vmem:[%s1033 + $0x1f8] sm:$0xff] %v1160
                  %s1162 = sadd.s32 1, %s1031
                  %p1163 = scmp.ge.s32.totalorder %s1162, %s1022
                  %s1164 = scalar_select %p1163, 0, %s1162
                  %s1165 = smul.u32 %s1164, 512
                  %s1166 = smul.u32 %s1164, 512
                  %s1167 = scalar_lea.vmem %s796, %s1165 [#allocation3]
                  %s1168 = scalar_lea.vmem %s807, %s1166
                $region148: #{actor_forward.5} parent=142 // loop_footer
                  %s1028 = sadd.s32 %s1026, 1
                $region149: #{actor_forward.5} parent=142 // loop_footer_branch
                  %1025 = sbr.rel target = $region145
                $region150: #{actor_forward.5} parent=142 // loop_exit
                  _
                %s1169 = sshrl.u32 %s1021, 6
                %s1170 = sand.u32 %s1021, 63
                %s1171 = smul.u32 %s1169, 64
                %s1172 = smul.u32 128, %s1171
                %s1173 = sshra.s32 %s1172, 4
                %s1174 = scalar_lea.vmem %s796, %s1173 [#allocation3]
                %s1175 = smul.u32 128, %s1171
                %s1176 = sshra.s32 %s1175, 4
                %s1177 = scalar_lea.vmem %s807, %s1176
                // While loop
                $region151: #{actor_forward.5} parent=142 // loop_pre_header
                  _
                $region152: #{actor_forward.5} parent=142 // loop_header
                  %s1181 = sphi 0, %s1183
                  %p1182 = scmp.ge.s32.totalorder %s1181, %s1170
                  %s1186 = sphi 0, %s1193
                  %s1187 = sphi %s1174, %s1196
                  %s1188 = sphi %s1177, %s1197
                $region153: #{actor_forward.5} parent=142 // loop_header_branch
                  %1185 = sbr.rel (%p1182) target = $region157
                $region154: #{actor_forward.5} parent=142 // loop_body
                  %v1189 = vld [vmem:[%s1187] sm:$0xff]
                  %1190 = vst [vmem:[%s1188] sm:$0xff] %v1189
                  %s1191 = sadd.s32 1, %s1186
                  %p1192 = scmp.ge.s32.totalorder %s1191, %s1170
                  %s1193 = scalar_select %p1192, 0, %s1191
                  %s1194 = smul.u32 %s1193, 8
                  %s1195 = smul.u32 %s1193, 8
                  %s1196 = scalar_lea.vmem %s1174, %s1194 [#allocation3]
                  %s1197 = scalar_lea.vmem %s1177, %s1195
                $region155: #{actor_forward.5} parent=142 // loop_footer
                  %s1183 = sadd.s32 %s1181, 1
                $region156: #{actor_forward.5} parent=142 // loop_footer_branch
                  %1180 = sbr.rel target = $region152
                $region157: #{actor_forward.5} parent=142 // loop_exit
                  _
                %s1198 = sshll.u32 1, %s1016
                %s1199 = ssub.s32 %s1198, 1
                loop: start=0, step=1, limit=1
                $region158: #{actor_forward.5} parent=142 // loop_pre_header
                  _
                $region159: #{actor_forward.5} parent=142 // loop_header
                  %s1201 = sphi 0, %s1205
                  %p1202 = scmp.ge.s32.totalorder %s1201, 1
                  %s1206 = sphi %s1018, %s1018
                  %s1207 = sphi %s1020, %s1020
                $region160: #{actor_forward.5} parent=142 // loop_header_branch
                  %1204 = sbr.rel (%p1202) target = $region164
                $region161: #{actor_forward.5} parent=142 // loop_body
                  %v1208 = vld [vmem:[%s1206] sm:%s1199]
                  %1209 = vst [vmem:[%s1207] sm:%s1199] %v1208
                $region162: #{actor_forward.5} parent=142 // loop_footer
                  %s1205 = sadd.s32 1, %s1201
                $region163: #{actor_forward.5} parent=142 // loop_footer_branch
                  %1200 = sbr.rel target = $region159
                $region164: #{actor_forward.5} parent=142 // loop_exit
                  _
              $region143: #{actor_forward.5} parent=109 // pred_fallthru
                _
            $region110: #{actor_forward.5} parent=105 // pred_fallthru
              _
            // Predicated region
            $region111: #{actor_forward.5} parent=105 // pred_check
              %p816 = pneg %p812
            $region112: #{actor_forward.5} parent=105 // pred_check_branch
              %818 = sbr.rel (%p816) target = $region114
            $region113: #{actor_forward.5} parent=105 // pred_region
              %s819 = sshll.u32 1, %s808
              %s820 = ssub.s32 %s819, 1
              loop: start=0, step=1, limit=1
              $region115: #{actor_forward.5} parent=113 // loop_pre_header
                _
              $region116: #{actor_forward.5} parent=113 // loop_header
                %s822 = sphi 0, %s826
                %p823 = scmp.ge.s32.totalorder %s822, 1
                %s827 = sphi %s796, %s796
                %s828 = sphi %s807, %s807
              $region117: #{actor_forward.5} parent=113 // loop_header_branch
                %825 = sbr.rel (%p823) target = $region121
              $region118: #{actor_forward.5} parent=113 // loop_body
                %v829 = vld [vmem:[%s827] sm:%s820]
                %830 = vst [vmem:[%s828] sm:%s820] %v829
              $region119: #{actor_forward.5} parent=113 // loop_footer
                %s826 = sadd.s32 1, %s822
              $region120: #{actor_forward.5} parent=113 // loop_footer_branch
                %821 = sbr.rel target = $region116
              $region121: #{actor_forward.5} parent=113 // loop_exit
                _
            $region114: #{actor_forward.5} parent=105 // pred_fallthru
              _
          $region106: #{actor_forward.5} parent=101 // pred_fallthru
            _
          %1210 = vnop
        $region102: #{actor_forward.5} parent=93 // pred_fallthru
          _
      $region94: #{actor_forward.5} parent=5 // pred_fallthru
        _
      %p1211 = scmp.le.s32.totalorder 2, %s9
      // Predicated region
      $region165: #{actor_forward.5} parent=5 // pred_check
        %p1212 = pneg %p1211
      $region166: #{actor_forward.5} parent=5 // pred_check_branch
        %1214 = sbr.rel (%p1212) target = $region168
      $region167: #{actor_forward.5} parent=5 // pred_region
        %s1215 = ssub.s32 %s9, 2
        // Predicated region
        $region169: #{actor_forward.5} parent=167 // pred_check
          %p1216 = pneg %p106
        $region170: #{actor_forward.5} parent=167 // pred_check_branch
          %1218 = sbr.rel (%p1216) target = $region172
        $region171: #{actor_forward.5} parent=167 // pred_region
          %s1219 = sand.u32 %s91, 1
          %s1220 = sand.u32 %s91, 1
          %s1221 = smul.addr %s1220, 32
          %s1222 = scalar_lea.vmem [#allocation3], %s1221
        $region172: #{actor_forward.5} parent=167 // pred_fallthru
          _
      $region168: #{actor_forward.5} parent=5 // pred_fallthru
        _
    $region6: #{actor_forward.5} parent=1 // loop_footer
      %s13 = sadd.s32 1, %s9
    $region7: #{actor_forward.5} parent=1 // loop_footer_branch
      %8 = sbr.rel target = $region3
    $region8: #{actor_forward.5} parent=1 // loop_exit
      _

// kernel: actor_forward.6
$region0: #{actor_forward.6}
  #allocation0 [shape = 'u32[]', space=smem, size = 0x4, offset = 0x4, fixed_abs, tag = 'smem constant byte address 0x4 - core index']
  #allocation1 [shape = 'u32[144,128]{1,0:T(1,128)}', space=vmem, size = 0x12000, scoped, tag = 'internal scratch']
  %s0 = inlined_call_operand.vmem [shape: f32[16,72], index: 0, kind: input, shape index: {}]
  %s1 = inlined_call_operand.vmem [shape: f32[16,1], index: 1, kind: input, shape index: {}]
  %s2 = inlined_call_operand.vmem [shape: f32[72,1058], index: 2, kind: input, shape index: {}]
  %s3 = inlined_call_operand.vmem [shape: f32[16,1058], index: 3, kind: output, shape index: {}]
  %s4 = sld [smem:[#allocation0]]
  $region173: #{actor_forward.6} parent=0
    _
  %s6 = ssub.s32 1, %s4
  %s7 = scalar_select 0, %s6, %s4
  $region1: #{actor_forward.6} parent=0
    #allocation2 [shape = 'u8[294912]{0}', space=vmem, size = 0x48000, scoped, tag = 'input window, operand 2']
    #allocation3 [shape = 'u8[65536]{0}', space=vmem, size = 0x10000, scoped, tag = 'output window, operand 0']
    loop: start=0, step=1, limit=5
    $region2: #{actor_forward.6} parent=1 // loop_pre_header
      _
    $region3: #{actor_forward.6} parent=1 // loop_header
      %s9 = sphi 0, %s13
      %p10 = scmp.ge.s32.totalorder %s9, 5
      %s17 = sphi 0, %s17
      %s19 = sphi 0, %s17
      %s20 = sphi 0, %s19
      %s34 = sphi 0, %s20
      %s38 = sphi 0, %s38
      %s40 = sphi 0, %s38
      %s41 = sphi 0, %s40
      %s55 = sphi 0, %s41
      %s61 = sphi 0, %s63
      %s64 = sphi 0, %s61
      %s65 = sphi 0, %s64
      %s81 = sphi 0, %s65
      %s87 = sphi 0, %s89
      %s90 = sphi 0, %s87
      %s91 = sphi 0, %s90
      %s107 = sphi 0, %s91
    $region4: #{actor_forward.6} parent=1 // loop_header_branch
      %12 = sbr.rel (%p10) target = $region8
    $region5: #{actor_forward.6} parent=1 // loop_body
      %s14 = ssub.s32 %s9, 1
      %s15 = ssub.s32 %s9, 2
      %s16 = sadd.s32 %s9, 1
      %s18 = sadd.s32 %s17, 1
      %p21 = scmp.eq.s32.totalorder %s9, 2
      %p22 = scmp.ne.s32.totalorder %s17, %s19
      %p23 = scmp.eq.s32.totalorder %s9, 0
      %p24 = por %p22, %p23
      %p25 = scmp.ne.s32.totalorder %s17, %s19
      %p26 = scmp.eq.s32.totalorder %s14, 2
      %p27 = por %p25, %p26
      %p28 = scmp.ne.s32.totalorder %s19, %s20
      %p29 = scmp.eq.s32.totalorder %s14, 0
      %p30 = por %p28, %p29
      %p31 = scmp.ne.s32.totalorder %s19, %s20
      %p32 = scmp.eq.s32.totalorder %s15, 2
      %p33 = por %p31, %p32
      %p35 = scmp.ne.s32.totalorder %s20, %s34
      %p36 = scmp.eq.s32.totalorder %s15, 0
      %p37 = por %p35, %p36
      %s39 = sadd.s32 %s38, 1
      %p42 = scmp.eq.s32.totalorder %s9, 2
      %p43 = scmp.ne.s32.totalorder %s38, %s40
      %p44 = scmp.eq.s32.totalorder %s9, 0
      %p45 = por %p43, %p44
      %p46 = scmp.ne.s32.totalorder %s38, %s40
      %p47 = scmp.eq.s32.totalorder %s14, 2
      %p48 = por %p46, %p47
      %p49 = scmp.ne.s32.totalorder %s40, %s41
      %p50 = scmp.eq.s32.totalorder %s14, 0
      %p51 = por %p49, %p50
      %p52 = scmp.ne.s32.totalorder %s40, %s41
      %p53 = scmp.eq.s32.totalorder %s15, 2
      %p54 = por %p52, %p53
      %p56 = scmp.ne.s32.totalorder %s41, %s55
      %p57 = scmp.eq.s32.totalorder %s15, 0
      %p58 = por %p56, %p57
      %s59 = ssub.s32 %s9, %s16
      %p60 = scmp.eq.s32.totalorder %s59, 0
      %s62 = sadd.s32 %s61, 1
      %s63 = scalar_select %p60, %s61, %s62
      %p66 = pneg %p60
      %p67 = scmp.eq.s32.totalorder %s9, 2
      %p68 = por %p66, %p67
      %p69 = scmp.ne.s32.totalorder %s61, %s64
      %p70 = scmp.eq.s32.totalorder %s9, 0
      %p71 = por %p69, %p70
      %p72 = scmp.ne.s32.totalorder %s61, %s64
      %p73 = scmp.eq.s32.totalorder %s14, 2
      %p74 = por %p72, %p73
      %p75 = scmp.ne.s32.totalorder %s64, %s65
      %p76 = scmp.eq.s32.totalorder %s14, 0
      %p77 = por %p75, %p76
      %p78 = scmp.ne.s32.totalorder %s64, %s65
      %p79 = scmp.eq.s32.totalorder %s15, 2
      %p80 = por %p78, %p79
      %p82 = scmp.ne.s32.totalorder %s65, %s81
      %p83 = scmp.eq.s32.totalorder %s15, 0
      %p84 = por %p82, %p83
      %s85 = ssub.s32 %s9, %s16
      %p86 = scmp.eq.s32.totalorder %s85, 0
      %s88 = sadd.s32 %s87, 1
      %s89 = scalar_select %p86, %s87, %s88
      %p92 = pneg %p86
      %p93 = scmp.eq.s32.totalorder %s9, 2
      %p94 = por %p92, %p93
      %p95 = scmp.ne.s32.totalorder %s87, %s90
      %p96 = scmp.eq.s32.totalorder %s9, 0
      %p97 = por %p95, %p96
      %p98 = scmp.ne.s32.totalorder %s87, %s90
      %p99 = scmp.eq.s32.totalorder %s14, 2
      %p100 = por %p98, %p99
      %p101 = scmp.ne.s32.totalorder %s90, %s91
      %p102 = scmp.eq.s32.totalorder %s14, 0
      %p103 = por %p101, %p102
      %p104 = scmp.ne.s32.totalorder %s90, %s91
      %p105 = scmp.eq.s32.totalorder %s15, 2
      %p106 = por %p104, %p105
      %p108 = scmp.ne.s32.totalorder %s91, %s107
      %p109 = scmp.eq.s32.totalorder %s15, 0
      %p110 = por %p108, %p109
      %p111 = scmp.le.s32.totalorder 1, %s9
      %p112 = scmp.lt.s32.totalorder %s9, 4
      %p113 = pnand %p111, %p112
      %p114 = pneg %p113
      // Predicated region
      $region9: #{actor_forward.6} parent=5 // pred_check
        _
      $region10: #{actor_forward.6} parent=5 // pred_check_branch
        %116 = sbr.rel (%p113) target = $region12
      $region11: #{actor_forward.6} parent=5 // pred_region
        %s117 = ssub.s32 %s9, 1
        // Predicated region
        $region13: #{actor_forward.6} parent=11 // pred_check
          %p118 = pneg %p30
        $region14: #{actor_forward.6} parent=11 // pred_check_branch
          %120 = sbr.rel (%p118) target = $region16
        $region15: #{actor_forward.6} parent=11 // pred_region
          _
        $region16: #{actor_forward.6} parent=11 // pred_fallthru
          _
        // Predicated region
        $region17: #{actor_forward.6} parent=11 // pred_check
          %p121 = pneg %p51
        $region18: #{actor_forward.6} parent=11 // pred_check_branch
          %123 = sbr.rel (%p121) target = $region20
        $region19: #{actor_forward.6} parent=11 // pred_region
          _
        $region20: #{actor_forward.6} parent=11 // pred_fallthru
          _
      $region12: #{actor_forward.6} parent=5 // pred_fallthru
        _
      %p124 = scmp.lt.s32.totalorder %s9, 3
      // Predicated region
      $region21: #{actor_forward.6} parent=5 // pred_check
        %p125 = pneg %p124
      $region22: #{actor_forward.6} parent=5 // pred_check_branch
        %127 = sbr.rel (%p125) target = $region24
      $region23: #{actor_forward.6} parent=5 // pred_region
        // Predicated region
        $region25: #{actor_forward.6} parent=23 // pred_check
          %p128 = pneg %p71
        $region26: #{actor_forward.6} parent=23 // pred_check_branch
          %130 = sbr.rel (%p128) target = $region28
        $region27: #{actor_forward.6} parent=23 // pred_region
          %s131 = sand.u32 %s61, 1
          %s132 = sand.u32 %s61, 1
          %s133 = smul.addr %s132, 288
          %s134 = scalar_lea.vmem [#allocation2], %s133
          %s135 = smul.u32 4, %s9
          %s136 = ssub.s32 9, %s135
          %p137 = scmp.lt.s32.totalorder %s136, 4
          %s138 = scalar_select %p137, %s136, 4
          %s139 = smul.u32 1152, %s138
          %p140 = scmp.ne.s32.totalorder 0, %s139
          %s141 = smul.addr %s135, 8
          %s142 = scalar_lea.vmem %s2, %s141
          %s143 = smul.u32 %s138, 8
          // Predicated region
          $region29: #{actor_forward.6} parent=27 // pred_check
            %p144 = pneg %p140
          $region30: #{actor_forward.6} parent=27 // pred_check_branch
            %146 = sbr.rel (%p144) target = $region32
          $region31: #{actor_forward.6} parent=27 // pred_region
            %p147 = scmp.lt.u32.totalorder %s143, 8
            %p148 = pneg %p147
            // Predicated region
            $region33: #{actor_forward.6} parent=31 // pred_check
              _
            $region34: #{actor_forward.6} parent=31 // pred_check_branch
              %150 = sbr.rel (%p147) target = $region36
            $region35: #{actor_forward.6} parent=31 // pred_region
              %s182 = sand.u32 %s143, 7
              %p183 = scmp.eq.s32.totalorder %s182, 0
              // Predicated region
              $region48: #{actor_forward.6} parent=35 // pred_check
                %p184 = pneg %p183
              $region49: #{actor_forward.6} parent=35 // pred_check_branch
                %186 = sbr.rel (%p184) target = $region51
              $region50: #{actor_forward.6} parent=35 // pred_region
                %s187 = sshrl.u32 %s143, 3
                %s188 = sshrl.u32 %s187, 3
                // While loop
                $region52: #{actor_forward.6} parent=50 // loop_pre_header
                  _
                $region53: #{actor_forward.6} parent=50 // loop_header
                  %s192 = sphi 0, %s194
                  %p193 = scmp.ge.s32.totalorder %s192, %s188
                  %s197 = sphi 0, %s346
                  %s198 = sphi %s142, %s349
                  %s199 = sphi %s134, %s350
                $region54: #{actor_forward.6} parent=50 // loop_header_branch
                  %196 = sbr.rel (%p193) target = $region58
                $region55: #{actor_forward.6} parent=50 // loop_body
                  %v200 = vld [vmem:[%s198] sm:$0xff]
                  %201 = vst [vmem:[%s199] sm:$0xff] %v200
                  %v202 = vld [vmem:[%s198 + $0x8] sm:$0xff]
                  %203 = vst [vmem:[%s199 + $0x8] sm:$0xff] %v202
                  %v204 = vld [vmem:[%s198 + $0x10] sm:$0xff]
                  %205 = vst [vmem:[%s199 + $0x10] sm:$0xff] %v204
                  %v206 = vld [vmem:[%s198 + $0x18] sm:$0xff]
                  %207 = vst [vmem:[%s199 + $0x18] sm:$0xff] %v206
                  %v208 = vld [vmem:[%s198 + $0x20] sm:$0xff]
                  %209 = vst [vmem:[%s199 + $0x20] sm:$0xff] %v208
                  %v210 = vld [vmem:[%s198 + $0x28] sm:$0xff]
                  %211 = vst [vmem:[%s199 + $0x28] sm:$0xff] %v210
                  %v212 = vld [vmem:[%s198 + $0x30] sm:$0xff]
                  %213 = vst [vmem:[%s199 + $0x30] sm:$0xff] %v212
                  %v214 = vld [vmem:[%s198 + $0x38] sm:$0xff]
                  %215 = vst [vmem:[%s199 + $0x38] sm:$0xff] %v214
                  %v216 = vld [vmem:[%s198 + $0x48] sm:$0xff]
                  %217 = vst [vmem:[%s199 + $0x20] sm:$0xff] %v216
                  %v218 = vld [vmem:[%s198 + $0x50] sm:$0xff]
                  %219 = vst [vmem:[%s199 + $0x28] sm:$0xff] %v218
                  %v220 = vld [vmem:[%s198 + $0x58] sm:$0xff]
                  %221 = vst [vmem:[%s199 + $0x30] sm:$0xff] %v220
                  %v222 = vld [vmem:[%s198 + $0x60] sm:$0xff]
                  %223 = vst [vmem:[%s199 + $0x38] sm:$0xff] %v222
                  %v224 = vld [vmem:[%s198 + $0x68] sm:$0xff]
                  %225 = vst [vmem:[%s199 + $0x40] sm:$0xff] %v224
                  %v226 = vld [vmem:[%s198 + $0x70] sm:$0xff]
                  %227 = vst [vmem:[%s199 + $0x48] sm:$0xff] %v226
                  %v228 = vld [vmem:[%s198 + $0x78] sm:$0xff]
                  %229 = vst [vmem:[%s199 + $0x50] sm:$0xff] %v228
                  %v230 = vld [vmem:[%s198 + $0x80] sm:$0xff]
                  %231 = vst [vmem:[%s199 + $0x58] sm:$0xff] %v230
                  %v232 = vld [vmem:[%s198 + $0x90] sm:$0xff]
                  %233 = vst [vmem:[%s199 + $0x40] sm:$0xff] %v232
                  %v234 = vld [vmem:[%s198 + $0x98] sm:$0xff]
                  %235 = vst [vmem:[%s199 + $0x48] sm:$0xff] %v234
                  %v236 = vld [vmem:[%s198 + $0xa0] sm:$0xff]
                  %237 = vst [vmem:[%s199 + $0x50] sm:$0xff] %v236
                  %v238 = vld [vmem:[%s198 + $0xa8] sm:$0xff]
                  %239 = vst [vmem:[%s199 + $0x58] sm:$0xff] %v238
                  %v240 = vld [vmem:[%s198 + $0xb0] sm:$0xff]
                  %241 = vst [vmem:[%s199 + $0x60] sm:$0xff] %v240
                  %v242 = vld [vmem:[%s198 + $0xb8] sm:$0xff]
                  %243 = vst [vmem:[%s199 + $0x68] sm:$0xff] %v242
                  %v244 = vld [vmem:[%s198 + $0xc0] sm:$0xff]
                  %245 = vst [vmem:[%s199 + $0x70] sm:$0xff] %v244
                  %v246 = vld [vmem:[%s198 + $0xc8] sm:$0xff]
                  %247 = vst [vmem:[%s199 + $0x78] sm:$0xff] %v246
                  %v248 = vld [vmem:[%s198 + $0xd8] sm:$0xff]
                  %249 = vst [vmem:[%s199 + $0x60] sm:$0xff] %v248
                  %v250 = vld [vmem:[%s198 + $0xe0] sm:$0xff]
                  %251 = vst [vmem:[%s199 + $0x68] sm:$0xff] %v250
                  %v252 = vld [vmem:[%s198 + $0xe8] sm:$0xff]
                  %253 = vst [vmem:[%s199 + $0x70] sm:$0xff] %v252
                  %v254 = vld [vmem:[%s198 + $0xf0] sm:$0xff]
                  %255 = vst [vmem:[%s199 + $0x78] sm:$0xff] %v254
                  %v256 = vld [vmem:[%s198 + $0xf8] sm:$0xff]
                  %257 = vst [vmem:[%s199 + $0x80] sm:$0xff] %v256
                  %v258 = vld [vmem:[%s198 + $0x100] sm:$0xff]
                  %259 = vst [vmem:[%s199 + $0x88] sm:$0xff] %v258
                  %v260 = vld [vmem:[%s198 + $0x108] sm:$0xff]
                  %261 = vst [vmem:[%s199 + $0x90] sm:$0xff] %v260
                  %v262 = vld [vmem:[%s198 + $0x110] sm:$0xff]
                  %263 = vst [vmem:[%s199 + $0x98] sm:$0xff] %v262
                  %v264 = vld [vmem:[%s198 + $0x120] sm:$0xff]
                  %265 = vst [vmem:[%s199 + $0x80] sm:$0xff] %v264
                  %v266 = vld [vmem:[%s198 + $0x128] sm:$0xff]
                  %267 = vst [vmem:[%s199 + $0x88] sm:$0xff] %v266
                  %v268 = vld [vmem:[%s198 + $0x130] sm:$0xff]
                  %269 = vst [vmem:[%s199 + $0x90] sm:$0xff] %v268
                  %v270 = vld [vmem:[%s198 + $0x138] sm:$0xff]
                  %271 = vst [vmem:[%s199 + $0x98] sm:$0xff] %v270
                  %v272 = vld [vmem:[%s198 + $0x140] sm:$0xff]
                  %273 = vst [vmem:[%s199 + $0xa0] sm:$0xff] %v272
                  %v274 = vld [vmem:[%s198 + $0x148] sm:$0xff]
                  %275 = vst [vmem:[%s199 + $0xa8] sm:$0xff] %v274
                  %v276 = vld [vmem:[%s198 + $0x150] sm:$0xff]
                  %277 = vst [vmem:[%s199 + $0xb0] sm:$0xff] %v276
                  %v278 = vld [vmem:[%s198 + $0x158] sm:$0xff]
                  %279 = vst [vmem:[%s199 + $0xb8] sm:$0xff] %v278
                  %v280 = vld [vmem:[%s198 + $0x168] sm:$0xff]
                  %281 = vst [vmem:[%s199 + $0xa0] sm:$0xff] %v280
                  %v282 = vld [vmem:[%s198 + $0x170] sm:$0xff]
                  %283 = vst [vmem:[%s199 + $0xa8] sm:$0xff] %v282
                  %v284 = vld [vmem:[%s198 + $0x178] sm:$0xff]
                  %285 = vst [vmem:[%s199 + $0xb0] sm:$0xff] %v284
                  %v286 = vld [vmem:[%s198 + $0x180] sm:$0xff]
                  %287 = vst [vmem:[%s199 + $0xb8] sm:$0xff] %v286
                  %v288 = vld [vmem:[%s198 + $0x188] sm:$0xff]
                  %289 = vst [vmem:[%s199 + $0xc0] sm:$0xff] %v288
                  %v290 = vld [vmem:[%s198 + $0x190] sm:$0xff]
                  %291 = vst [vmem:[%s199 + $0xc8] sm:$0xff] %v290
                  %v292 = vld [vmem:[%s198 + $0x198] sm:$0xff]
                  %293 = vst [vmem:[%s199 + $0xd0] sm:$0xff] %v292
                  %v294 = vld [vmem:[%s198 + $0x1a0] sm:$0xff]
                  %295 = vst [vmem:[%s199 + $0xd8] sm:$0xff] %v294
                  %v296 = vld [vmem:[%s198 + $0x1b0] sm:$0xff]
                  %297 = vst [vmem:[%s199 + $0xc0] sm:$0xff] %v296
                  %v298 = vld [vmem:[%s198 + $0x1b8] sm:$0xff]
                  %299 = vst [vmem:[%s199 + $0xc8] sm:$0xff] %v298
                  %v300 = vld [vmem:[%s198 + $0x1c0] sm:$0xff]
                  %301 = vst [vmem:[%s199 + $0xd0] sm:$0xff] %v300
                  %v302 = vld [vmem:[%s198 + $0x1c8] sm:$0xff]
                  %303 = vst [vmem:[%s199 + $0xd8] sm:$0xff] %v302
                  %v304 = vld [vmem:[%s198 + $0x1d0] sm:$0xff]
                  %305 = vst [vmem:[%s199 + $0xe0] sm:$0xff] %v304
                  %v306 = vld [vmem:[%s198 + $0x1d8] sm:$0xff]
                  %307 = vst [vmem:[%s199 + $0xe8] sm:$0xff] %v306
                  %v308 = vld [vmem:[%s198 + $0x1e0] sm:$0xff]
                  %309 = vst [vmem:[%s199 + $0xf0] sm:$0xff] %v308
                  %v310 = vld [vmem:[%s198 + $0x1e8] sm:$0xff]
                  %311 = vst [vmem:[%s199 + $0xf8] sm:$0xff] %v310
                  %v312 = vld [vmem:[%s198 + $0x1f8] sm:$0xff]
                  %313 = vst [vmem:[%s199 + $0xe0] sm:$0xff] %v312
                  %v314 = vld [vmem:[%s198 + $0x200] sm:$0xff]
                  %315 = vst [vmem:[%s199 + $0xe8] sm:$0xff] %v314
                  %v316 = vld [vmem:[%s198 + $0x208] sm:$0xff]
                  %317 = vst [vmem:[%s199 + $0xf0] sm:$0xff] %v316
                  %v318 = vld [vmem:[%s198 + $0x210] sm:$0xff]
                  %319 = vst [vmem:[%s199 + $0xf8] sm:$0xff] %v318
                  %v320 = vld [vmem:[%s198 + $0x218] sm:$0xff]
                  %321 = vst [vmem:[%s199 + $0x100] sm:$0xff] %v320
                  %v322 = vld [vmem:[%s198 + $0x220] sm:$0xff]
                  %323 = vst [vmem:[%s199 + $0x108] sm:$0xff] %v322
                  %v324 = vld [vmem:[%s198 + $0x228] sm:$0xff]
                  %325 = vst [vmem:[%s199 + $0x110] sm:$0xff] %v324
                  %v326 = vld [vmem:[%s198 + $0x230] sm:$0xff]
                  %327 = vst [vmem:[%s199 + $0x118] sm:$0xff] %v326
                  %v328 = vld [vmem:[%s198 + $0x240] sm:$0xff]
                  %329 = vst [vmem:[%s199 + $0x100] sm:$0xff] %v328
                  %v330 = vld [vmem:[%s198 + $0x248] sm:$0xff]
                  %331 = vst [vmem:[%s199 + $0x108] sm:$0xff] %v330
                  %v332 = vld [vmem:[%s198 + $0x250] sm:$0xff]
                  %333 = vst [vmem:[%s199 + $0x110] sm:$0xff] %v332
                  %v334 = vld [vmem:[%s198 + $0x258] sm:$0xff]
                  %335 = vst [vmem:[%s199 + $0x118] sm:$0xff] %v334
                  %v336 = vld [vmem:[%s198 + $0x260] sm:$0xff]
                  %337 = vst [vmem:[%s199 + $0x120] sm:$0xff] %v336
                  %v338 = vld [vmem:[%s198 + $0x268] sm:$0xff]
                  %339 = vst [vmem:[%s199 + $0x128] sm:$0xff] %v338
                  %v340 = vld [vmem:[%s198 + $0x270] sm:$0xff]
                  %341 = vst [vmem:[%s199 + $0x130] sm:$0xff] %v340
                  %v342 = vld [vmem:[%s198 + $0x278] sm:$0xff]
                  %343 = vst [vmem:[%s199 + $0x138] sm:$0xff] %v342
                  %s344 = sadd.s32 1, %s197
                  %p345 = scmp.ge.s32.totalorder %s344, %s188
                  %s346 = scalar_select %p345, 0, %s344
                  %s347 = smul.u32 %s346, 64
                  %s348 = smul.u32 %s346, 64
                  %s349 = scalar_lea.vmem %s142, %s347
                  %s350 = scalar_lea.vmem %s134, %s348 [#allocation2]
                $region56: #{actor_forward.6} parent=50 // loop_footer
                  %s194 = sadd.s32 %s192, 1
                $region57: #{actor_forward.6} parent=50 // loop_footer_branch
                  %191 = sbr.rel target = $region53
                $region58: #{actor_forward.6} parent=50 // loop_exit
                  _
                %s351 = sshrl.u32 %s187, 3
                %s352 = sand.u32 %s187, 7
                %s353 = smul.u32 %s351, 8
                %s354 = smul.u32 128, %s353
                %s355 = sshra.s32 %s354, 4
                %s356 = scalar_lea.vmem %s142, %s355
                %s357 = smul.u32 128, %s353
                %s358 = sshra.s32 %s357, 4
                %s359 = scalar_lea.vmem %s134, %s358 [#allocation2]
                // While loop
                $region59: #{actor_forward.6} parent=50 // loop_pre_header
                  _
                $region60: #{actor_forward.6} parent=50 // loop_header
                  %s363 = sphi 0, %s365
                  %p364 = scmp.ge.s32.totalorder %s363, %s352
                  %s368 = sphi 0, %s391
                  %s369 = sphi %s356, %s394
                  %s370 = sphi %s359, %s395
                $region61: #{actor_forward.6} parent=50 // loop_header_branch
                  %367 = sbr.rel (%p364) target = $region65
                $region62: #{actor_forward.6} parent=50 // loop_body
                  %v371 = vld [vmem:[%s369] sm:$0xff]
                  %372 = vst [vmem:[%s370] sm:$0xff] %v371
                  %v373 = vld [vmem:[%s369 + $0x48] sm:$0xff]
                  %374 = vst [vmem:[%s370 + $0x20] sm:$0xff] %v373
                  %v375 = vld [vmem:[%s369 + $0x90] sm:$0xff]
                  %376 = vst [vmem:[%s370 + $0x40] sm:$0xff] %v375
                  %v377 = vld [vmem:[%s369 + $0xd8] sm:$0xff]
                  %378 = vst [vmem:[%s370 + $0x60] sm:$0xff] %v377
                  %v379 = vld [vmem:[%s369 + $0x120] sm:$0xff]
                  %380 = vst [vmem:[%s370 + $0x80] sm:$0xff] %v379
                  %v381 = vld [vmem:[%s369 + $0x168] sm:$0xff]
                  %382 = vst [vmem:[%s370 + $0xa0] sm:$0xff] %v381
                  %v383 = vld [vmem:[%s369 + $0x1b0] sm:$0xff]
                  %384 = vst [vmem:[%s370 + $0xc0] sm:$0xff] %v383
                  %v385 = vld [vmem:[%s369 + $0x1f8] sm:$0xff]
                  %386 = vst [vmem:[%s370 + $0xe0] sm:$0xff] %v385
                  %v387 = vld [vmem:[%s369 + $0x240] sm:$0xff]
                  %388 = vst [vmem:[%s370 + $0x100] sm:$0xff] %v387
                  %s389 = sadd.s32 1, %s368
                  %p390 = scmp.ge.s32.totalorder %s389, %s352
                  %s391 = scalar_select %p390, 0, %s389
                  %s392 = smul.u32 %s391, 8
                  %s393 = smul.u32 %s391, 8
                  %s394 = scalar_lea.vmem %s356, %s392
                  %s395 = scalar_lea.vmem %s359, %s393 [#allocation2]
                $region63: #{actor_forward.6} parent=50 // loop_footer
                  %s365 = sadd.s32 %s363, 1
                $region64: #{actor_forward.6} parent=50 // loop_footer_branch
                  %362 = sbr.rel target = $region60
                $region65: #{actor_forward.6} parent=50 // loop_exit
                  _
              $region51: #{actor_forward.6} parent=35 // pred_fallthru
                _
              %p396 = pneg %p183
              // Predicated region
              $region66: #{actor_forward.6} parent=35 // pred_check
                _
              $region67: #{actor_forward.6} parent=35 // pred_check_branch
                %398 = sbr.rel (%p183) target = $region69
              $region68: #{actor_forward.6} parent=35 // pred_region
                %s399 = sand.u32 %s143, 7
                %s400 = ssub.s32 %s143, %s399
                %s401 = scalar_lea.vmem %s142, %s400
                %s402 = ssub.s32 %s143, %s399
                %s403 = scalar_lea.vmem %s134, %s402 [#allocation2]
                %s404 = sshrl.u32 %s143, 3
                %s405 = sshrl.u32 %s404, 3
                // While loop
                $region70: #{actor_forward.6} parent=68 // loop_pre_header
                  _
                $region71: #{actor_forward.6} parent=68 // loop_header
                  %s409 = sphi 0, %s411
                  %p410 = scmp.ge.s32.totalorder %s409, %s405
                  %s414 = sphi 0, %s563
                  %s415 = sphi %s142, %s566
                  %s416 = sphi %s134, %s567
                $region72: #{actor_forward.6} parent=68 // loop_header_branch
                  %413 = sbr.rel (%p410) target = $region76
                $region73: #{actor_forward.6} parent=68 // loop_body
                  %v417 = vld [vmem:[%s415] sm:$0xff]
                  %418 = vst [vmem:[%s416] sm:$0xff] %v417
                  %v419 = vld [vmem:[%s415 + $0x8] sm:$0xff]
                  %420 = vst [vmem:[%s416 + $0x8] sm:$0xff] %v419
                  %v421 = vld [vmem:[%s415 + $0x10] sm:$0xff]
                  %422 = vst [vmem:[%s416 + $0x10] sm:$0xff] %v421
                  %v423 = vld [vmem:[%s415 + $0x18] sm:$0xff]
                  %424 = vst [vmem:[%s416 + $0x18] sm:$0xff] %v423
                  %v425 = vld [vmem:[%s415 + $0x20] sm:$0xff]
                  %426 = vst [vmem:[%s416 + $0x20] sm:$0xff] %v425
                  %v427 = vld [vmem:[%s415 + $0x28] sm:$0xff]
                  %428 = vst [vmem:[%s416 + $0x28] sm:$0xff] %v427
                  %v429 = vld [vmem:[%s415 + $0x30] sm:$0xff]
                  %430 = vst [vmem:[%s416 + $0x30] sm:$0xff] %v429
                  %v431 = vld [vmem:[%s415 + $0x38] sm:$0xff]
                  %432 = vst [vmem:[%s416 + $0x38] sm:$0xff] %v431
                  %v433 = vld [vmem:[%s415 + $0x48] sm:$0xff]
                  %434 = vst [vmem:[%s416 + $0x20] sm:$0xff] %v433
                  %v435 = vld [vmem:[%s415 + $0x50] sm:$0xff]
                  %436 = vst [vmem:[%s416 + $0x28] sm:$0xff] %v435
                  %v437 = vld [vmem:[%s415 + $0x58] sm:$0xff]
                  %438 = vst [vmem:[%s416 + $0x30] sm:$0xff] %v437
                  %v439 = vld [vmem:[%s415 + $0x60] sm:$0xff]
                  %440 = vst [vmem:[%s416 + $0x38] sm:$0xff] %v439
                  %v441 = vld [vmem:[%s415 + $0x68] sm:$0xff]
                  %442 = vst [vmem:[%s416 + $0x40] sm:$0xff] %v441
                  %v443 = vld [vmem:[%s415 + $0x70] sm:$0xff]
                  %444 = vst [vmem:[%s416 + $0x48] sm:$0xff] %v443
                  %v445 = vld [vmem:[%s415 + $0x78] sm:$0xff]
                  %446 = vst [vmem:[%s416 + $0x50] sm:$0xff] %v445
                  %v447 = vld [vmem:[%s415 + $0x80] sm:$0xff]
                  %448 = vst [vmem:[%s416 + $0x58] sm:$0xff] %v447
                  %v449 = vld [vmem:[%s415 + $0x90] sm:$0xff]
                  %450 = vst [vmem:[%s416 + $0x40] sm:$0xff] %v449
                  %v451 = vld [vmem:[%s415 + $0x98] sm:$0xff]
                  %452 = vst [vmem:[%s416 + $0x48] sm:$0xff] %v451
                  %v453 = vld [vmem:[%s415 + $0xa0] sm:$0xff]
                  %454 = vst [vmem:[%s416 + $0x50] sm:$0xff] %v453
                  %v455 = vld [vmem:[%s415 + $0xa8] sm:$0xff]
                  %456 = vst [vmem:[%s416 + $0x58] sm:$0xff] %v455
                  %v457 = vld [vmem:[%s415 + $0xb0] sm:$0xff]
                  %458 = vst [vmem:[%s416 + $0x60] sm:$0xff] %v457
                  %v459 = vld [vmem:[%s415 + $0xb8] sm:$0xff]
                  %460 = vst [vmem:[%s416 + $0x68] sm:$0xff] %v459
                  %v461 = vld [vmem:[%s415 + $0xc0] sm:$0xff]
                  %462 = vst [vmem:[%s416 + $0x70] sm:$0xff] %v461
                  %v463 = vld [vmem:[%s415 + $0xc8] sm:$0xff]
                  %464 = vst [vmem:[%s416 + $0x78] sm:$0xff] %v463
                  %v465 = vld [vmem:[%s415 + $0xd8] sm:$0xff]
                  %466 = vst [vmem:[%s416 + $0x60] sm:$0xff] %v465
                  %v467 = vld [vmem:[%s415 + $0xe0] sm:$0xff]
                  %468 = vst [vmem:[%s416 + $0x68] sm:$0xff] %v467
                  %v469 = vld [vmem:[%s415 + $0xe8] sm:$0xff]
                  %470 = vst [vmem:[%s416 + $0x70] sm:$0xff] %v469
                  %v471 = vld [vmem:[%s415 + $0xf0] sm:$0xff]
                  %472 = vst [vmem:[%s416 + $0x78] sm:$0xff] %v471
                  %v473 = vld [vmem:[%s415 + $0xf8] sm:$0xff]
                  %474 = vst [vmem:[%s416 + $0x80] sm:$0xff] %v473
                  %v475 = vld [vmem:[%s415 + $0x100] sm:$0xff]
                  %476 = vst [vmem:[%s416 + $0x88] sm:$0xff] %v475
                  %v477 = vld [vmem:[%s415 + $0x108] sm:$0xff]
                  %478 = vst [vmem:[%s416 + $0x90] sm:$0xff] %v477
                  %v479 = vld [vmem:[%s415 + $0x110] sm:$0xff]
                  %480 = vst [vmem:[%s416 + $0x98] sm:$0xff] %v479
                  %v481 = vld [vmem:[%s415 + $0x120] sm:$0xff]
                  %482 = vst [vmem:[%s416 + $0x80] sm:$0xff] %v481
                  %v483 = vld [vmem:[%s415 + $0x128] sm:$0xff]
                  %484 = vst [vmem:[%s416 + $0x88] sm:$0xff] %v483
                  %v485 = vld [vmem:[%s415 + $0x130] sm:$0xff]
                  %486 = vst [vmem:[%s416 + $0x90] sm:$0xff] %v485
                  %v487 = vld [vmem:[%s415 + $0x138] sm:$0xff]
                  %488 = vst [vmem:[%s416 + $0x98] sm:$0xff] %v487
                  %v489 = vld [vmem:[%s415 + $0x140] sm:$0xff]
                  %490 = vst [vmem:[%s416 + $0xa0] sm:$0xff] %v489
                  %v491 = vld [vmem:[%s415 + $0x148] sm:$0xff]
                  %492 = vst [vmem:[%s416 + $0xa8] sm:$0xff] %v491
                  %v493 = vld [vmem:[%s415 + $0x150] sm:$0xff]
                  %494 = vst [vmem:[%s416 + $0xb0] sm:$0xff] %v493
                  %v495 = vld [vmem:[%s415 + $0x158] sm:$0xff]
                  %496 = vst [vmem:[%s416 + $0xb8] sm:$0xff] %v495
                  %v497 = vld [vmem:[%s415 + $0x168] sm:$0xff]
                  %498 = vst [vmem:[%s416 + $0xa0] sm:$0xff] %v497
                  %v499 = vld [vmem:[%s415 + $0x170] sm:$0xff]
                  %500 = vst [vmem:[%s416 + $0xa8] sm:$0xff] %v499
                  %v501 = vld [vmem:[%s415 + $0x178] sm:$0xff]
                  %502 = vst [vmem:[%s416 + $0xb0] sm:$0xff] %v501
                  %v503 = vld [vmem:[%s415 + $0x180] sm:$0xff]
                  %504 = vst [vmem:[%s416 + $0xb8] sm:$0xff] %v503
                  %v505 = vld [vmem:[%s415 + $0x188] sm:$0xff]
                  %506 = vst [vmem:[%s416 + $0xc0] sm:$0xff] %v505
                  %v507 = vld [vmem:[%s415 + $0x190] sm:$0xff]
                  %508 = vst [vmem:[%s416 + $0xc8] sm:$0xff] %v507
                  %v509 = vld [vmem:[%s415 + $0x198] sm:$0xff]
                  %510 = vst [vmem:[%s416 + $0xd0] sm:$0xff] %v509
                  %v511 = vld [vmem:[%s415 + $0x1a0] sm:$0xff]
                  %512 = vst [vmem:[%s416 + $0xd8] sm:$0xff] %v511
                  %v513 = vld [vmem:[%s415 + $0x1b0] sm:$0xff]
                  %514 = vst [vmem:[%s416 + $0xc0] sm:$0xff] %v513
                  %v515 = vld [vmem:[%s415 + $0x1b8] sm:$0xff]
                  %516 = vst [vmem:[%s416 + $0xc8] sm:$0xff] %v515
                  %v517 = vld [vmem:[%s415 + $0x1c0] sm:$0xff]
                  %518 = vst [vmem:[%s416 + $0xd0] sm:$0xff] %v517
                  %v519 = vld [vmem:[%s415 + $0x1c8] sm:$0xff]
                  %520 = vst [vmem:[%s416 + $0xd8] sm:$0xff] %v519
                  %v521 = vld [vmem:[%s415 + $0x1d0] sm:$0xff]
                  %522 = vst [vmem:[%s416 + $0xe0] sm:$0xff] %v521
                  %v523 = vld [vmem:[%s415 + $0x1d8] sm:$0xff]
                  %524 = vst [vmem:[%s416 + $0xe8] sm:$0xff] %v523
                  %v525 = vld [vmem:[%s415 + $0x1e0] sm:$0xff]
                  %526 = vst [vmem:[%s416 + $0xf0] sm:$0xff] %v525
                  %v527 = vld [vmem:[%s415 + $0x1e8] sm:$0xff]
                  %528 = vst [vmem:[%s416 + $0xf8] sm:$0xff] %v527
                  %v529 = vld [vmem:[%s415 + $0x1f8] sm:$0xff]
                  %530 = vst [vmem:[%s416 + $0xe0] sm:$0xff] %v529
                  %v531 = vld [vmem:[%s415 + $0x200] sm:$0xff]
                  %532 = vst [vmem:[%s416 + $0xe8] sm:$0xff] %v531
                  %v533 = vld [vmem:[%s415 + $0x208] sm:$0xff]
                  %534 = vst [vmem:[%s416 + $0xf0] sm:$0xff] %v533
                  %v535 = vld [vmem:[%s415 + $0x210] sm:$0xff]
                  %536 = vst [vmem:[%s416 + $0xf8] sm:$0xff] %v535
                  %v537 = vld [vmem:[%s415 + $0x218] sm:$0xff]
                  %538 = vst [vmem:[%s416 + $0x100] sm:$0xff] %v537
                  %v539 = vld [vmem:[%s415 + $0x220] sm:$0xff]
                  %540 = vst [vmem:[%s416 + $0x108] sm:$0xff] %v539
                  %v541 = vld [vmem:[%s415 + $0x228] sm:$0xff]
                  %542 = vst [vmem:[%s416 + $0x110] sm:$0xff] %v541
                  %v543 = vld [vmem:[%s415 + $0x230] sm:$0xff]
                  %544 = vst [vmem:[%s416 + $0x118] sm:$0xff] %v543
                  %v545 = vld [vmem:[%s415 + $0x240] sm:$0xff]
                  %546 = vst [vmem:[%s416 + $0x100] sm:$0xff] %v545
                  %v547 = vld [vmem:[%s415 + $0x248] sm:$0xff]
                  %548 = vst [vmem:[%s416 + $0x108] sm:$0xff] %v547
                  %v549 = vld [vmem:[%s415 + $0x250] sm:$0xff]
                  %550 = vst [vmem:[%s416 + $0x110] sm:$0xff] %v549
                  %v551 = vld [vmem:[%s415 + $0x258] sm:$0xff]
                  %552 = vst [vmem:[%s416 + $0x118] sm:$0xff] %v551
                  %v553 = vld [vmem:[%s415 + $0x260] sm:$0xff]
                  %554 = vst [vmem:[%s416 + $0x120] sm:$0xff] %v553
                  %v555 = vld [vmem:[%s415 + $0x268] sm:$0xff]
                  %556 = vst [vmem:[%s416 + $0x128] sm:$0xff] %v555
                  %v557 = vld [vmem:[%s415 + $0x270] sm:$0xff]
                  %558 = vst [vmem:[%s416 + $0x130] sm:$0xff] %v557
                  %v559 = vld [vmem:[%s415 + $0x278] sm:$0xff]
                  %560 = vst [vmem:[%s416 + $0x138] sm:$0xff] %v559
                  %s561 = sadd.s32 1, %s414
                  %p562 = scmp.ge.s32.totalorder %s561, %s405
                  %s563 = scalar_select %p562, 0, %s561
                  %s564 = smul.u32 %s563, 64
                  %s565 = smul.u32 %s563, 64
                  %s566 = scalar_lea.vmem %s142, %s564
                  %s567 = scalar_lea.vmem %s134, %s565 [#allocation2]
                $region74: #{actor_forward.6} parent=68 // loop_footer
                  %s411 = sadd.s32 %s409, 1
                $region75: #{actor_forward.6} parent=68 // loop_footer_branch
                  %408 = sbr.rel target = $region71
                $region76: #{actor_forward.6} parent=68 // loop_exit
                  _
                %s568 = sshrl.u32 %s404, 3
                %s569 = sand.u32 %s404, 7
                %s570 = smul.u32 %s568, 8
                %s571 = smul.u32 128, %s570
                %s572 = sshra.s32 %s571, 4
                %s573 = scalar_lea.vmem %s142, %s572
                %s574 = smul.u32 128, %s570
                %s575 = sshra.s32 %s574, 4
                %s576 = scalar_lea.vmem %s134, %s575 [#allocation2]
                // While loop
                $region77: #{actor_forward.6} parent=68 // loop_pre_header
                  _
                $region78: #{actor_forward.6} parent=68 // loop_header
                  %s580 = sphi 0, %s582
                  %p581 = scmp.ge.s32.totalorder %s580, %s569
                  %s585 = sphi 0, %s608
                  %s586 = sphi %s573, %s611
                  %s587 = sphi %s576, %s612
                $region79: #{actor_forward.6} parent=68 // loop_header_branch
                  %584 = sbr.rel (%p581) target = $region83
                $region80: #{actor_forward.6} parent=68 // loop_body
                  %v588 = vld [vmem:[%s586] sm:$0xff]
                  %589 = vst [vmem:[%s587] sm:$0xff] %v588
                  %v590 = vld [vmem:[%s586 + $0x48] sm:$0xff]
                  %591 = vst [vmem:[%s587 + $0x20] sm:$0xff] %v590
                  %v592 = vld [vmem:[%s586 + $0x90] sm:$0xff]
                  %593 = vst [vmem:[%s587 + $0x40] sm:$0xff] %v592
                  %v594 = vld [vmem:[%s586 + $0xd8] sm:$0xff]
                  %595 = vst [vmem:[%s587 + $0x60] sm:$0xff] %v594
                  %v596 = vld [vmem:[%s586 + $0x120] sm:$0xff]
                  %597 = vst [vmem:[%s587 + $0x80] sm:$0xff] %v596
                  %v598 = vld [vmem:[%s586 + $0x168] sm:$0xff]
                  %599 = vst [vmem:[%s587 + $0xa0] sm:$0xff] %v598
                  %v600 = vld [vmem:[%s586 + $0x1b0] sm:$0xff]
                  %601 = vst [vmem:[%s587 + $0xc0] sm:$0xff] %v600
                  %v602 = vld [vmem:[%s586 + $0x1f8] sm:$0xff]
                  %603 = vst [vmem:[%s587 + $0xe0] sm:$0xff] %v602
                  %v604 = vld [vmem:[%s586 + $0x240] sm:$0xff]
                  %605 = vst [vmem:[%s587 + $0x100] sm:$0xff] %v604
                  %s606 = sadd.s32 1, %s585
                  %p607 = scmp.ge.s32.totalorder %s606, %s569
                  %s608 = scalar_select %p607, 0, %s606
                  %s609 = smul.u32 %s608, 8
                  %s610 = smul.u32 %s608, 8
                  %s611 = scalar_lea.vmem %s573, %s609
                  %s612 = scalar_lea.vmem %s576, %s610 [#allocation2]
                $region81: #{actor_forward.6} parent=68 // loop_footer
                  %s582 = sadd.s32 %s580, 1
                $region82: #{actor_forward.6} parent=68 // loop_footer_branch
                  %579 = sbr.rel target = $region78
                $region83: #{actor_forward.6} parent=68 // loop_exit
                  _
                %s613 = sshll.u32 1, %s399
                %s614 = ssub.s32 %s613, 1
                loop: start=0, step=1, limit=1
                $region84: #{actor_forward.6} parent=68 // loop_pre_header
                  _
                $region85: #{actor_forward.6} parent=68 // loop_header
                  %s616 = sphi 0, %s620
                  %p617 = scmp.ge.s32.totalorder %s616, 1
                  %s621 = sphi %s401, %s401
                  %s622 = sphi %s403, %s403
                $region86: #{actor_forward.6} parent=68 // loop_header_branch
                  %619 = sbr.rel (%p617) target = $region90
                $region87: #{actor_forward.6} parent=68 // loop_body
                  %v623 = vld [vmem:[%s621] sm:%s614]
                  %624 = vst [vmem:[%s622] sm:%s614] %v623
                  %v625 = vld [vmem:[%s621 + $0x48] sm:%s614]
                  %626 = vst [vmem:[%s622 + $0x20] sm:%s614] %v625
                  %v627 = vld [vmem:[%s621 + $0x90] sm:%s614]
                  %628 = vst [vmem:[%s622 + $0x40] sm:%s614] %v627
                  %v629 = vld [vmem:[%s621 + $0xd8] sm:%s614]
                  %630 = vst [vmem:[%s622 + $0x60] sm:%s614] %v629
                  %v631 = vld [vmem:[%s621 + $0x120] sm:%s614]
                  %632 = vst [vmem:[%s622 + $0x80] sm:%s614] %v631
                  %v633 = vld [vmem:[%s621 + $0x168] sm:%s614]
                  %634 = vst [vmem:[%s622 + $0xa0] sm:%s614] %v633
                  %v635 = vld [vmem:[%s621 + $0x1b0] sm:%s614]
                  %636 = vst [vmem:[%s622 + $0xc0] sm:%s614] %v635
                  %v637 = vld [vmem:[%s621 + $0x1f8] sm:%s614]
                  %638 = vst [vmem:[%s622 + $0xe0] sm:%s614] %v637
                  %v639 = vld [vmem:[%s621 + $0x240] sm:%s614]
                  %640 = vst [vmem:[%s622 + $0x100] sm:%s614] %v639
                $region88: #{actor_forward.6} parent=68 // loop_footer
                  %s620 = sadd.s32 1, %s616
                $region89: #{actor_forward.6} parent=68 // loop_footer_branch
                  %615 = sbr.rel target = $region85
                $region90: #{actor_forward.6} parent=68 // loop_exit
                  _
              $region69: #{actor_forward.6} parent=35 // pred_fallthru
                _
            $region36: #{actor_forward.6} parent=31 // pred_fallthru
              _
            // Predicated region
            $region37: #{actor_forward.6} parent=31 // pred_check
              %p151 = pneg %p147
            $region38: #{actor_forward.6} parent=31 // pred_check_branch
              %153 = sbr.rel (%p151) target = $region40
            $region39: #{actor_forward.6} parent=31 // pred_region
              %s154 = sshll.u32 1, %s143
              %s155 = ssub.s32 %s154, 1
              loop: start=0, step=1, limit=1
              $region41: #{actor_forward.6} parent=39 // loop_pre_header
                _
              $region42: #{actor_forward.6} parent=39 // loop_header
                %s157 = sphi 0, %s161
                %p158 = scmp.ge.s32.totalorder %s157, 1
                %s162 = sphi %s142, %s142
                %s163 = sphi %s134, %s134
              $region43: #{actor_forward.6} parent=39 // loop_header_branch
                %160 = sbr.rel (%p158) target = $region47
              $region44: #{actor_forward.6} parent=39 // loop_body
                %v164 = vld [vmem:[%s162] sm:%s155]
                %165 = vst [vmem:[%s163] sm:%s155] %v164
                %v166 = vld [vmem:[%s162 + $0x48] sm:%s155]
                %167 = vst [vmem:[%s163 + $0x20] sm:%s155] %v166
                %v168 = vld [vmem:[%s162 + $0x90] sm:%s155]
                %169 = vst [vmem:[%s163 + $0x40] sm:%s155] %v168
                %v170 = vld [vmem:[%s162 + $0xd8] sm:%s155]
                %171 = vst [vmem:[%s163 + $0x60] sm:%s155] %v170
                %v172 = vld [vmem:[%s162 + $0x120] sm:%s155]
                %173 = vst [vmem:[%s163 + $0x80] sm:%s155] %v172
                %v174 = vld [vmem:[%s162 + $0x168] sm:%s155]
                %175 = vst [vmem:[%s163 + $0xa0] sm:%s155] %v174
                %v176 = vld [vmem:[%s162 + $0x1b0] sm:%s155]
                %177 = vst [vmem:[%s163 + $0xc0] sm:%s155] %v176
                %v178 = vld [vmem:[%s162 + $0x1f8] sm:%s155]
                %179 = vst [vmem:[%s163 + $0xe0] sm:%s155] %v178
                %v180 = vld [vmem:[%s162 + $0x240] sm:%s155]
                %181 = vst [vmem:[%s163 + $0x100] sm:%s155] %v180
              $region45: #{actor_forward.6} parent=39 // loop_footer
                %s161 = sadd.s32 1, %s157
              $region46: #{actor_forward.6} parent=39 // loop_footer_branch
                %156 = sbr.rel target = $region42
              $region47: #{actor_forward.6} parent=39 // loop_exit
                _
            $region40: #{actor_forward.6} parent=31 // pred_fallthru
              _
          $region32: #{actor_forward.6} parent=27 // pred_fallthru
            _
          %641 = vnop
        $region28: #{actor_forward.6} parent=23 // pred_fallthru
          _
      $region24: #{actor_forward.6} parent=5 // pred_fallthru
        _
      %p642 = scmp.le.s32.totalorder 1, %s9
      %p643 = scmp.lt.s32.totalorder %s9, 4
      %p644 = pnand %p642, %p643
      %p645 = pneg %p644
      // Predicated region
      $region91: #{actor_forward.6} parent=5 // pred_check
        _
      $region92: #{actor_forward.6} parent=5 // pred_check_branch
        %647 = sbr.rel (%p644) target = $region94
      $region93: #{actor_forward.6} parent=5 // pred_region
        %s648 = ssub.s32 %s9, 1
        %s649 = sand.u32 %s64, 1
        %s650 = sand.u32 %s64, 1
        %s651 = smul.addr %s650, 288
        %s652 = scalar_lea.vmem [#allocation2], %s651
        // Predicated region
        $region95: #{actor_forward.6} parent=93 // pred_check
          %p653 = pneg %p77
        $region96: #{actor_forward.6} parent=93 // pred_check_branch
          %655 = sbr.rel (%p653) target = $region98
        $region97: #{actor_forward.6} parent=93 // pred_region
          _
        $region98: #{actor_forward.6} parent=93 // pred_fallthru
          _
        %p656 = pneg %p30
        %p657 = pneg %p27
        %p658 = pneg %p51
        %p659 = pneg %p48
        %s660 = sand.u32 %s64, 1
        %s661 = sand.u32 %s64, 1
        %s662 = smul.addr %s661, 288
        %s663 = scalar_lea.vmem [#allocation2], %s662
        %p664 = pneg %p77
        %p665 = pneg %p74
        %p666 = pneg %p103
        %p667 = pneg %p100
        %s668 = sand.u32 %s90, 1
        %s669 = sand.u32 %s90, 1
        %s670 = smul.addr %s669, 64
        %s671 = scalar_lea.vmem [#allocation3], %s670
        %s672 = smul.u32 4, %s14
        %s673 = ssub.s32 9, %s672
        %p674 = scmp.lt.s32.totalorder %s673, 4
        %s675 = scalar_select %p674, %s673, 4
        %s676 = smul.u32 1152, %s675
        %s677 = smul.u32 4, %s14
        %s678 = ssub.s32 9, %s677
        %p679 = scmp.lt.s32.totalorder %s678, 4
        %s680 = scalar_select %p679, %s678, 4
        %s681 = smul.u32 256, %s680
        %v683 = vld [vmem:[%s0] sm:$0xff]
        %v684 = vld [vmem:[%s0 + $0x8] sm:$0xff]
        %v685 = vpack.c.bf16 %v684, %v683
        %v686 = vld [vmem:[%s652] sm:$0xff]
        %v687 = vld [vmem:[%s652 + $0x8] sm:$0xff]
        %v688 = vld [vmem:[%s652 + $0x10] sm:$0xff]
        %v689 = vld [vmem:[%s652 + $0x18] sm:$0xff]
        %v690 = vld [vmem:[%s652 + $0x20] sm:$0xff]
        %v691 = vld [vmem:[%s652 + $0x28] sm:$0xff]
        %v692 = vld [vmem:[%s652 + $0x30] sm:$0xff]
        %v693 = vld [vmem:[%s652 + $0x38] sm:$0xff]
        %v694 = vld [vmem:[%s652 + $0x40] sm:$0xff]
        %v695 = vld [vmem:[%s652 + $0x48] sm:$0xff]
        %v696 = vld [vmem:[%s652 + $0x50] sm:$0xff]
        %v697 = vld [vmem:[%s652 + $0x58] sm:$0xff]
        %v698 = vld [vmem:[%s652 + $0x60] sm:$0xff]
        %v699 = vld [vmem:[%s652 + $0x68] sm:$0xff]
        %v700 = vld [vmem:[%s652 + $0x70] sm:$0xff]
        %v701 = vld [vmem:[%s652 + $0x78] sm:$0xff]
        %v702 = vld [vmem:[%s652 + $0x80] sm:$0xff]
        %v703 = vld [vmem:[%s652 + $0x88] sm:$0xff]
        %v704 = vld [vmem:[%s652 + $0x90] sm:$0xff]
        %v705 = vld [vmem:[%s652 + $0x98] sm:$0xff]
        %v706 = vld [vmem:[%s652 + $0xa0] sm:$0xff]
        %v707 = vld [vmem:[%s652 + $0xa8] sm:$0xff]
        %v708 = vld [vmem:[%s652 + $0xb0] sm:$0xff]
        %v709 = vld [vmem:[%s652 + $0xb8] sm:$0xff]
        %v710 = vld [vmem:[%s652 + $0xc0] sm:$0xff]
        %v711 = vld [vmem:[%s652 + $0xc8] sm:$0xff]
        %v712 = vld [vmem:[%s652 + $0xd0] sm:$0xff]
        %v713 = vld [vmem:[%s652 + $0xd8] sm:$0xff]
        %v714 = vld [vmem:[%s652 + $0xe0] sm:$0xff]
        %v715 = vld [vmem:[%s652 + $0xe8] sm:$0xff]
        %v716 = vld [vmem:[%s652 + $0xf0] sm:$0xff]
        %v717 = vld [vmem:[%s652 + $0xf8] sm:$0xff]
        %v718 = vld [vmem:[%s652 + $0x100] sm:$0xff]
        %v719 = vld [vmem:[%s652 + $0x108] sm:$0xff]
        %v720 = vld [vmem:[%s652 + $0x110] sm:$0xff]
        %v721 = vld [vmem:[%s652 + $0x118] sm:$0xff]
        %v722 = vpack.c.bf16 %v690, %v686
        %v723 = vpack.c.bf16 %v691, %v687
        %v724 = vpack.c.bf16 %v692, %v688
        %v725 = vpack.c.bf16 %v693, %v689
        %v726 = vpack.c.bf16 %v698, %v694
        %v727 = vpack.c.bf16 %v699, %v695
        %v728 = vpack.c.bf16 %v700, %v696
        %v729 = vpack.c.bf16 %v701, %v697
        %v730 = vpack.c.bf16 %v706, %v702
        %v731 = vpack.c.bf16 %v707, %v703
        %v732 = vpack.c.bf16 %v708, %v704
        %v733 = vpack.c.bf16 %v709, %v705
        %v734 = vpack.c.bf16 %v714, %v710
        %v735 = vpack.c.bf16 %v715, %v711
        %v736 = vpack.c.bf16 %v716, %v712
        %v737 = vpack.c.bf16 %v717, %v713
        %v738 = vpack.c.bf16 %v718, %v718
        %v739 = vpack.c.bf16 %v719, %v719
        %v740 = vpack.c.bf16 %v720, %v720
        %v741 = vpack.c.bf16 %v721, %v721
        %v742 = vld [vmem:[%s1] sm:$0xff]
        %v743 = vld [vmem:[%s1 + $0x8] sm:$0xff]
        %745 = vset.pattern.permute.xlu0 0
        %746 = vperm.xlu0 %745, %v742
        %v747 = vpop.permute.xlu0 %746
        %750 = vset.pattern.permute.xlu0 0
        %751 = vperm.xlu0 %750, %v743
        %v752 = vpop.permute.xlu0 %751
        %vm754 = vcmask 588800
        %v756 = vsel %vm754, %v685, 0
        %vm758 = vcmask 1043456
        %v760 = vsel %vm758, %v738, 0
        %v763 = vsel %vm758, %v739, 0
        %v766 = vsel %vm758, %v740, 0
        %v769 = vsel %vm758, %v741, 0
        %771 = vmatprep.subr.bf16.mxu0 0
        %772 = vmatpush1.bf16.msra.mxu0 0
        %773 = vmatprep.subr.bf16.mxu0 0
        %774 = vmatpush1.bf16.msra.mxu0 0
        %775 = vmatprep.subr.bf16.mxu0 0
        %776 = vmatpush1.bf16.msra.mxu0 0
        %777 = vmatprep.subr.bf16.mxu0 %v763
        %778 = vmatpush1.bf16.msra.mxu0 %v760
        %779 = vmatprep.subr.bf16.mxu0 %v735
        %780 = vmatpush1.bf16.msra.mxu0 %v734
        %781 = vmatprep.subr.bf16.mxu0 %v731
        %782 = vmatpush1.bf16.msra.mxu0 %v730
        %783 = vmatprep.subr.bf16.mxu0 %v727
        %784 = vmatpush1.bf16.msra.mxu0 %v726
        %785 = vmatprep.subr.bf16.mxu0 %v723
        %786 = vmatpush1.bf16.msra.mxu0 %v722
        %787 = vmatprep.subr.bf16.mxu0 0
        %788 = vmatpush2.bf16.msra.mxu0 0
        %789 = vmatprep.subr.bf16.mxu0 0
        %790 = vmatpush2.bf16.msra.mxu0 0
        %791 = vmatprep.subr.bf16.mxu0 0
        %792 = vmatpush2.bf16.msra.mxu0 0
        %793 = vmatprep.subr.bf16.mxu0 0
        %794 = vmatpush2.bf16.msra.mxu0 0
        %795 = vmatprep.subr.bf16.mxu0 0
        %796 = vmatpush2.bf16.msra.mxu0 0
        %797 = vmatprep.subr.bf16.mxu0 0
        %798 = vmatpush2.bf16.msra.mxu0 0
        %799 = vmatprep.subr.bf16.mxu0 0
        %800 = vmatpush2.bf16.msra.mxu0 0
        %801 = vmatprep.subr.bf16.mxu0 0
        %802 = vmatpush2.bf16.msra.mxu0 0
        %803 = vmatprep.mubr.bf16.mxu0 0
        %804 = vmatmul.mubr.bf16.gmra.mxu0 %v756
        %v805 = vpop.f32.mrf.mxu0
        %v806 = vadd.f32 %v747, %v805
        %v807 = vpop.f32.mrf.mxu0
        %v808 = vadd.f32 %v747, %v807
        %v809 = vpop.f32.mrf.mxu0
        %v810 = vadd.f32 %v752, %v809
        %v811 = vpop.f32.mrf.mxu0
        %v812 = vadd.f32 %v752, %v811
        %813 = vdwg.mxu0
        %814 = vmatprep.subr.bf16.mxu0 0
        %815 = vmatpush1.bf16.msra.mxu0 0
        %816 = vmatprep.subr.bf16.mxu0 0
        %817 = vmatpush1.bf16.msra.mxu0 0
        %818 = vmatprep.subr.bf16.mxu0 0
        %819 = vmatpush1.bf16.msra.mxu0 0
        %820 = vmatprep.subr.bf16.mxu0 %v769
        %821 = vmatpush1.bf16.msra.mxu0 %v766
        %822 = vmatprep.subr.bf16.mxu0 %v737
        %823 = vmatpush1.bf16.msra.mxu0 %v736
        %824 = vmatprep.subr.bf16.mxu0 %v733
        %825 = vmatpush1.bf16.msra.mxu0 %v732
        %826 = vmatprep.subr.bf16.mxu0 %v729
        %827 = vmatpush1.bf16.msra.mxu0 %v728
        %828 = vmatprep.subr.bf16.mxu0 %v725
        %829 = vmatpush1.bf16.msra.mxu0 %v724
        %830 = vmatprep.subr.bf16.mxu0 0
        %831 = vmatpush2.bf16.msra.mxu0 0
        %832 = vmatprep.subr.bf16.mxu0 0
        %833 = vmatpush2.bf16.msra.mxu0 0
        %834 = vmatprep.subr.bf16.mxu0 0
        %835 = vmatpush2.bf16.msra.mxu0 0
        %836 = vmatprep.subr.bf16.mxu0 0
        %837 = vmatpush2.bf16.msra.mxu0 0
        %838 = vmatprep.subr.bf16.mxu0 0
        %839 = vmatpush2.bf16.msra.mxu0 0
        %840 = vmatprep.subr.bf16.mxu0 0
        %841 = vmatpush2.bf16.msra.mxu0 0
        %842 = vmatprep.subr.bf16.mxu0 0
        %843 = vmatpush2.bf16.msra.mxu0 0
        %844 = vmatprep.subr.bf16.mxu0 0
        %845 = vmatpush2.bf16.msra.mxu0 0
        %846 = vmatprep.mubr.bf16.mxu0 0
        %847 = vmatmul.mubr.bf16.gmra.mxu0 %v756
        %v848 = vpop.f32.mrf.mxu0
        %v849 = vadd.f32 %v747, %v848
        %v850 = vpop.f32.mrf.mxu0
        %v851 = vadd.f32 %v747, %v850
        %v852 = vpop.f32.mrf.mxu0
        %v853 = vadd.f32 %v752, %v852
        %v854 = vpop.f32.mrf.mxu0
        %v855 = vadd.f32 %v752, %v854
        %856 = vdwg.mxu0
        %v857 = vmax.f32 %v806, 0.0
        %v858 = vmax.f32 %v808, 0.0
        %v859 = vmax.f32 %v849, 0.0
        %v860 = vmax.f32 %v851, 0.0
        %v861 = vmax.f32 %v810, 0.0
        %v862 = vmax.f32 %v812, 0.0
        %v863 = vmax.f32 %v853, 0.0
        %v864 = vmax.f32 %v855, 0.0
        %865 = vst [vmem:[%s671] sm:$0xff] %v857
        %866 = vst [vmem:[%s671 + $0x8] sm:$0xff] %v858
        %867 = vst [vmem:[%s671 + $0x10] sm:$0xff] %v859
        %868 = vst [vmem:[%s671 + $0x18] sm:$0xff] %v860
        %869 = vst [vmem:[%s671 + $0x20] sm:$0xff] %v861
        %870 = vst [vmem:[%s671 + $0x28] sm:$0xff] %v862
        %871 = vst [vmem:[%s671 + $0x30] sm:$0xff] %v863
        %872 = vst [vmem:[%s671 + $0x38] sm:$0xff] %v864
        %s873 = sand.u32 %s90, 1
        %s874 = sand.u32 %s90, 1
        %s875 = smul.addr %s874, 64
        %s876 = scalar_lea.vmem [#allocation3], %s875
        // Predicated region
        $region99: #{actor_forward.6} parent=93 // pred_check
          %p877 = pneg %p100
        $region100: #{actor_forward.6} parent=93 // pred_check_branch
          %879 = sbr.rel (%p877) target = $region102
        $region101: #{actor_forward.6} parent=93 // pred_region
          %s880 = smul.u32 4, %s14
          %s881 = ssub.s32 9, %s880
          %p882 = scmp.lt.s32.totalorder %s881, 4
          %s883 = scalar_select %p882, %s881, 4
          %s884 = smul.u32 256, %s883
          %p885 = scmp.ne.s32.totalorder 0, %s884
          %s886 = smul.addr %s880, 8
          %s887 = scalar_lea.vmem %s3, %s886
          %s888 = smul.u32 %s883, 8
          // Predicated region
          $region103: #{actor_forward.6} parent=101 // pred_check
            %p889 = pneg %p885
          $region104: #{actor_forward.6} parent=101 // pred_check_branch
            %891 = sbr.rel (%p889) target = $region106
          $region105: #{actor_forward.6} parent=101 // pred_region
            %p892 = scmp.lt.u32.totalorder %s888, 8
            %p893 = pneg %p892
            // Predicated region
            $region107: #{actor_forward.6} parent=105 // pred_check
              _
            $region108: #{actor_forward.6} parent=105 // pred_check_branch
              %895 = sbr.rel (%p892) target = $region110
            $region109: #{actor_forward.6} parent=105 // pred_region
              %s913 = sand.u32 %s888, 7
              %p914 = scmp.eq.s32.totalorder %s913, 0
              // Predicated region
              $region122: #{actor_forward.6} parent=109 // pred_check
                %p915 = pneg %p914
              $region123: #{actor_forward.6} parent=109 // pred_check_branch
                %917 = sbr.rel (%p915) target = $region125
              $region124: #{actor_forward.6} parent=109 // pred_region
                %s918 = sshrl.u32 %s888, 3
                %s919 = sshrl.u32 %s918, 5
                // While loop
                $region126: #{actor_forward.6} parent=124 // loop_pre_header
                  _
                $region127: #{actor_forward.6} parent=124 // loop_header
                  %s923 = sphi 0, %s925
                  %p924 = scmp.ge.s32.totalorder %s923, %s919
                  %s928 = sphi 0, %s1061
                  %s929 = sphi %s876, %s1064
                  %s930 = sphi %s887, %s1065
                $region128: #{actor_forward.6} parent=124 // loop_header_branch
                  %927 = sbr.rel (%p924) target = $region132
                $region129: #{actor_forward.6} parent=124 // loop_body
                  %v931 = vld [vmem:[%s929] sm:$0xff]
                  %932 = vst [vmem:[%s930] sm:$0xff] %v931
                  %v933 = vld [vmem:[%s929 + $0x8] sm:$0xff]
                  %934 = vst [vmem:[%s930 + $0x8] sm:$0xff] %v933
                  %v935 = vld [vmem:[%s929 + $0x10] sm:$0xff]
                  %936 = vst [vmem:[%s930 + $0x10] sm:$0xff] %v935
                  %v937 = vld [vmem:[%s929 + $0x18] sm:$0xff]
                  %938 = vst [vmem:[%s930 + $0x18] sm:$0xff] %v937
                  %v939 = vld [vmem:[%s929 + $0x20] sm:$0xff]
                  %940 = vst [vmem:[%s930 + $0x20] sm:$0xff] %v939
                  %v941 = vld [vmem:[%s929 + $0x28] sm:$0xff]
                  %942 = vst [vmem:[%s930 + $0x28] sm:$0xff] %v941
                  %v943 = vld [vmem:[%s929 + $0x30] sm:$0xff]
                  %944 = vst [vmem:[%s930 + $0x30] sm:$0xff] %v943
                  %v945 = vld [vmem:[%s929 + $0x38] sm:$0xff]
                  %946 = vst [vmem:[%s930 + $0x38] sm:$0xff] %v945
                  %v947 = vld [vmem:[%s929 + $0x40] sm:$0xff]
                  %948 = vst [vmem:[%s930 + $0x40] sm:$0xff] %v947
                  %v949 = vld [vmem:[%s929 + $0x48] sm:$0xff]
                  %950 = vst [vmem:[%s930 + $0x48] sm:$0xff] %v949
                  %v951 = vld [vmem:[%s929 + $0x50] sm:$0xff]
                  %952 = vst [vmem:[%s930 + $0x50] sm:$0xff] %v951
                  %v953 = vld [vmem:[%s929 + $0x58] sm:$0xff]
                  %954 = vst [vmem:[%s930 + $0x58] sm:$0xff] %v953
                  %v955 = vld [vmem:[%s929 + $0x60] sm:$0xff]
                  %956 = vst [vmem:[%s930 + $0x60] sm:$0xff] %v955
                  %v957 = vld [vmem:[%s929 + $0x68] sm:$0xff]
                  %958 = vst [vmem:[%s930 + $0x68] sm:$0xff] %v957
                  %v959 = vld [vmem:[%s929 + $0x70] sm:$0xff]
                  %960 = vst [vmem:[%s930 + $0x70] sm:$0xff] %v959
                  %v961 = vld [vmem:[%s929 + $0x78] sm:$0xff]
                  %962 = vst [vmem:[%s930 + $0x78] sm:$0xff] %v961
                  %v963 = vld [vmem:[%s929 + $0x80] sm:$0xff]
                  %964 = vst [vmem:[%s930 + $0x80] sm:$0xff] %v963
                  %v965 = vld [vmem:[%s929 + $0x88] sm:$0xff]
                  %966 = vst [vmem:[%s930 + $0x88] sm:$0xff] %v965
                  %v967 = vld [vmem:[%s929 + $0x90] sm:$0xff]
                  %968 = vst [vmem:[%s930 + $0x90] sm:$0xff] %v967
                  %v969 = vld [vmem:[%s929 + $0x98] sm:$0xff]
                  %970 = vst [vmem:[%s930 + $0x98] sm:$0xff] %v969
                  %v971 = vld [vmem:[%s929 + $0xa0] sm:$0xff]
                  %972 = vst [vmem:[%s930 + $0xa0] sm:$0xff] %v971
                  %v973 = vld [vmem:[%s929 + $0xa8] sm:$0xff]
                  %974 = vst [vmem:[%s930 + $0xa8] sm:$0xff] %v973
                  %v975 = vld [vmem:[%s929 + $0xb0] sm:$0xff]
                  %976 = vst [vmem:[%s930 + $0xb0] sm:$0xff] %v975
                  %v977 = vld [vmem:[%s929 + $0xb8] sm:$0xff]
                  %978 = vst [vmem:[%s930 + $0xb8] sm:$0xff] %v977
                  %v979 = vld [vmem:[%s929 + $0xc0] sm:$0xff]
                  %980 = vst [vmem:[%s930 + $0xc0] sm:$0xff] %v979
                  %v981 = vld [vmem:[%s929 + $0xc8] sm:$0xff]
                  %982 = vst [vmem:[%s930 + $0xc8] sm:$0xff] %v981
                  %v983 = vld [vmem:[%s929 + $0xd0] sm:$0xff]
                  %984 = vst [vmem:[%s930 + $0xd0] sm:$0xff] %v983
                  %v985 = vld [vmem:[%s929 + $0xd8] sm:$0xff]
                  %986 = vst [vmem:[%s930 + $0xd8] sm:$0xff] %v985
                  %v987 = vld [vmem:[%s929 + $0xe0] sm:$0xff]
                  %988 = vst [vmem:[%s930 + $0xe0] sm:$0xff] %v987
                  %v989 = vld [vmem:[%s929 + $0xe8] sm:$0xff]
                  %990 = vst [vmem:[%s930 + $0xe8] sm:$0xff] %v989
                  %v991 = vld [vmem:[%s929 + $0xf0] sm:$0xff]
                  %992 = vst [vmem:[%s930 + $0xf0] sm:$0xff] %v991
                  %v993 = vld [vmem:[%s929 + $0xf8] sm:$0xff]
                  %994 = vst [vmem:[%s930 + $0xf8] sm:$0xff] %v993
                  %v995 = vld [vmem:[%s929 + $0x20] sm:$0xff]
                  %996 = vst [vmem:[%s930 + $0x48] sm:$0xff] %v995
                  %v997 = vld [vmem:[%s929 + $0x28] sm:$0xff]
                  %998 = vst [vmem:[%s930 + $0x50] sm:$0xff] %v997
                  %v999 = vld [vmem:[%s929 + $0x30] sm:$0xff]
                  %1000 = vst [vmem:[%s930 + $0x58] sm:$0xff] %v999
                  %v1001 = vld [vmem:[%s929 + $0x38] sm:$0xff]
                  %1002 = vst [vmem:[%s930 + $0x60] sm:$0xff] %v1001
                  %v1003 = vld [vmem:[%s929 + $0x40] sm:$0xff]
                  %1004 = vst [vmem:[%s930 + $0x68] sm:$0xff] %v1003
                  %v1005 = vld [vmem:[%s929 + $0x48] sm:$0xff]
                  %1006 = vst [vmem:[%s930 + $0x70] sm:$0xff] %v1005
                  %v1007 = vld [vmem:[%s929 + $0x50] sm:$0xff]
                  %1008 = vst [vmem:[%s930 + $0x78] sm:$0xff] %v1007
                  %v1009 = vld [vmem:[%s929 + $0x58] sm:$0xff]
                  %1010 = vst [vmem:[%s930 + $0x80] sm:$0xff] %v1009
                  %v1011 = vld [vmem:[%s929 + $0x60] sm:$0xff]
                  %1012 = vst [vmem:[%s930 + $0x88] sm:$0xff] %v1011
                  %v1013 = vld [vmem:[%s929 + $0x68] sm:$0xff]
                  %1014 = vst [vmem:[%s930 + $0x90] sm:$0xff] %v1013
                  %v1015 = vld [vmem:[%s929 + $0x70] sm:$0xff]
                  %1016 = vst [vmem:[%s930 + $0x98] sm:$0xff] %v1015
                  %v1017 = vld [vmem:[%s929 + $0x78] sm:$0xff]
                  %1018 = vst [vmem:[%s930 + $0xa0] sm:$0xff] %v1017
                  %v1019 = vld [vmem:[%s929 + $0x80] sm:$0xff]
                  %1020 = vst [vmem:[%s930 + $0xa8] sm:$0xff] %v1019
                  %v1021 = vld [vmem:[%s929 + $0x88] sm:$0xff]
                  %1022 = vst [vmem:[%s930 + $0xb0] sm:$0xff] %v1021
                  %v1023 = vld [vmem:[%s929 + $0x90] sm:$0xff]
                  %1024 = vst [vmem:[%s930 + $0xb8] sm:$0xff] %v1023
                  %v1025 = vld [vmem:[%s929 + $0x98] sm:$0xff]
                  %1026 = vst [vmem:[%s930 + $0xc0] sm:$0xff] %v1025
                  %v1027 = vld [vmem:[%s929 + $0xa0] sm:$0xff]
                  %1028 = vst [vmem:[%s930 + $0xc8] sm:$0xff] %v1027
                  %v1029 = vld [vmem:[%s929 + $0xa8] sm:$0xff]
                  %1030 = vst [vmem:[%s930 + $0xd0] sm:$0xff] %v1029
                  %v1031 = vld [vmem:[%s929 + $0xb0] sm:$0xff]
                  %1032 = vst [vmem:[%s930 + $0xd8] sm:$0xff] %v1031
                  %v1033 = vld [vmem:[%s929 + $0xb8] sm:$0xff]
                  %1034 = vst [vmem:[%s930 + $0xe0] sm:$0xff] %v1033
                  %v1035 = vld [vmem:[%s929 + $0xc0] sm:$0xff]
                  %1036 = vst [vmem:[%s930 + $0xe8] sm:$0xff] %v1035
                  %v1037 = vld [vmem:[%s929 + $0xc8] sm:$0xff]
                  %1038 = vst [vmem:[%s930 + $0xf0] sm:$0xff] %v1037
                  %v1039 = vld [vmem:[%s929 + $0xd0] sm:$0xff]
                  %1040 = vst [vmem:[%s930 + $0xf8] sm:$0xff] %v1039
                  %v1041 = vld [vmem:[%s929 + $0xd8] sm:$0xff]
                  %1042 = vst [vmem:[%s930 + $0x100] sm:$0xff] %v1041
                  %v1043 = vld [vmem:[%s929 + $0xe0] sm:$0xff]
                  %1044 = vst [vmem:[%s930 + $0x108] sm:$0xff] %v1043
                  %v1045 = vld [vmem:[%s929 + $0xe8] sm:$0xff]
                  %1046 = vst [vmem:[%s930 + $0x110] sm:$0xff] %v1045
                  %v1047 = vld [vmem:[%s929 + $0xf0] sm:$0xff]
                  %1048 = vst [vmem:[%s930 + $0x118] sm:$0xff] %v1047
                  %v1049 = vld [vmem:[%s929 + $0xf8] sm:$0xff]
                  %1050 = vst [vmem:[%s930 + $0x120] sm:$0xff] %v1049
                  %v1051 = vld [vmem:[%s929 + $0x100] sm:$0xff]
                  %1052 = vst [vmem:[%s930 + $0x128] sm:$0xff] %v1051
                  %v1053 = vld [vmem:[%s929 + $0x108] sm:$0xff]
                  %1054 = vst [vmem:[%s930 + $0x130] sm:$0xff] %v1053
                  %v1055 = vld [vmem:[%s929 + $0x110] sm:$0xff]
                  %1056 = vst [vmem:[%s930 + $0x138] sm:$0xff] %v1055
                  %v1057 = vld [vmem:[%s929 + $0x118] sm:$0xff]
                  %1058 = vst [vmem:[%s930 + $0x140] sm:$0xff] %v1057
                  %s1059 = sadd.s32 1, %s928
                  %p1060 = scmp.ge.s32.totalorder %s1059, %s919
                  %s1061 = scalar_select %p1060, 0, %s1059
                  %s1062 = smul.u32 %s1061, 256
                  %s1063 = smul.u32 %s1061, 256
                  %s1064 = scalar_lea.vmem %s876, %s1062 [#allocation3]
                  %s1065 = scalar_lea.vmem %s887, %s1063
                $region130: #{actor_forward.6} parent=124 // loop_footer
                  %s925 = sadd.s32 %s923, 1
                $region131: #{actor_forward.6} parent=124 // loop_footer_branch
                  %922 = sbr.rel target = $region127
                $region132: #{actor_forward.6} parent=124 // loop_exit
                  _
                %s1066 = sshrl.u32 %s918, 5
                %s1067 = sand.u32 %s918, 31
                %s1068 = smul.u32 %s1066, 32
                %s1069 = smul.u32 128, %s1068
                %s1070 = sshra.s32 %s1069, 4
                %s1071 = scalar_lea.vmem %s876, %s1070 [#allocation3]
                %s1072 = smul.u32 128, %s1068
                %s1073 = sshra.s32 %s1072, 4
                %s1074 = scalar_lea.vmem %s887, %s1073
                // While loop
                $region133: #{actor_forward.6} parent=124 // loop_pre_header
                  _
                $region134: #{actor_forward.6} parent=124 // loop_header
                  %s1078 = sphi 0, %s1080
                  %p1079 = scmp.ge.s32.totalorder %s1078, %s1067
                  %s1083 = sphi 0, %s1092
                  %s1084 = sphi %s1071, %s1095
                  %s1085 = sphi %s1074, %s1096
                $region135: #{actor_forward.6} parent=124 // loop_header_branch
                  %1082 = sbr.rel (%p1079) target = $region139
                $region136: #{actor_forward.6} parent=124 // loop_body
                  %v1086 = vld [vmem:[%s1084] sm:$0xff]
                  %1087 = vst [vmem:[%s1085] sm:$0xff] %v1086
                  %v1088 = vld [vmem:[%s1084 + $0x20] sm:$0xff]
                  %1089 = vst [vmem:[%s1085 + $0x48] sm:$0xff] %v1088
                  %s1090 = sadd.s32 1, %s1083
                  %p1091 = scmp.ge.s32.totalorder %s1090, %s1067
                  %s1092 = scalar_select %p1091, 0, %s1090
                  %s1093 = smul.u32 %s1092, 8
                  %s1094 = smul.u32 %s1092, 8
                  %s1095 = scalar_lea.vmem %s1071, %s1093 [#allocation3]
                  %s1096 = scalar_lea.vmem %s1074, %s1094
                $region137: #{actor_forward.6} parent=124 // loop_footer
                  %s1080 = sadd.s32 %s1078, 1
                $region138: #{actor_forward.6} parent=124 // loop_footer_branch
                  %1077 = sbr.rel target = $region134
                $region139: #{actor_forward.6} parent=124 // loop_exit
                  _
              $region125: #{actor_forward.6} parent=109 // pred_fallthru
                _
              %p1097 = pneg %p914
              // Predicated region
              $region140: #{actor_forward.6} parent=109 // pred_check
                _
              $region141: #{actor_forward.6} parent=109 // pred_check_branch
                %1099 = sbr.rel (%p914) target = $region143
              $region142: #{actor_forward.6} parent=109 // pred_region
                %s1100 = sand.u32 %s888, 7
                %s1101 = ssub.s32 %s888, %s1100
                %s1102 = scalar_lea.vmem %s876, %s1101 [#allocation3]
                %s1103 = ssub.s32 %s888, %s1100
                %s1104 = scalar_lea.vmem %s887, %s1103
                %s1105 = sshrl.u32 %s888, 3
                %s1106 = sshrl.u32 %s1105, 5
                // While loop
                $region144: #{actor_forward.6} parent=142 // loop_pre_header
                  _
                $region145: #{actor_forward.6} parent=142 // loop_header
                  %s1110 = sphi 0, %s1112
                  %p1111 = scmp.ge.s32.totalorder %s1110, %s1106
                  %s1115 = sphi 0, %s1248
                  %s1116 = sphi %s876, %s1251
                  %s1117 = sphi %s887, %s1252
                $region146: #{actor_forward.6} parent=142 // loop_header_branch
                  %1114 = sbr.rel (%p1111) target = $region150
                $region147: #{actor_forward.6} parent=142 // loop_body
                  %v1118 = vld [vmem:[%s1116] sm:$0xff]
                  %1119 = vst [vmem:[%s1117] sm:$0xff] %v1118
                  %v1120 = vld [vmem:[%s1116 + $0x8] sm:$0xff]
                  %1121 = vst [vmem:[%s1117 + $0x8] sm:$0xff] %v1120
                  %v1122 = vld [vmem:[%s1116 + $0x10] sm:$0xff]
                  %1123 = vst [vmem:[%s1117 + $0x10] sm:$0xff] %v1122
                  %v1124 = vld [vmem:[%s1116 + $0x18] sm:$0xff]
                  %1125 = vst [vmem:[%s1117 + $0x18] sm:$0xff] %v1124
                  %v1126 = vld [vmem:[%s1116 + $0x20] sm:$0xff]
                  %1127 = vst [vmem:[%s1117 + $0x20] sm:$0xff] %v1126
                  %v1128 = vld [vmem:[%s1116 + $0x28] sm:$0xff]
                  %1129 = vst [vmem:[%s1117 + $0x28] sm:$0xff] %v1128
                  %v1130 = vld [vmem:[%s1116 + $0x30] sm:$0xff]
                  %1131 = vst [vmem:[%s1117 + $0x30] sm:$0xff] %v1130
                  %v1132 = vld [vmem:[%s1116 + $0x38] sm:$0xff]
                  %1133 = vst [vmem:[%s1117 + $0x38] sm:$0xff] %v1132
                  %v1134 = vld [vmem:[%s1116 + $0x40] sm:$0xff]
                  %1135 = vst [vmem:[%s1117 + $0x40] sm:$0xff] %v1134
                  %v1136 = vld [vmem:[%s1116 + $0x48] sm:$0xff]
                  %1137 = vst [vmem:[%s1117 + $0x48] sm:$0xff] %v1136
                  %v1138 = vld [vmem:[%s1116 + $0x50] sm:$0xff]
                  %1139 = vst [vmem:[%s1117 + $0x50] sm:$0xff] %v1138
                  %v1140 = vld [vmem:[%s1116 + $0x58] sm:$0xff]
                  %1141 = vst [vmem:[%s1117 + $0x58] sm:$0xff] %v1140
                  %v1142 = vld [vmem:[%s1116 + $0x60] sm:$0xff]
                  %1143 = vst [vmem:[%s1117 + $0x60] sm:$0xff] %v1142
                  %v1144 = vld [vmem:[%s1116 + $0x68] sm:$0xff]
                  %1145 = vst [vmem:[%s1117 + $0x68] sm:$0xff] %v1144
                  %v1146 = vld [vmem:[%s1116 + $0x70] sm:$0xff]
                  %1147 = vst [vmem:[%s1117 + $0x70] sm:$0xff] %v1146
                  %v1148 = vld [vmem:[%s1116 + $0x78] sm:$0xff]
                  %1149 = vst [vmem:[%s1117 + $0x78] sm:$0xff] %v1148
                  %v1150 = vld [vmem:[%s1116 + $0x80] sm:$0xff]
                  %1151 = vst [vmem:[%s1117 + $0x80] sm:$0xff] %v1150
                  %v1152 = vld [vmem:[%s1116 + $0x88] sm:$0xff]
                  %1153 = vst [vmem:[%s1117 + $0x88] sm:$0xff] %v1152
                  %v1154 = vld [vmem:[%s1116 + $0x90] sm:$0xff]
                  %1155 = vst [vmem:[%s1117 + $0x90] sm:$0xff] %v1154
                  %v1156 = vld [vmem:[%s1116 + $0x98] sm:$0xff]
                  %1157 = vst [vmem:[%s1117 + $0x98] sm:$0xff] %v1156
                  %v1158 = vld [vmem:[%s1116 + $0xa0] sm:$0xff]
                  %1159 = vst [vmem:[%s1117 + $0xa0] sm:$0xff] %v1158
                  %v1160 = vld [vmem:[%s1116 + $0xa8] sm:$0xff]
                  %1161 = vst [vmem:[%s1117 + $0xa8] sm:$0xff] %v1160
                  %v1162 = vld [vmem:[%s1116 + $0xb0] sm:$0xff]
                  %1163 = vst [vmem:[%s1117 + $0xb0] sm:$0xff] %v1162
                  %v1164 = vld [vmem:[%s1116 + $0xb8] sm:$0xff]
                  %1165 = vst [vmem:[%s1117 + $0xb8] sm:$0xff] %v1164
                  %v1166 = vld [vmem:[%s1116 + $0xc0] sm:$0xff]
                  %1167 = vst [vmem:[%s1117 + $0xc0] sm:$0xff] %v1166
                  %v1168 = vld [vmem:[%s1116 + $0xc8] sm:$0xff]
                  %1169 = vst [vmem:[%s1117 + $0xc8] sm:$0xff] %v1168
                  %v1170 = vld [vmem:[%s1116 + $0xd0] sm:$0xff]
                  %1171 = vst [vmem:[%s1117 + $0xd0] sm:$0xff] %v1170
                  %v1172 = vld [vmem:[%s1116 + $0xd8] sm:$0xff]
                  %1173 = vst [vmem:[%s1117 + $0xd8] sm:$0xff] %v1172
                  %v1174 = vld [vmem:[%s1116 + $0xe0] sm:$0xff]
                  %1175 = vst [vmem:[%s1117 + $0xe0] sm:$0xff] %v1174
                  %v1176 = vld [vmem:[%s1116 + $0xe8] sm:$0xff]
                  %1177 = vst [vmem:[%s1117 + $0xe8] sm:$0xff] %v1176
                  %v1178 = vld [vmem:[%s1116 + $0xf0] sm:$0xff]
                  %1179 = vst [vmem:[%s1117 + $0xf0] sm:$0xff] %v1178
                  %v1180 = vld [vmem:[%s1116 + $0xf8] sm:$0xff]
                  %1181 = vst [vmem:[%s1117 + $0xf8] sm:$0xff] %v1180
                  %v1182 = vld [vmem:[%s1116 + $0x20] sm:$0xff]
                  %1183 = vst [vmem:[%s1117 + $0x48] sm:$0xff] %v1182
                  %v1184 = vld [vmem:[%s1116 + $0x28] sm:$0xff]
                  %1185 = vst [vmem:[%s1117 + $0x50] sm:$0xff] %v1184
                  %v1186 = vld [vmem:[%s1116 + $0x30] sm:$0xff]
                  %1187 = vst [vmem:[%s1117 + $0x58] sm:$0xff] %v1186
                  %v1188 = vld [vmem:[%s1116 + $0x38] sm:$0xff]
                  %1189 = vst [vmem:[%s1117 + $0x60] sm:$0xff] %v1188
                  %v1190 = vld [vmem:[%s1116 + $0x40] sm:$0xff]
                  %1191 = vst [vmem:[%s1117 + $0x68] sm:$0xff] %v1190
                  %v1192 = vld [vmem:[%s1116 + $0x48] sm:$0xff]
                  %1193 = vst [vmem:[%s1117 + $0x70] sm:$0xff] %v1192
                  %v1194 = vld [vmem:[%s1116 + $0x50] sm:$0xff]
                  %1195 = vst [vmem:[%s1117 + $0x78] sm:$0xff] %v1194
                  %v1196 = vld [vmem:[%s1116 + $0x58] sm:$0xff]
                  %1197 = vst [vmem:[%s1117 + $0x80] sm:$0xff] %v1196
                  %v1198 = vld [vmem:[%s1116 + $0x60] sm:$0xff]
                  %1199 = vst [vmem:[%s1117 + $0x88] sm:$0xff] %v1198
                  %v1200 = vld [vmem:[%s1116 + $0x68] sm:$0xff]
                  %1201 = vst [vmem:[%s1117 + $0x90] sm:$0xff] %v1200
                  %v1202 = vld [vmem:[%s1116 + $0x70] sm:$0xff]
                  %1203 = vst [vmem:[%s1117 + $0x98] sm:$0xff] %v1202
                  %v1204 = vld [vmem:[%s1116 + $0x78] sm:$0xff]
                  %1205 = vst [vmem:[%s1117 + $0xa0] sm:$0xff] %v1204
                  %v1206 = vld [vmem:[%s1116 + $0x80] sm:$0xff]
                  %1207 = vst [vmem:[%s1117 + $0xa8] sm:$0xff] %v1206
                  %v1208 = vld [vmem:[%s1116 + $0x88] sm:$0xff]
                  %1209 = vst [vmem:[%s1117 + $0xb0] sm:$0xff] %v1208
                  %v1210 = vld [vmem:[%s1116 + $0x90] sm:$0xff]
                  %1211 = vst [vmem:[%s1117 + $0xb8] sm:$0xff] %v1210
                  %v1212 = vld [vmem:[%s1116 + $0x98] sm:$0xff]
                  %1213 = vst [vmem:[%s1117 + $0xc0] sm:$0xff] %v1212
                  %v1214 = vld [vmem:[%s1116 + $0xa0] sm:$0xff]
                  %1215 = vst [vmem:[%s1117 + $0xc8] sm:$0xff] %v1214
                  %v1216 = vld [vmem:[%s1116 + $0xa8] sm:$0xff]
                  %1217 = vst [vmem:[%s1117 + $0xd0] sm:$0xff] %v1216
                  %v1218 = vld [vmem:[%s1116 + $0xb0] sm:$0xff]
                  %1219 = vst [vmem:[%s1117 + $0xd8] sm:$0xff] %v1218
                  %v1220 = vld [vmem:[%s1116 + $0xb8] sm:$0xff]
                  %1221 = vst [vmem:[%s1117 + $0xe0] sm:$0xff] %v1220
                  %v1222 = vld [vmem:[%s1116 + $0xc0] sm:$0xff]
                  %1223 = vst [vmem:[%s1117 + $0xe8] sm:$0xff] %v1222
                  %v1224 = vld [vmem:[%s1116 + $0xc8] sm:$0xff]
                  %1225 = vst [vmem:[%s1117 + $0xf0] sm:$0xff] %v1224
                  %v1226 = vld [vmem:[%s1116 + $0xd0] sm:$0xff]
                  %1227 = vst [vmem:[%s1117 + $0xf8] sm:$0xff] %v1226
                  %v1228 = vld [vmem:[%s1116 + $0xd8] sm:$0xff]
                  %1229 = vst [vmem:[%s1117 + $0x100] sm:$0xff] %v1228
                  %v1230 = vld [vmem:[%s1116 + $0xe0] sm:$0xff]
                  %1231 = vst [vmem:[%s1117 + $0x108] sm:$0xff] %v1230
                  %v1232 = vld [vmem:[%s1116 + $0xe8] sm:$0xff]
                  %1233 = vst [vmem:[%s1117 + $0x110] sm:$0xff] %v1232
                  %v1234 = vld [vmem:[%s1116 + $0xf0] sm:$0xff]
                  %1235 = vst [vmem:[%s1117 + $0x118] sm:$0xff] %v1234
                  %v1236 = vld [vmem:[%s1116 + $0xf8] sm:$0xff]
                  %1237 = vst [vmem:[%s1117 + $0x120] sm:$0xff] %v1236
                  %v1238 = vld [vmem:[%s1116 + $0x100] sm:$0xff]
                  %1239 = vst [vmem:[%s1117 + $0x128] sm:$0xff] %v1238
                  %v1240 = vld [vmem:[%s1116 + $0x108] sm:$0xff]
                  %1241 = vst [vmem:[%s1117 + $0x130] sm:$0xff] %v1240
                  %v1242 = vld [vmem:[%s1116 + $0x110] sm:$0xff]
                  %1243 = vst [vmem:[%s1117 + $0x138] sm:$0xff] %v1242
                  %v1244 = vld [vmem:[%s1116 + $0x118] sm:$0xff]
                  %1245 = vst [vmem:[%s1117 + $0x140] sm:$0xff] %v1244
                  %s1246 = sadd.s32 1, %s1115
                  %p1247 = scmp.ge.s32.totalorder %s1246, %s1106
                  %s1248 = scalar_select %p1247, 0, %s1246
                  %s1249 = smul.u32 %s1248, 256
                  %s1250 = smul.u32 %s1248, 256
                  %s1251 = scalar_lea.vmem %s876, %s1249 [#allocation3]
                  %s1252 = scalar_lea.vmem %s887, %s1250
                $region148: #{actor_forward.6} parent=142 // loop_footer
                  %s1112 = sadd.s32 %s1110, 1
                $region149: #{actor_forward.6} parent=142 // loop_footer_branch
                  %1109 = sbr.rel target = $region145
                $region150: #{actor_forward.6} parent=142 // loop_exit
                  _
                %s1253 = sshrl.u32 %s1105, 5
                %s1254 = sand.u32 %s1105, 31
                %s1255 = smul.u32 %s1253, 32
                %s1256 = smul.u32 128, %s1255
                %s1257 = sshra.s32 %s1256, 4
                %s1258 = scalar_lea.vmem %s876, %s1257 [#allocation3]
                %s1259 = smul.u32 128, %s1255
                %s1260 = sshra.s32 %s1259, 4
                %s1261 = scalar_lea.vmem %s887, %s1260
                // While loop
                $region151: #{actor_forward.6} parent=142 // loop_pre_header
                  _
                $region152: #{actor_forward.6} parent=142 // loop_header
                  %s1265 = sphi 0, %s1267
                  %p1266 = scmp.ge.s32.totalorder %s1265, %s1254
                  %s1270 = sphi 0, %s1279
                  %s1271 = sphi %s1258, %s1282
                  %s1272 = sphi %s1261, %s1283
                $region153: #{actor_forward.6} parent=142 // loop_header_branch
                  %1269 = sbr.rel (%p1266) target = $region157
                $region154: #{actor_forward.6} parent=142 // loop_body
                  %v1273 = vld [vmem:[%s1271] sm:$0xff]
                  %1274 = vst [vmem:[%s1272] sm:$0xff] %v1273
                  %v1275 = vld [vmem:[%s1271 + $0x20] sm:$0xff]
                  %1276 = vst [vmem:[%s1272 + $0x48] sm:$0xff] %v1275
                  %s1277 = sadd.s32 1, %s1270
                  %p1278 = scmp.ge.s32.totalorder %s1277, %s1254
                  %s1279 = scalar_select %p1278, 0, %s1277
                  %s1280 = smul.u32 %s1279, 8
                  %s1281 = smul.u32 %s1279, 8
                  %s1282 = scalar_lea.vmem %s1258, %s1280 [#allocation3]
                  %s1283 = scalar_lea.vmem %s1261, %s1281
                $region155: #{actor_forward.6} parent=142 // loop_footer
                  %s1267 = sadd.s32 %s1265, 1
                $region156: #{actor_forward.6} parent=142 // loop_footer_branch
                  %1264 = sbr.rel target = $region152
                $region157: #{actor_forward.6} parent=142 // loop_exit
                  _
                %s1284 = sshll.u32 1, %s1100
                %s1285 = ssub.s32 %s1284, 1
                loop: start=0, step=1, limit=1
                $region158: #{actor_forward.6} parent=142 // loop_pre_header
                  _
                $region159: #{actor_forward.6} parent=142 // loop_header
                  %s1287 = sphi 0, %s1291
                  %p1288 = scmp.ge.s32.totalorder %s1287, 1
                  %s1292 = sphi %s1102, %s1102
                  %s1293 = sphi %s1104, %s1104
                $region160: #{actor_forward.6} parent=142 // loop_header_branch
                  %1290 = sbr.rel (%p1288) target = $region164
                $region161: #{actor_forward.6} parent=142 // loop_body
                  %v1294 = vld [vmem:[%s1292] sm:%s1285]
                  %1295 = vst [vmem:[%s1293] sm:%s1285] %v1294
                  %v1296 = vld [vmem:[%s1292 + $0x20] sm:%s1285]
                  %1297 = vst [vmem:[%s1293 + $0x48] sm:%s1285] %v1296
                $region162: #{actor_forward.6} parent=142 // loop_footer
                  %s1291 = sadd.s32 1, %s1287
                $region163: #{actor_forward.6} parent=142 // loop_footer_branch
                  %1286 = sbr.rel target = $region159
                $region164: #{actor_forward.6} parent=142 // loop_exit
                  _
              $region143: #{actor_forward.6} parent=109 // pred_fallthru
                _
            $region110: #{actor_forward.6} parent=105 // pred_fallthru
              _
            // Predicated region
            $region111: #{actor_forward.6} parent=105 // pred_check
              %p896 = pneg %p892
            $region112: #{actor_forward.6} parent=105 // pred_check_branch
              %898 = sbr.rel (%p896) target = $region114
            $region113: #{actor_forward.6} parent=105 // pred_region
              %s899 = sshll.u32 1, %s888
              %s900 = ssub.s32 %s899, 1
              loop: start=0, step=1, limit=1
              $region115: #{actor_forward.6} parent=113 // loop_pre_header
                _
              $region116: #{actor_forward.6} parent=113 // loop_header
                %s902 = sphi 0, %s906
                %p903 = scmp.ge.s32.totalorder %s902, 1
                %s907 = sphi %s876, %s876
                %s908 = sphi %s887, %s887
              $region117: #{actor_forward.6} parent=113 // loop_header_branch
                %905 = sbr.rel (%p903) target = $region121
              $region118: #{actor_forward.6} parent=113 // loop_body
                %v909 = vld [vmem:[%s907] sm:%s900]
                %910 = vst [vmem:[%s908] sm:%s900] %v909
                %v911 = vld [vmem:[%s907 + $0x20] sm:%s900]
                %912 = vst [vmem:[%s908 + $0x48] sm:%s900] %v911
              $region119: #{actor_forward.6} parent=113 // loop_footer
                %s906 = sadd.s32 1, %s902
              $region120: #{actor_forward.6} parent=113 // loop_footer_branch
                %901 = sbr.rel target = $region116
              $region121: #{actor_forward.6} parent=113 // loop_exit
                _
            $region114: #{actor_forward.6} parent=105 // pred_fallthru
              _
          $region106: #{actor_forward.6} parent=101 // pred_fallthru
            _
          %1298 = vnop
        $region102: #{actor_forward.6} parent=93 // pred_fallthru
          _
      $region94: #{actor_forward.6} parent=5 // pred_fallthru
        _
      %p1299 = scmp.le.s32.totalorder 2, %s9
      // Predicated region
      $region165: #{actor_forward.6} parent=5 // pred_check
        %p1300 = pneg %p1299
      $region166: #{actor_forward.6} parent=5 // pred_check_branch
        %1302 = sbr.rel (%p1300) target = $region168
      $region167: #{actor_forward.6} parent=5 // pred_region
        %s1303 = ssub.s32 %s9, 2
        // Predicated region
        $region169: #{actor_forward.6} parent=167 // pred_check
          %p1304 = pneg %p106
        $region170: #{actor_forward.6} parent=167 // pred_check_branch
          %1306 = sbr.rel (%p1304) target = $region172
        $region171: #{actor_forward.6} parent=167 // pred_region
          %s1307 = sand.u32 %s91, 1
          %s1308 = sand.u32 %s91, 1
          %s1309 = smul.addr %s1308, 64
          %s1310 = scalar_lea.vmem [#allocation3], %s1309
        $region172: #{actor_forward.6} parent=167 // pred_fallthru
          _
      $region168: #{actor_forward.6} parent=5 // pred_fallthru
        _
    $region6: #{actor_forward.6} parent=1 // loop_footer
      %s13 = sadd.s32 1, %s9
    $region7: #{actor_forward.6} parent=1 // loop_footer_branch
      %8 = sbr.rel target = $region3
    $region8: #{actor_forward.6} parent=1 // loop_exit
      _

// kernel: actor_forward.7
$region0: #{actor_forward.7}
  #allocation0 [shape = 'u32[]', space=smem, size = 0x4, offset = 0x4, fixed_abs, tag = 'smem constant byte address 0x4 - core index']
  #allocation1 [shape = 'u32[144,128]{1,0:T(1,128)}', space=vmem, size = 0x12000, scoped, tag = 'internal scratch']
  %s0 = inlined_call_operand.vmem [shape: f32[32,144], index: 0, kind: input, shape index: {}]
  %s1 = inlined_call_operand.vmem [shape: f32[32,1], index: 1, kind: input, shape index: {}]
  %s2 = inlined_call_operand.vmem [shape: f32[144,242], index: 2, kind: input, shape index: {}]
  %s3 = inlined_call_operand.vmem [shape: f32[32,242], index: 3, kind: output, shape index: {}]
  %s4 = sld [smem:[#allocation0]]
  $region22: #{actor_forward.7} parent=0
    _
  %s6 = ssub.s32 1, %s4
  %s7 = scalar_select 0, %s6, %s4
  // Predicated region
  $region2: #{actor_forward.7} parent=0 // pred_check
    _
  $region3: #{actor_forward.7} parent=0 // pred_check_branch
    %9 = sbr.rel (0) target = $region5
  $region4: #{actor_forward.7} parent=0 // pred_region
    _
  $region5: #{actor_forward.7} parent=0 // pred_fallthru
    _
  // Predicated region
  $region6: #{actor_forward.7} parent=0 // pred_check
    _
  $region7: #{actor_forward.7} parent=0 // pred_check_branch
    %11 = sbr.rel (0) target = $region9
  $region8: #{actor_forward.7} parent=0 // pred_region
    _
  $region9: #{actor_forward.7} parent=0 // pred_fallthru
    _
  // Predicated region
  $region10: #{actor_forward.7} parent=0 // pred_check
    _
  $region11: #{actor_forward.7} parent=0 // pred_check_branch
    %13 = sbr.rel (0) target = $region13
  $region12: #{actor_forward.7} parent=0 // pred_region
    _
  $region13: #{actor_forward.7} parent=0 // pred_fallthru
    _
  %v15 = vld [vmem:[%s0] sm:$0xff]
  %v16 = vld [vmem:[%s0 + $0x8] sm:$0xff]
  %v17 = vld [vmem:[%s0 + $0x10] sm:$0xff]
  %v18 = vld [vmem:[%s0 + $0x18] sm:$0xff]
  %v19 = vld [vmem:[%s0 + $0x20] sm:$0xff]
  %v20 = vld [vmem:[%s0 + $0x28] sm:$0xff]
  %v21 = vld [vmem:[%s0 + $0x30] sm:$0xff]
  %v22 = vld [vmem:[%s0 + $0x38] sm:$0xff]
  %v23 = vpack.c.bf16 %v17, %v15
  %v24 = vpack.c.bf16 %v18, %v16
  %v25 = vpack.c.bf16 %v21, %v19
  %v26 = vpack.c.bf16 %v22, %v20
  %v27 = vld [vmem:[%s2] sm:$0xff]
  %v28 = vld [vmem:[%s2 + $0x8] sm:$0xff]
  %v29 = vld [vmem:[%s2 + $0x10] sm:$0xff]
  %v30 = vld [vmem:[%s2 + $0x18] sm:$0xff]
  %v31 = vld [vmem:[%s2 + $0x20] sm:$0xff]
  %v32 = vld [vmem:[%s2 + $0x28] sm:$0xff]
  %v33 = vld [vmem:[%s2 + $0x30] sm:$0xff]
  %v34 = vld [vmem:[%s2 + $0x38] sm:$0xff]
  %v35 = vld [vmem:[%s2 + $0x40] sm:$0xff]
  %v36 = vld [vmem:[%s2 + $0x48] sm:$0xff]
  %v37 = vld [vmem:[%s2 + $0x50] sm:$0xff]
  %v38 = vld [vmem:[%s2 + $0x58] sm:$0xff]
  %v39 = vld [vmem:[%s2 + $0x60] sm:$0xff]
  %v40 = vld [vmem:[%s2 + $0x68] sm:$0xff]
  %v41 = vld [vmem:[%s2 + $0x70] sm:$0xff]
  %v42 = vld [vmem:[%s2 + $0x78] sm:$0xff]
  %v43 = vld [vmem:[%s2 + $0x80] sm:$0xff]
  %v44 = vld [vmem:[%s2 + $0x88] sm:$0xff]
  %v45 = vld [vmem:[%s2 + $0x90] sm:$0xff]
  %v46 = vld [vmem:[%s2 + $0x98] sm:$0xff]
  %v47 = vld [vmem:[%s2 + $0xa0] sm:$0xff]
  %v48 = vld [vmem:[%s2 + $0xa8] sm:$0xff]
  %v49 = vld [vmem:[%s2 + $0xb0] sm:$0xff]
  %v50 = vld [vmem:[%s2 + $0xb8] sm:$0xff]
  %v51 = vld [vmem:[%s2 + $0xc0] sm:$0xff]
  %v52 = vld [vmem:[%s2 + $0xc8] sm:$0xff]
  %v53 = vld [vmem:[%s2 + $0xd0] sm:$0xff]
  %v54 = vld [vmem:[%s2 + $0xd8] sm:$0xff]
  %v55 = vld [vmem:[%s2 + $0xe0] sm:$0xff]
  %v56 = vld [vmem:[%s2 + $0xe8] sm:$0xff]
  %v57 = vld [vmem:[%s2 + $0xf0] sm:$0xff]
  %v58 = vld [vmem:[%s2 + $0xf8] sm:$0xff]
  %v59 = vld [vmem:[%s2 + $0x100] sm:$0xff]
  %v60 = vld [vmem:[%s2 + $0x108] sm:$0xff]
  %v61 = vld [vmem:[%s2 + $0x110] sm:$0xff]
  %v62 = vld [vmem:[%s2 + $0x118] sm:$0xff]
  %v63 = vpack.c.bf16 %v29, %v27
  %v64 = vpack.c.bf16 %v30, %v28
  %v65 = vpack.c.bf16 %v33, %v31
  %v66 = vpack.c.bf16 %v34, %v32
  %v67 = vpack.c.bf16 %v37, %v35
  %v68 = vpack.c.bf16 %v38, %v36
  %v69 = vpack.c.bf16 %v41, %v39
  %v70 = vpack.c.bf16 %v42, %v40
  %v71 = vpack.c.bf16 %v45, %v43
  %v72 = vpack.c.bf16 %v46, %v44
  %v73 = vpack.c.bf16 %v49, %v47
  %v74 = vpack.c.bf16 %v50, %v48
  %v75 = vpack.c.bf16 %v53, %v51
  %v76 = vpack.c.bf16 %v54, %v52
  %v77 = vpack.c.bf16 %v57, %v55
  %v78 = vpack.c.bf16 %v58, %v56
  %v79 = vpack.c.bf16 %v61, %v59
  %v80 = vpack.c.bf16 %v62, %v60
  %v81 = vld [vmem:[%s1] sm:$0xff]
  %v82 = vld [vmem:[%s1 + $0x8] sm:$0xff]
  %v83 = vld [vmem:[%s1 + $0x10] sm:$0xff]
  %v84 = vld [vmem:[%s1 + $0x18] sm:$0xff]
  %86 = vset.pattern.permute.xlu0 0
  %87 = vperm.xlu0 %86, %v81
  %v88 = vpop.permute.xlu0 %87
  %91 = vset.pattern.permute.xlu0 0
  %92 = vperm.xlu0 %91, %v82
  %v93 = vpop.permute.xlu0 %92
  %96 = vset.pattern.permute.xlu0 0
  %97 = vperm.xlu0 %96, %v83
  %v98 = vpop.permute.xlu0 %97
  %101 = vset.pattern.permute.xlu0 0
  %102 = vperm.xlu0 %101, %v84
  %v103 = vpop.permute.xlu0 %102
  %vm105 = vcmask 130048
  %v107 = vsel %vm105, %v24, 0
  %v110 = vsel %vm105, %v26, 0
  %112 = vmatprep.subr.bf16.mxu0 %v78
  %113 = vmatpush1.bf16.msra.mxu0 %v77
  %114 = vmatprep.subr.bf16.mxu0 %v76
  %115 = vmatpush1.bf16.msra.mxu0 %v75
  %116 = vmatprep.subr.bf16.mxu0 %v74
  %117 = vmatpush1.bf16.msra.mxu0 %v73
  %118 = vmatprep.subr.bf16.mxu0 %v72
  %119 = vmatpush1.bf16.msra.mxu0 %v71
  %120 = vmatprep.subr.bf16.mxu0 %v70
  %121 = vmatpush1.bf16.msra.mxu0 %v69
  %122 = vmatprep.subr.bf16.mxu0 %v68
  %123 = vmatpush1.bf16.msra.mxu0 %v67
  %124 = vmatprep.subr.bf16.mxu0 %v66
  %125 = vmatpush1.bf16.msra.mxu0 %v65
  %126 = vmatprep.subr.bf16.mxu0 %v64
  %127 = vmatpush1.bf16.msra.mxu0 %v63
  %128 = vmatprep.subr.bf16.mxu0 0
  %129 = vmatpush2.bf16.msra.mxu0 0
  %130 = vmatprep.subr.bf16.mxu0 0
  %131 = vmatpush2.bf16.msra.mxu0 0
  %132 = vmatprep.subr.bf16.mxu0 0
  %133 = vmatpush2.bf16.msra.mxu0 0
  %134 = vmatprep.subr.bf16.mxu0 0
  %135 = vmatpush2.bf16.msra.mxu0 0
  %136 = vmatprep.subr.bf16.mxu0 0
  %137 = vmatpush2.bf16.msra.mxu0 0
  %138 = vmatprep.subr.bf16.mxu0 0
  %139 = vmatpush2.bf16.msra.mxu0 0
  %140 = vmatprep.subr.bf16.mxu0 0
  %141 = vmatpush2.bf16.msra.mxu0 0
  %142 = vmatprep.subr.bf16.mxu0 %v80
  %143 = vmatpush2.bf16.msra.mxu0 %v79
  %144 = vmatprep.mubr.bf16.mxu0 %v107
  %145 = vmatmul.mubr.bf16.gmra.mxu0 %v23
  %v146 = vpop.f32.mrf.mxu0
  %v147 = vadd.f32 %v88, %v146
  %v148 = vpop.f32.mrf.mxu0
  %v149 = vadd.f32 %v88, %v148
  %v150 = vpop.f32.mrf.mxu0
  %v151 = vadd.f32 %v93, %v150
  %v152 = vpop.f32.mrf.mxu0
  %v153 = vadd.f32 %v93, %v152
  %154 = vmatprep.mubr.bf16.mxu0 %v110
  %155 = vmatmul.mubr.bf16.gmra.mxu0 %v25
  %v156 = vpop.f32.mrf.mxu0
  %v157 = vadd.f32 %v98, %v156
  %v158 = vpop.f32.mrf.mxu0
  %v159 = vadd.f32 %v98, %v158
  %v160 = vpop.f32.mrf.mxu0
  %v161 = vadd.f32 %v103, %v160
  %v162 = vpop.f32.mrf.mxu0
  %v163 = vadd.f32 %v103, %v162
  %164 = vdwg.mxu0
  %v165 = vmax.f32 %v147, 0.0
  %v166 = vmax.f32 %v149, 0.0
  %v167 = vmax.f32 %v151, 0.0
  %v168 = vmax.f32 %v153, 0.0
  %v169 = vmax.f32 %v157, 0.0
  %v170 = vmax.f32 %v159, 0.0
  %v171 = vmax.f32 %v161, 0.0
  %v172 = vmax.f32 %v163, 0.0
  %173 = vst [vmem:[%s3] sm:$0xff] %v165
  %174 = vst [vmem:[%s3 + $0x8] sm:$0xff] %v166
  %175 = vst [vmem:[%s3 + $0x10] sm:$0xff] %v167
  %176 = vst [vmem:[%s3 + $0x18] sm:$0xff] %v168
  %177 = vst [vmem:[%s3 + $0x20] sm:$0xff] %v169
  %178 = vst [vmem:[%s3 + $0x28] sm:$0xff] %v170
  %179 = vst [vmem:[%s3 + $0x30] sm:$0xff] %v171
  %180 = vst [vmem:[%s3 + $0x38] sm:$0xff] %v172
  // Predicated region
  $region14: #{actor_forward.7} parent=0 // pred_check
    _
  $region15: #{actor_forward.7} parent=0 // pred_check_branch
    %182 = sbr.rel (0) target = $region17
  $region16: #{actor_forward.7} parent=0 // pred_region
    _
  $region17: #{actor_forward.7} parent=0 // pred_fallthru
    _
  // Predicated region
  $region18: #{actor_forward.7} parent=0 // pred_check
    _
  $region19: #{actor_forward.7} parent=0 // pred_check_branch
    %184 = sbr.rel (0) target = $region21
  $region20: #{actor_forward.7} parent=0 // pred_region
    _
  $region21: #{actor_forward.7} parent=0 // pred_fallthru
    _

// kernel: actor_forward.8
$region0: #{actor_forward.8}
  #allocation0 [shape = 'u32[]', space=smem, size = 0x4, offset = 0x4, fixed_abs, tag = 'smem constant byte address 0x4 - core index']
  #allocation1 [shape = 'u32[144,128]{1,0:T(1,128)}', space=vmem, size = 0x12000, scoped, tag = 'internal scratch']
  %s0 = inlined_call_operand.vmem [shape: f32[64,288], index: 0, kind: input, shape index: {}]
  %s1 = inlined_call_operand.vmem [shape: f32[64,1], index: 1, kind: input, shape index: {}]
  %s2 = inlined_call_operand.vmem [shape: f32[288,50], index: 2, kind: input, shape index: {}]
  %s3 = inlined_call_operand.vmem [shape: f32[64,50], index: 3, kind: output, shape index: {}]
  %s4 = sld [smem:[#allocation0]]
  $region22: #{actor_forward.8} parent=0
    _
  %s6 = ssub.s32 1, %s4
  %s7 = scalar_select 0, %s6, %s4
  // Predicated region
  $region2: #{actor_forward.8} parent=0 // pred_check
    _
  $region3: #{actor_forward.8} parent=0 // pred_check_branch
    %9 = sbr.rel (0) target = $region5
  $region4: #{actor_forward.8} parent=0 // pred_region
    _
  $region5: #{actor_forward.8} parent=0 // pred_fallthru
    _
  // Predicated region
  $region6: #{actor_forward.8} parent=0 // pred_check
    _
  $region7: #{actor_forward.8} parent=0 // pred_check_branch
    %11 = sbr.rel (0) target = $region9
  $region8: #{actor_forward.8} parent=0 // pred_region
    _
  $region9: #{actor_forward.8} parent=0 // pred_fallthru
    _
  // Predicated region
  $region10: #{actor_forward.8} parent=0 // pred_check
    _
  $region11: #{actor_forward.8} parent=0 // pred_check_branch
    %13 = sbr.rel (0) target = $region13
  $region12: #{actor_forward.8} parent=0 // pred_region
    _
  $region13: #{actor_forward.8} parent=0 // pred_fallthru
    _
  %v15 = vld [vmem:[%s0] sm:$0xff]
  %v16 = vld [vmem:[%s0 + $0x8] sm:$0xff]
  %v17 = vld [vmem:[%s0 + $0x10] sm:$0xff]
  %v18 = vld [vmem:[%s0 + $0x18] sm:$0xff]
  %v19 = vld [vmem:[%s0 + $0x20] sm:$0xff]
  %v20 = vld [vmem:[%s0 + $0x28] sm:$0xff]
  %v21 = vld [vmem:[%s0 + $0x30] sm:$0xff]
  %v22 = vld [vmem:[%s0 + $0x38] sm:$0xff]
  %v23 = vld [vmem:[%s0 + $0x40] sm:$0xff]
  %v24 = vld [vmem:[%s0 + $0x48] sm:$0xff]
  %v25 = vld [vmem:[%s0 + $0x50] sm:$0xff]
  %v26 = vld [vmem:[%s0 + $0x58] sm:$0xff]
  %v27 = vld [vmem:[%s0 + $0x60] sm:$0xff]
  %v28 = vld [vmem:[%s0 + $0x68] sm:$0xff]
  %v29 = vld [vmem:[%s0 + $0x70] sm:$0xff]
  %v30 = vld [vmem:[%s0 + $0x78] sm:$0xff]
  %v31 = vld [vmem:[%s0 + $0x80] sm:$0xff]
  %v32 = vld [vmem:[%s0 + $0x88] sm:$0xff]
  %v33 = vld [vmem:[%s0 + $0x90] sm:$0xff]
  %v34 = vld [vmem:[%s0 + $0x98] sm:$0xff]
  %v35 = vld [vmem:[%s0 + $0xa0] sm:$0xff]
  %v36 = vld [vmem:[%s0 + $0xa8] sm:$0xff]
  %v37 = vld [vmem:[%s0 + $0xb0] sm:$0xff]
  %v38 = vld [vmem:[%s0 + $0xb8] sm:$0xff]
  %v39 = vpack.c.bf16 %v18, %v15
  %v40 = vpack.c.bf16 %v19, %v16
  %v41 = vpack.c.bf16 %v20, %v17
  %v42 = vpack.c.bf16 %v24, %v21
  %v43 = vpack.c.bf16 %v25, %v22
  %v44 = vpack.c.bf16 %v26, %v23
  %v45 = vpack.c.bf16 %v30, %v27
  %v46 = vpack.c.bf16 %v31, %v28
  %v47 = vpack.c.bf16 %v32, %v29
  %v48 = vpack.c.bf16 %v36, %v33
  %v49 = vpack.c.bf16 %v37, %v34
  %v50 = vpack.c.bf16 %v38, %v35
  %v51 = vld [vmem:[%s2] sm:$0xff]
  %v52 = vld [vmem:[%s2 + $0x8] sm:$0xff]
  %v53 = vld [vmem:[%s2 + $0x10] sm:$0xff]
  %v54 = vld [vmem:[%s2 + $0x18] sm:$0xff]
  %v55 = vld [vmem:[%s2 + $0x20] sm:$0xff]
  %v56 = vld [vmem:[%s2 + $0x28] sm:$0xff]
  %v57 = vld [vmem:[%s2 + $0x30] sm:$0xff]
  %v58 = vld [vmem:[%s2 + $0x38] sm:$0xff]
  %v59 = vld [vmem:[%s2 + $0x40] sm:$0xff]
  %v60 = vld [vmem:[%s2 + $0x48] sm:$0xff]
  %v61 = vld [vmem:[%s2 + $0x50] sm:$0xff]
  %v62 = vld [vmem:[%s2 + $0x58] sm:$0xff]
  %v63 = vld [vmem:[%s2 + $0x60] sm:$0xff]
  %v64 = vld [vmem:[%s2 + $0x68] sm:$0xff]
  %v65 = vld [vmem:[%s2 + $0x70] sm:$0xff]
  %v66 = vld [vmem:[%s2 + $0x78] sm:$0xff]
  %v67 = vld [vmem:[%s2 + $0x80] sm:$0xff]
  %v68 = vld [vmem:[%s2 + $0x88] sm:$0xff]
  %v69 = vld [vmem:[%s2 + $0x90] sm:$0xff]
  %v70 = vld [vmem:[%s2 + $0x98] sm:$0xff]
  %v71 = vld [vmem:[%s2 + $0xa0] sm:$0xff]
  %v72 = vld [vmem:[%s2 + $0xa8] sm:$0xff]
  %v73 = vld [vmem:[%s2 + $0xb0] sm:$0xff]
  %v74 = vld [vmem:[%s2 + $0xb8] sm:$0xff]
  %v75 = vld [vmem:[%s2 + $0xc0] sm:$0xff]
  %v76 = vld [vmem:[%s2 + $0xc8] sm:$0xff]
  %v77 = vld [vmem:[%s2 + $0xd0] sm:$0xff]
  %v78 = vld [vmem:[%s2 + $0xd8] sm:$0xff]
  %v79 = vld [vmem:[%s2 + $0xe0] sm:$0xff]
  %v80 = vld [vmem:[%s2 + $0xe8] sm:$0xff]
  %v81 = vld [vmem:[%s2 + $0xf0] sm:$0xff]
  %v82 = vld [vmem:[%s2 + $0xf8] sm:$0xff]
  %v83 = vld [vmem:[%s2 + $0x100] sm:$0xff]
  %v84 = vld [vmem:[%s2 + $0x108] sm:$0xff]
  %v85 = vld [vmem:[%s2 + $0x110] sm:$0xff]
  %v86 = vld [vmem:[%s2 + $0x118] sm:$0xff]
  %v87 = vpack.c.bf16 %v52, %v51
  %v88 = vpack.c.bf16 %v54, %v53
  %v89 = vpack.c.bf16 %v56, %v55
  %v90 = vpack.c.bf16 %v58, %v57
  %v91 = vpack.c.bf16 %v60, %v59
  %v92 = vpack.c.bf16 %v62, %v61
  %v93 = vpack.c.bf16 %v64, %v63
  %v94 = vpack.c.bf16 %v66, %v65
  %v95 = vpack.c.bf16 %v68, %v67
  %v96 = vpack.c.bf16 %v70, %v69
  %v97 = vpack.c.bf16 %v72, %v71
  %v98 = vpack.c.bf16 %v74, %v73
  %v99 = vpack.c.bf16 %v76, %v75
  %v100 = vpack.c.bf16 %v78, %v77
  %v101 = vpack.c.bf16 %v80, %v79
  %v102 = vpack.c.bf16 %v82, %v81
  %v103 = vpack.c.bf16 %v84, %v83
  %v104 = vpack.c.bf16 %v86, %v85
  %v105 = vld [vmem:[%s1] sm:$0xff]
  %v106 = vld [vmem:[%s1 + $0x8] sm:$0xff]
  %v107 = vld [vmem:[%s1 + $0x10] sm:$0xff]
  %v108 = vld [vmem:[%s1 + $0x18] sm:$0xff]
  %v109 = vld [vmem:[%s1 + $0x20] sm:$0xff]
  %v110 = vld [vmem:[%s1 + $0x28] sm:$0xff]
  %v111 = vld [vmem:[%s1 + $0x30] sm:$0xff]
  %v112 = vld [vmem:[%s1 + $0x38] sm:$0xff]
  %114 = vset.pattern.permute.xlu0 0
  %115 = vperm.xlu0 %114, %v105
  %v116 = vpop.permute.xlu0 %115
  %119 = vset.pattern.permute.xlu0 0
  %120 = vperm.xlu0 %119, %v106
  %v121 = vpop.permute.xlu0 %120
  %124 = vset.pattern.permute.xlu0 0
  %125 = vperm.xlu0 %124, %v107
  %v126 = vpop.permute.xlu0 %125
  %129 = vset.pattern.permute.xlu0 0
  %130 = vperm.xlu0 %129, %v108
  %v131 = vpop.permute.xlu0 %130
  %134 = vset.pattern.permute.xlu0 0
  %135 = vperm.xlu0 %134, %v109
  %v136 = vpop.permute.xlu0 %135
  %139 = vset.pattern.permute.xlu0 0
  %140 = vperm.xlu0 %139, %v110
  %v141 = vpop.permute.xlu0 %140
  %144 = vset.pattern.permute.xlu0 0
  %145 = vperm.xlu0 %144, %v111
  %v146 = vpop.permute.xlu0 %145
  %149 = vset.pattern.permute.xlu0 0
  %150 = vperm.xlu0 %149, %v112
  %v151 = vpop.permute.xlu0 %150
  %vm153 = vcmask 261120
  %v155 = vsel %vm153, %v41, 0
  %v158 = vsel %vm153, %v44, 0
  %v161 = vsel %vm153, %v47, 0
  %v164 = vsel %vm153, %v50, 0
  %166 = vmatprep.subr.bf16.mxu0 0
  %167 = vmatpush1.bf16.msra.mxu0 %v94
  %168 = vmatprep.subr.bf16.mxu0 0
  %169 = vmatpush1.bf16.msra.mxu0 %v93
  %170 = vmatprep.subr.bf16.mxu0 0
  %171 = vmatpush1.bf16.msra.mxu0 %v92
  %172 = vmatprep.subr.bf16.mxu0 0
  %173 = vmatpush1.bf16.msra.mxu0 %v91
  %174 = vmatprep.subr.bf16.mxu0 0
  %175 = vmatpush1.bf16.msra.mxu0 %v90
  %176 = vmatprep.subr.bf16.mxu0 0
  %177 = vmatpush1.bf16.msra.mxu0 %v89
  %178 = vmatprep.subr.bf16.mxu0 0
  %179 = vmatpush1.bf16.msra.mxu0 %v88
  %180 = vmatprep.subr.bf16.mxu0 0
  %181 = vmatpush1.bf16.msra.mxu0 %v87
  %182 = vmatprep.subr.bf16.mxu0 0
  %183 = vmatpush2.bf16.msra.mxu0 %v102
  %184 = vmatprep.subr.bf16.mxu0 0
  %185 = vmatpush2.bf16.msra.mxu0 %v101
  %186 = vmatprep.subr.bf16.mxu0 0
  %187 = vmatpush2.bf16.msra.mxu0 %v100
  %188 = vmatprep.subr.bf16.mxu0 0
  %189 = vmatpush2.bf16.msra.mxu0 %v99
  %190 = vmatprep.subr.bf16.mxu0 0
  %191 = vmatpush2.bf16.msra.mxu0 %v98
  %192 = vmatprep.subr.bf16.mxu0 0
  %193 = vmatpush2.bf16.msra.mxu0 %v97
  %194 = vmatprep.subr.bf16.mxu0 0
  %195 = vmatpush2.bf16.msra.mxu0 %v96
  %196 = vmatprep.subr.bf16.mxu0 0
  %197 = vmatpush2.bf16.msra.mxu0 %v95
  %198 = vmatprep.mubr.bf16.mxu0 %v40
  %199 = vmatmul.mubr.bf16.gmra.mxu0 %v39
  %v200 = vpop.f32.mrf.mxu0
  %v201 = vadd.f32 %v116, %v200
  %v202 = vpop.f32.mrf.mxu0
  %v203 = vpop.f32.mrf.mxu0
  %v204 = vadd.f32 %v121, %v203
  %v205 = vpop.f32.mrf.mxu0
  %206 = vmatprep.mubr.bf16.mxu0 %v43
  %207 = vmatmul.mubr.bf16.gmra.mxu0 %v42
  %v208 = vpop.f32.mrf.mxu0
  %v209 = vadd.f32 %v126, %v208
  %v210 = vpop.f32.mrf.mxu0
  %v211 = vpop.f32.mrf.mxu0
  %v212 = vadd.f32 %v131, %v211
  %v213 = vpop.f32.mrf.mxu0
  %214 = vmatprep.mubr.bf16.mxu0 %v46
  %215 = vmatmul.mubr.bf16.gmra.mxu0 %v45
  %v216 = vpop.f32.mrf.mxu0
  %v217 = vadd.f32 %v136, %v216
  %v218 = vpop.f32.mrf.mxu0
  %v219 = vpop.f32.mrf.mxu0
  %v220 = vadd.f32 %v141, %v219
  %v221 = vpop.f32.mrf.mxu0
  %222 = vmatprep.mubr.bf16.mxu0 %v49
  %223 = vmatmul.mubr.bf16.gmra.mxu0 %v48
  %v224 = vpop.f32.mrf.mxu0
  %v225 = vadd.f32 %v146, %v224
  %v226 = vpop.f32.mrf.mxu0
  %v227 = vpop.f32.mrf.mxu0
  %v228 = vadd.f32 %v151, %v227
  %v229 = vpop.f32.mrf.mxu0
  %230 = vdwg.mxu0
  %231 = vmatprep.subr.bf16.mxu0 0
  %232 = vmatpush1.bf16.msra.mxu0 0
  %233 = vmatprep.subr.bf16.mxu0 0
  %234 = vmatpush1.bf16.msra.mxu0 0
  %235 = vmatprep.subr.bf16.mxu0 0
  %236 = vmatpush1.bf16.msra.mxu0 0
  %237 = vmatprep.subr.bf16.mxu0 0
  %238 = vmatpush1.bf16.msra.mxu0 0
  %239 = vmatprep.subr.bf16.mxu0 0
  %240 = vmatpush1.bf16.msra.mxu0 0
  %241 = vmatprep.subr.bf16.mxu0 0
  %242 = vmatpush1.bf16.msra.mxu0 0
  %243 = vmatprep.subr.bf16.mxu0 0
  %244 = vmatpush1.bf16.msra.mxu0 %v104
  %245 = vmatprep.subr.bf16.mxu0 0
  %246 = vmatpush1.bf16.msra.mxu0 %v103
  %247 = vmatprep.subr.bf16.mxu0 0
  %248 = vmatpush2.bf16.msra.mxu0 0
  %249 = vmatprep.subr.bf16.mxu0 0
  %250 = vmatpush2.bf16.msra.mxu0 0
  %251 = vmatprep.subr.bf16.mxu0 0
  %252 = vmatpush2.bf16.msra.mxu0 0
  %253 = vmatprep.subr.bf16.mxu0 0
  %254 = vmatpush2.bf16.msra.mxu0 0
  %255 = vmatprep.subr.bf16.mxu0 0
  %256 = vmatpush2.bf16.msra.mxu0 0
  %257 = vmatprep.subr.bf16.mxu0 0
  %258 = vmatpush2.bf16.msra.mxu0 0
  %259 = vmatprep.subr.bf16.mxu0 0
  %260 = vmatpush2.bf16.msra.mxu0 0
  %261 = vmatprep.subr.bf16.mxu0 0
  %262 = vmatpush2.bf16.msra.mxu0 0
  %263 = vmatprep.mubr.bf16.mxu0 0
  %264 = vmatmul.mubr.bf16.gmra.mxu0 %v155
  %v265 = vpop.f32.mrf.mxu0
  %v266 = vadd.f32 %v201, %v265
  %v267 = vpop.f32.mrf.mxu0
  %v268 = vpop.f32.mrf.mxu0
  %v269 = vadd.f32 %v204, %v268
  %v270 = vpop.f32.mrf.mxu0
  %271 = vmatprep.mubr.bf16.mxu0 0
  %272 = vmatmul.mubr.bf16.gmra.mxu0 %v158
  %v273 = vpop.f32.mrf.mxu0
  %v274 = vadd.f32 %v209, %v273
  %v275 = vpop.f32.mrf.mxu0
  %v276 = vpop.f32.mrf.mxu0
  %v277 = vadd.f32 %v212, %v276
  %v278 = vpop.f32.mrf.mxu0
  %279 = vmatprep.mubr.bf16.mxu0 0
  %280 = vmatmul.mubr.bf16.gmra.mxu0 %v161
  %v281 = vpop.f32.mrf.mxu0
  %v282 = vadd.f32 %v217, %v281
  %v283 = vpop.f32.mrf.mxu0
  %v284 = vpop.f32.mrf.mxu0
  %v285 = vadd.f32 %v220, %v284
  %v286 = vpop.f32.mrf.mxu0
  %287 = vmatprep.mubr.bf16.mxu0 0
  %288 = vmatmul.mubr.bf16.gmra.mxu0 %v164
  %v289 = vpop.f32.mrf.mxu0
  %v290 = vadd.f32 %v225, %v289
  %v291 = vpop.f32.mrf.mxu0
  %v292 = vpop.f32.mrf.mxu0
  %v293 = vadd.f32 %v228, %v292
  %v294 = vpop.f32.mrf.mxu0
  %295 = vdwg.mxu0
  %v296 = vmax.f32 %v266, 0.0
  %v297 = vmax.f32 %v269, 0.0
  %v298 = vmax.f32 %v274, 0.0
  %v299 = vmax.f32 %v277, 0.0
  %v300 = vmax.f32 %v282, 0.0
  %v301 = vmax.f32 %v285, 0.0
  %v302 = vmax.f32 %v290, 0.0
  %v303 = vmax.f32 %v293, 0.0
  %304 = vst [vmem:[%s3] sm:$0xff] %v296
  %305 = vst [vmem:[%s3 + $0x8] sm:$0xff] %v297
  %306 = vst [vmem:[%s3 + $0x10] sm:$0xff] %v298
  %307 = vst [vmem:[%s3 + $0x18] sm:$0xff] %v299
  %308 = vst [vmem:[%s3 + $0x20] sm:$0xff] %v300
  %309 = vst [vmem:[%s3 + $0x28] sm:$0xff] %v301
  %310 = vst [vmem:[%s3 + $0x30] sm:$0xff] %v302
  %311 = vst [vmem:[%s3 + $0x38] sm:$0xff] %v303
  // Predicated region
  $region14: #{actor_forward.8} parent=0 // pred_check
    _
  $region15: #{actor_forward.8} parent=0 // pred_check_branch
    %313 = sbr.rel (0) target = $region17
  $region16: #{actor_forward.8} parent=0 // pred_region
    _
  $region17: #{actor_forward.8} parent=0 // pred_fallthru
    _
  // Predicated region
  $region18: #{actor_forward.8} parent=0 // pred_check
    _
  $region19: #{actor_forward.8} parent=0 // pred_check_branch
    %315 = sbr.rel (0) target = $region21
  $region20: #{actor_forward.8} parent=0 // pred_region
    _
  $region21: #{actor_forward.8} parent=0 // pred_fallthru
    _

// kernel: actor_forward.9
$region0: #{actor_forward.9}
  #allocation0 [shape = 'u32[]', space=smem, size = 0x4, offset = 0x4, fixed_abs, tag = 'smem constant byte address 0x4 - core index']
  #allocation1 [shape = 'u32[144,128]{1,0:T(1,128)}', space=vmem, size = 0x12000, scoped, tag = 'internal scratch']
  %s0 = inlined_call_operand.vmem [shape: f32[18,576], index: 0, kind: input, shape index: {}]
  %s1 = inlined_call_operand.vmem [shape: f32[576,128], index: 1, kind: input, shape index: {}]
  %s2 = inlined_call_operand.vmem [shape: f32[1,128], index: 2, kind: input, shape index: {}]
  %s3 = inlined_call_operand.vmem [shape: f32[9,128,256], index: 3, kind: input, shape index: {}]
  %s4 = inlined_call_operand.vmem [shape: f32[1,256], index: 4, kind: input, shape index: {}]
  %s5 = inlined_call_operand.vmem [shape: f32[256,100], index: 5, kind: input, shape index: {}]
  %s6 = inlined_call_operand.vmem [shape: f32[1,100], index: 6, kind: input, shape index: {}]
  %s7 = inlined_call_operand.vmem [shape: f32[100,3], index: 7, kind: input, shape index: {}]
  %s8 = inlined_call_operand.vmem [shape: f32[1,3], index: 8, kind: input, shape index: {}]
  %s9 = inlined_call_operand.hbm [shape: f32[2,3], index: 9, kind: output, shape index: {}]
  %s10 = sld [smem:[#allocation0]]
  $region46: #{actor_forward.9} parent=0
    _
  %s12 = ssub.s32 1, %s10
  %s13 = scalar_select 0, %s12, %s10
  $region1: #{actor_forward.9} parent=0
    #allocation2 [shape = 'u8[1024]{0}', space=vmem, size = 0x400, scoped, tag = 'output window, operand 0, single buffered']
    #allocation3 [shape = 's32[1]{0}', space=sflag, size = 0x4, scoped, tag = 'scoped memory for actor_forward.9']
    %14 = vsyncpa [#allocation3], 0
    // Predicated region
    $region2: #{actor_forward.9} parent=1 // pred_check
      _
    $region3: #{actor_forward.9} parent=1 // pred_check_branch
      %16 = sbr.rel (0) target = $region5
    $region4: #{actor_forward.9} parent=1 // pred_region
      _
    $region5: #{actor_forward.9} parent=1 // pred_fallthru
      _
    // Predicated region
    $region6: #{actor_forward.9} parent=1 // pred_check
      _
    $region7: #{actor_forward.9} parent=1 // pred_check_branch
      %18 = sbr.rel (0) target = $region9
    $region8: #{actor_forward.9} parent=1 // pred_region
      _
    $region9: #{actor_forward.9} parent=1 // pred_fallthru
      _
    // Predicated region
    $region10: #{actor_forward.9} parent=1 // pred_check
      _
    $region11: #{actor_forward.9} parent=1 // pred_check_branch
      %20 = sbr.rel (0) target = $region13
    $region12: #{actor_forward.9} parent=1 // pred_region
      _
    $region13: #{actor_forward.9} parent=1 // pred_fallthru
      _
    // Predicated region
    $region14: #{actor_forward.9} parent=1 // pred_check
      _
    $region15: #{actor_forward.9} parent=1 // pred_check_branch
      %22 = sbr.rel (0) target = $region17
    $region16: #{actor_forward.9} parent=1 // pred_region
      _
    $region17: #{actor_forward.9} parent=1 // pred_fallthru
      _
    // Predicated region
    $region18: #{actor_forward.9} parent=1 // pred_check
      _
    $region19: #{actor_forward.9} parent=1 // pred_check_branch
      %24 = sbr.rel (0) target = $region21
    $region20: #{actor_forward.9} parent=1 // pred_region
      _
    $region21: #{actor_forward.9} parent=1 // pred_fallthru
      _
    // Predicated region
    $region22: #{actor_forward.9} parent=1 // pred_check
      _
    $region23: #{actor_forward.9} parent=1 // pred_check_branch
      %26 = sbr.rel (0) target = $region25
    $region24: #{actor_forward.9} parent=1 // pred_region
      _
    $region25: #{actor_forward.9} parent=1 // pred_fallthru
      _
    // Predicated region
    $region26: #{actor_forward.9} parent=1 // pred_check
      _
    $region27: #{actor_forward.9} parent=1 // pred_check_branch
      %28 = sbr.rel (0) target = $region29
    $region28: #{actor_forward.9} parent=1 // pred_region
      _
    $region29: #{actor_forward.9} parent=1 // pred_fallthru
      _
    // Predicated region
    $region30: #{actor_forward.9} parent=1 // pred_check
      _
    $region31: #{actor_forward.9} parent=1 // pred_check_branch
      %30 = sbr.rel (0) target = $region33
    $region32: #{actor_forward.9} parent=1 // pred_region
      _
    $region33: #{actor_forward.9} parent=1 // pred_fallthru
      _
    // Predicated region
    $region34: #{actor_forward.9} parent=1 // pred_check
      _
    $region35: #{actor_forward.9} parent=1 // pred_check_branch
      %32 = sbr.rel (0) target = $region37
    $region36: #{actor_forward.9} parent=1 // pred_region
      _
    $region37: #{actor_forward.9} parent=1 // pred_fallthru
      _
    %v34 = vld [vmem:[%s0] sm:$0xff]
    %v35 = vld [vmem:[%s0 + $0x8] sm:$0xff]
    %v36 = vld [vmem:[%s0 + $0x10] sm:$0xff]
    %v37 = vld [vmem:[%s0 + $0x18] sm:$0xff]
    %v38 = vld [vmem:[%s0 + $0x20] sm:$0xff]
    %v39 = vld [vmem:[%s0 + $0x28] sm:$0xff]
    %v40 = vld [vmem:[%s0 + $0x30] sm:$0xff]
    %v41 = vld [vmem:[%s0 + $0x38] sm:$0xff]
    %v42 = vld [vmem:[%s0 + $0x40] sm:$0xff]
    %v43 = vld [vmem:[%s0 + $0x48] sm:$0xff]
    %v44 = vld [vmem:[%s0 + $0x50] sm:$0x3]
    %v45 = vld [vmem:[%s0 + $0x58] sm:$0x3]
    %v46 = vld [vmem:[%s0 + $0x60] sm:$0x3]
    %v47 = vld [vmem:[%s0 + $0x68] sm:$0x3]
    %v48 = vld [vmem:[%s0 + $0x70] sm:$0x3]
    %v49 = vpack.c.bf16 %v39, %v34
    %v50 = vpack.c.bf16 %v40, %v35
    %v51 = vpack.c.bf16 %v41, %v36
    %v52 = vpack.c.bf16 %v42, %v37
    %v53 = vpack.c.bf16 %v43, %v38
    %v54 = vpack.c.bf16 %v44, %v44
    %v55 = vpack.c.bf16 %v45, %v45
    %v56 = vpack.c.bf16 %v46, %v46
    %v57 = vpack.c.bf16 %v47, %v47
    %v58 = vpack.c.bf16 %v48, %v48
    %v59 = vld [vmem:[%s1] sm:$0xff]
    %v60 = vld [vmem:[%s1 + $0x8] sm:$0xff]
    %v61 = vld [vmem:[%s1 + $0x10] sm:$0xff]
    %v62 = vld [vmem:[%s1 + $0x18] sm:$0xff]
    %v63 = vld [vmem:[%s1 + $0x20] sm:$0xff]
    %v64 = vld [vmem:[%s1 + $0x28] sm:$0xff]
    %v65 = vld [vmem:[%s1 + $0x30] sm:$0xff]
    %v66 = vld [vmem:[%s1 + $0x38] sm:$0xff]
    %v67 = vld [vmem:[%s1 + $0x40] sm:$0xff]
    %v68 = vld [vmem:[%s1 + $0x48] sm:$0xff]
    %v69 = vld [vmem:[%s1 + $0x50] sm:$0xff]
    %v70 = vld [vmem:[%s1 + $0x58] sm:$0xff]
    %v71 = vld [vmem:[%s1 + $0x60] sm:$0xff]
    %v72 = vld [vmem:[%s1 + $0x68] sm:$0xff]
    %v73 = vld [vmem:[%s1 + $0x70] sm:$0xff]
    %v74 = vld [vmem:[%s1 + $0x78] sm:$0xff]
    %v75 = vld [vmem:[%s1 + $0x80] sm:$0xff]
    %v76 = vld [vmem:[%s1 + $0x88] sm:$0xff]
    %v77 = vld [vmem:[%s1 + $0x90] sm:$0xff]
    %v78 = vld [vmem:[%s1 + $0x98] sm:$0xff]
    %v79 = vld [vmem:[%s1 + $0xa0] sm:$0xff]
    %v80 = vld [vmem:[%s1 + $0xa8] sm:$0xff]
    %v81 = vld [vmem:[%s1 + $0xb0] sm:$0xff]
    %v82 = vld [vmem:[%s1 + $0xb8] sm:$0xff]
    %v83 = vld [vmem:[%s1 + $0xc0] sm:$0xff]
    %v84 = vld [vmem:[%s1 + $0xc8] sm:$0xff]
    %v85 = vld [vmem:[%s1 + $0xd0] sm:$0xff]
    %v86 = vld [vmem:[%s1 + $0xd8] sm:$0xff]
    %v87 = vld [vmem:[%s1 + $0xe0] sm:$0xff]
    %v88 = vld [vmem:[%s1 + $0xe8] sm:$0xff]
    %v89 = vld [vmem:[%s1 + $0xf0] sm:$0xff]
    %v90 = vld [vmem:[%s1 + $0xf8] sm:$0xff]
    %v91 = vld [vmem:[%s1 + $0x100] sm:$0xff]
    %v92 = vld [vmem:[%s1 + $0x108] sm:$0xff]
    %v93 = vld [vmem:[%s1 + $0x110] sm:$0xff]
    %v94 = vld [vmem:[%s1 + $0x118] sm:$0xff]
    %v95 = vld [vmem:[%s1 + $0x120] sm:$0xff]
    %v96 = vld [vmem:[%s1 + $0x128] sm:$0xff]
    %v97 = vld [vmem:[%s1 + $0x130] sm:$0xff]
    %v98 = vld [vmem:[%s1 + $0x138] sm:$0xff]
    %v99 = vld [vmem:[%s1 + $0x140] sm:$0xff]
    %v100 = vld [vmem:[%s1 + $0x148] sm:$0xff]
    %v101 = vld [vmem:[%s1 + $0x150] sm:$0xff]
    %v102 = vld [vmem:[%s1 + $0x158] sm:$0xff]
    %v103 = vld [vmem:[%s1 + $0x160] sm:$0xff]
    %v104 = vld [vmem:[%s1 + $0x168] sm:$0xff]
    %v105 = vld [vmem:[%s1 + $0x170] sm:$0xff]
    %v106 = vld [vmem:[%s1 + $0x178] sm:$0xff]
    %v107 = vld [vmem:[%s1 + $0x180] sm:$0xff]
    %v108 = vld [vmem:[%s1 + $0x188] sm:$0xff]
    %v109 = vld [vmem:[%s1 + $0x190] sm:$0xff]
    %v110 = vld [vmem:[%s1 + $0x198] sm:$0xff]
    %v111 = vld [vmem:[%s1 + $0x1a0] sm:$0xff]
    %v112 = vld [vmem:[%s1 + $0x1a8] sm:$0xff]
    %v113 = vld [vmem:[%s1 + $0x1b0] sm:$0xff]
    %v114 = vld [vmem:[%s1 + $0x1b8] sm:$0xff]
    %v115 = vld [vmem:[%s1 + $0x1c0] sm:$0xff]
    %v116 = vld [vmem:[%s1 + $0x1c8] sm:$0xff]
    %v117 = vld [vmem:[%s1 + $0x1d0] sm:$0xff]
    %v118 = vld [vmem:[%s1 + $0x1d8] sm:$0xff]
    %v119 = vld [vmem:[%s1 + $0x1e0] sm:$0xff]
    %v120 = vld [vmem:[%s1 + $0x1e8] sm:$0xff]
    %v121 = vld [vmem:[%s1 + $0x1f0] sm:$0xff]
    %v122 = vld [vmem:[%s1 + $0x1f8] sm:$0xff]
    %v123 = vld [vmem:[%s1 + $0x200] sm:$0xff]
    %v124 = vld [vmem:[%s1 + $0x208] sm:$0xff]
    %v125 = vld [vmem:[%s1 + $0x210] sm:$0xff]
    %v126 = vld [vmem:[%s1 + $0x218] sm:$0xff]
    %v127 = vld [vmem:[%s1 + $0x220] sm:$0xff]
    %v128 = vld [vmem:[%s1 + $0x228] sm:$0xff]
    %v129 = vld [vmem:[%s1 + $0x230] sm:$0xff]
    %v130 = vld [vmem:[%s1 + $0x238] sm:$0xff]
    %v131 = vpack.c.bf16 %v60, %v59
    %v132 = vpack.c.bf16 %v62, %v61
    %v133 = vpack.c.bf16 %v64, %v63
    %v134 = vpack.c.bf16 %v66, %v65
    %v135 = vpack.c.bf16 %v68, %v67
    %v136 = vpack.c.bf16 %v70, %v69
    %v137 = vpack.c.bf16 %v72, %v71
    %v138 = vpack.c.bf16 %v74, %v73
    %v139 = vpack.c.bf16 %v76, %v75
    %v140 = vpack.c.bf16 %v78, %v77
    %v141 = vpack.c.bf16 %v80, %v79
    %v142 = vpack.c.bf16 %v82, %v81
    %v143 = vpack.c.bf16 %v84, %v83
    %v144 = vpack.c.bf16 %v86, %v85
    %v145 = vpack.c.bf16 %v88, %v87
    %v146 = vpack.c.bf16 %v90, %v89
    %v147 = vpack.c.bf16 %v92, %v91
    %v148 = vpack.c.bf16 %v94, %v93
    %v149 = vpack.c.bf16 %v96, %v95
    %v150 = vpack.c.bf16 %v98, %v97
    %v151 = vpack.c.bf16 %v100, %v99
    %v152 = vpack.c.bf16 %v102, %v101
    %v153 = vpack.c.bf16 %v104, %v103
    %v154 = vpack.c.bf16 %v106, %v105
    %v155 = vpack.c.bf16 %v108, %v107
    %v156 = vpack.c.bf16 %v110, %v109
    %v157 = vpack.c.bf16 %v112, %v111
    %v158 = vpack.c.bf16 %v114, %v113
    %v159 = vpack.c.bf16 %v116, %v115
    %v160 = vpack.c.bf16 %v118, %v117
    %v161 = vpack.c.bf16 %v120, %v119
    %v162 = vpack.c.bf16 %v122, %v121
    %v163 = vpack.c.bf16 %v124, %v123
    %v164 = vpack.c.bf16 %v126, %v125
    %v165 = vpack.c.bf16 %v128, %v127
    %v166 = vpack.c.bf16 %v130, %v129
    %v167 = vld [vmem:[%s2] sm:$0x1]
    %v169 = vlaneseq
    %v170 = vshrl.u32 %v169, 7
    %v171 = vsub.s32 0, %v170
    %v172 = vrot.slane %v167, %v171
    %vm174 = vcmask 523264
    %v176 = vsel %vm174, %v53, 0
    %v179 = vsel %vm174, %v58, 0
    %181 = vmatprep.subr.bf16.mxu0 0
    %182 = vmatpush1.bf16.msra.mxu0 %v138
    %183 = vmatprep.subr.bf16.mxu0 0
    %184 = vmatpush1.bf16.msra.mxu0 %v137
    %185 = vmatprep.subr.bf16.mxu0 0
    %186 = vmatpush1.bf16.msra.mxu0 %v136
    %187 = vmatprep.subr.bf16.mxu0 0
    %188 = vmatpush1.bf16.msra.mxu0 %v135
    %189 = vmatprep.subr.bf16.mxu0 0
    %190 = vmatpush1.bf16.msra.mxu0 %v134
    %191 = vmatprep.subr.bf16.mxu0 0
    %192 = vmatpush1.bf16.msra.mxu0 %v133
    %193 = vmatprep.subr.bf16.mxu0 0
    %194 = vmatpush1.bf16.msra.mxu0 %v132
    %195 = vmatprep.subr.bf16.mxu0 0
    %196 = vmatpush1.bf16.msra.mxu0 %v131
    %197 = vmatprep.subr.bf16.mxu0 0
    %198 = vmatpush2.bf16.msra.mxu0 %v146
    %199 = vmatprep.subr.bf16.mxu0 0
    %200 = vmatpush2.bf16.msra.mxu0 %v145
    %201 = vmatprep.subr.bf16.mxu0 0
    %202 = vmatpush2.bf16.msra.mxu0 %v144
    %203 = vmatprep.subr.bf16.mxu0 0
    %204 = vmatpush2.bf16.msra.mxu0 %v143
    %205 = vmatprep.subr.bf16.mxu0 0
    %206 = vmatpush2.bf16.msra.mxu0 %v142
    %207 = vmatprep.subr.bf16.mxu0 0
    %208 = vmatpush2.bf16.msra.mxu0 %v141
    %209 = vmatprep.subr.bf16.mxu0 0
    %210 = vmatpush2.bf16.msra.mxu0 %v140
    %211 = vmatprep.subr.bf16.mxu0 0
    %212 = vmatpush2.bf16.msra.mxu0 %v139
    %213 = vmatprep.mubr.bf16.mxu0 %v50
    %214 = vmatmul.mubr.bf16.gmra.mxu0 %v49
    %v215 = vpop.f32.mrf.mxu0
    %v216 = vadd.f32 %v172, %v215
    %v217 = vpop.f32.mrf.mxu0
    %v218 = vpop.f32.mrf.mxu0
    %v219 = vadd.f32 %v172, %v218
    %v220 = vpop.f32.mrf.mxu0
    %221 = vmatprep.mubr.bf16.mxu0 %v55
    %222 = vmatmul.mubr.bf16.gmra.mxu0 %v54
    %v223 = vpop.f32.mrf.mxu0
    %v224 = vadd.f32 %v172, %v223
    %v225 = vpop.f32.mrf.mxu0
    %v226 = vpop.f32.mrf.mxu0
    %v227 = vpop.f32.mrf.mxu0
    %228 = vdwg.mxu0
    %229 = vmatprep.subr.bf16.mxu0 0
    %230 = vmatpush1.bf16.msra.mxu0 %v154
    %231 = vmatprep.subr.bf16.mxu0 0
    %232 = vmatpush1.bf16.msra.mxu0 %v153
    %233 = vmatprep.subr.bf16.mxu0 0
    %234 = vmatpush1.bf16.msra.mxu0 %v152
    %235 = vmatprep.subr.bf16.mxu0 0
    %236 = vmatpush1.bf16.msra.mxu0 %v151
    %237 = vmatprep.subr.bf16.mxu0 0
    %238 = vmatpush1.bf16.msra.mxu0 %v150
    %239 = vmatprep.subr.bf16.mxu0 0
    %240 = vmatpush1.bf16.msra.mxu0 %v149
    %241 = vmatprep.subr.bf16.mxu0 0
    %242 = vmatpush1.bf16.msra.mxu0 %v148
    %243 = vmatprep.subr.bf16.mxu0 0
    %244 = vmatpush1.bf16.msra.mxu0 %v147
    %245 = vmatprep.subr.bf16.mxu0 0
    %246 = vmatpush2.bf16.msra.mxu0 %v162
    %247 = vmatprep.subr.bf16.mxu0 0
    %248 = vmatpush2.bf16.msra.mxu0 %v161
    %249 = vmatprep.subr.bf16.mxu0 0
    %250 = vmatpush2.bf16.msra.mxu0 %v160
    %251 = vmatprep.subr.bf16.mxu0 0
    %252 = vmatpush2.bf16.msra.mxu0 %v159
    %253 = vmatprep.subr.bf16.mxu0 0
    %254 = vmatpush2.bf16.msra.mxu0 %v158
    %255 = vmatprep.subr.bf16.mxu0 0
    %256 = vmatpush2.bf16.msra.mxu0 %v157
    %257 = vmatprep.subr.bf16.mxu0 0
    %258 = vmatpush2.bf16.msra.mxu0 %v156
    %259 = vmatprep.subr.bf16.mxu0 0
    %260 = vmatpush2.bf16.msra.mxu0 %v155
    %261 = vmatprep.mubr.bf16.mxu0 %v52
    %262 = vmatmul.mubr.bf16.gmra.mxu0 %v51
    %v263 = vpop.f32.mrf.mxu0
    %v264 = vadd.f32 %v216, %v263
    %v265 = vpop.f32.mrf.mxu0
    %v266 = vpop.f32.mrf.mxu0
    %v267 = vadd.f32 %v219, %v266
    %v268 = vpop.f32.mrf.mxu0
    %269 = vmatprep.mubr.bf16.mxu0 %v57
    %270 = vmatmul.mubr.bf16.gmra.mxu0 %v56
    %v271 = vpop.f32.mrf.mxu0
    %v272 = vadd.f32 %v224, %v271
    %v273 = vpop.f32.mrf.mxu0
    %v274 = vpop.f32.mrf.mxu0
    %v275 = vpop.f32.mrf.mxu0
    %276 = vdwg.mxu0
    %277 = vmatprep.subr.bf16.mxu0 0
    %278 = vmatpush1.bf16.msra.mxu0 0
    %279 = vmatprep.subr.bf16.mxu0 0
    %280 = vmatpush1.bf16.msra.mxu0 0
    %281 = vmatprep.subr.bf16.mxu0 0
    %282 = vmatpush1.bf16.msra.mxu0 0
    %283 = vmatprep.subr.bf16.mxu0 0
    %284 = vmatpush1.bf16.msra.mxu0 0
    %285 = vmatprep.subr.bf16.mxu0 0
    %286 = vmatpush1.bf16.msra.mxu0 %v166
    %287 = vmatprep.subr.bf16.mxu0 0
    %288 = vmatpush1.bf16.msra.mxu0 %v165
    %289 = vmatprep.subr.bf16.mxu0 0
    %290 = vmatpush1.bf16.msra.mxu0 %v164
    %291 = vmatprep.subr.bf16.mxu0 0
    %292 = vmatpush1.bf16.msra.mxu0 %v163
    %293 = vmatprep.subr.bf16.mxu0 0
    %294 = vmatpush2.bf16.msra.mxu0 0
    %295 = vmatprep.subr.bf16.mxu0 0
    %296 = vmatpush2.bf16.msra.mxu0 0
    %297 = vmatprep.subr.bf16.mxu0 0
    %298 = vmatpush2.bf16.msra.mxu0 0
    %299 = vmatprep.subr.bf16.mxu0 0
    %300 = vmatpush2.bf16.msra.mxu0 0
    %301 = vmatprep.subr.bf16.mxu0 0
    %302 = vmatpush2.bf16.msra.mxu0 0
    %303 = vmatprep.subr.bf16.mxu0 0
    %304 = vmatpush2.bf16.msra.mxu0 0
    %305 = vmatprep.subr.bf16.mxu0 0
    %306 = vmatpush2.bf16.msra.mxu0 0
    %307 = vmatprep.subr.bf16.mxu0 0
    %308 = vmatpush2.bf16.msra.mxu0 0
    %309 = vmatprep.mubr.bf16.mxu0 0
    %310 = vmatmul.mubr.bf16.gmra.mxu0 %v176
    %v311 = vpop.f32.mrf.mxu0
    %v312 = vadd.f32 %v264, %v311
    %v313 = vpop.f32.mrf.mxu0
    %v314 = vpop.f32.mrf.mxu0
    %v315 = vadd.f32 %v267, %v314
    %v316 = vpop.f32.mrf.mxu0
    %317 = vmatprep.mubr.bf16.mxu0 0
    %318 = vmatmul.mubr.bf16.gmra.mxu0 %v179
    %v319 = vpop.f32.mrf.mxu0
    %v320 = vadd.f32 %v272, %v319
    %v321 = vpop.f32.mrf.mxu0
    %v322 = vpop.f32.mrf.mxu0
    %v323 = vpop.f32.mrf.mxu0
    %324 = vdwg.mxu0
    %v325 = vmax.f32 %v312, 0.0
    %v326 = vmax.f32 %v315, 0.0
    %v327 = vmax.f32 %v320, 0.0
    %v328 = vpack.c.bf16 %v325, %v325
    %v329 = vld [vmem:[%s3] sm:$0xff]
    %v330 = vld [vmem:[%s3 + $0x8] sm:$0xff]
    %v331 = vld [vmem:[%s3 + $0x10] sm:$0xff]
    %v332 = vld [vmem:[%s3 + $0x18] sm:$0xff]
    %v333 = vld [vmem:[%s3 + $0x20] sm:$0xff]
    %v334 = vld [vmem:[%s3 + $0x28] sm:$0xff]
    %v335 = vld [vmem:[%s3 + $0x30] sm:$0xff]
    %v336 = vld [vmem:[%s3 + $0x38] sm:$0xff]
    %v337 = vld [vmem:[%s3 + $0x40] sm:$0xff]
    %v338 = vld [vmem:[%s3 + $0x48] sm:$0xff]
    %v339 = vld [vmem:[%s3 + $0x50] sm:$0xff]
    %v340 = vld [vmem:[%s3 + $0x58] sm:$0xff]
    %v341 = vld [vmem:[%s3 + $0x60] sm:$0xff]
    %v342 = vld [vmem:[%s3 + $0x68] sm:$0xff]
    %v343 = vld [vmem:[%s3 + $0x70] sm:$0xff]
    %v344 = vld [vmem:[%s3 + $0x78] sm:$0xff]
    %v345 = vld [vmem:[%s3 + $0x80] sm:$0xff]
    %v346 = vld [vmem:[%s3 + $0x88] sm:$0xff]
    %v347 = vld [vmem:[%s3 + $0x90] sm:$0xff]
    %v348 = vld [vmem:[%s3 + $0x98] sm:$0xff]
    %v349 = vld [vmem:[%s3 + $0xa0] sm:$0xff]
    %v350 = vld [vmem:[%s3 + $0xa8] sm:$0xff]
    %v351 = vld [vmem:[%s3 + $0xb0] sm:$0xff]
    %v352 = vld [vmem:[%s3 + $0xb8] sm:$0xff]
    %v353 = vld [vmem:[%s3 + $0xc0] sm:$0xff]
    %v354 = vld [vmem:[%s3 + $0xc8] sm:$0xff]
    %v355 = vld [vmem:[%s3 + $0xd0] sm:$0xff]
    %v356 = vld [vmem:[%s3 + $0xd8] sm:$0xff]
    %v357 = vld [vmem:[%s3 + $0xe0] sm:$0xff]
    %v358 = vld [vmem:[%s3 + $0xe8] sm:$0xff]
    %v359 = vld [vmem:[%s3 + $0xf0] sm:$0xff]
    %v360 = vld [vmem:[%s3 + $0xf8] sm:$0xff]
    %v361 = vpack.c.bf16 %v331, %v329
    %v362 = vpack.c.bf16 %v332, %v330
    %v363 = vpack.c.bf16 %v335, %v333
    %v364 = vpack.c.bf16 %v336, %v334
    %v365 = vpack.c.bf16 %v339, %v337
    %v366 = vpack.c.bf16 %v340, %v338
    %v367 = vpack.c.bf16 %v343, %v341
    %v368 = vpack.c.bf16 %v344, %v342
    %v369 = vpack.c.bf16 %v347, %v345
    %v370 = vpack.c.bf16 %v348, %v346
    %v371 = vpack.c.bf16 %v351, %v349
    %v372 = vpack.c.bf16 %v352, %v350
    %v373 = vpack.c.bf16 %v355, %v353
    %v374 = vpack.c.bf16 %v356, %v354
    %v375 = vpack.c.bf16 %v359, %v357
    %v376 = vpack.c.bf16 %v360, %v358
    %s377 = scalar_lea.vmem %s3, 256
    %v378 = vld [vmem:[%s377] sm:$0xff]
    %v379 = vld [vmem:[%s377 + $0x8] sm:$0xff]
    %v380 = vld [vmem:[%s377 + $0x10] sm:$0xff]
    %v381 = vld [vmem:[%s377 + $0x18] sm:$0xff]
    %v382 = vld [vmem:[%s377 + $0x20] sm:$0xff]
    %v383 = vld [vmem:[%s377 + $0x28] sm:$0xff]
    %v384 = vld [vmem:[%s377 + $0x30] sm:$0xff]
    %v385 = vld [vmem:[%s377 + $0x38] sm:$0xff]
    %v386 = vld [vmem:[%s377 + $0x40] sm:$0xff]
    %v387 = vld [vmem:[%s377 + $0x48] sm:$0xff]
    %v388 = vld [vmem:[%s377 + $0x50] sm:$0xff]
    %v389 = vld [vmem:[%s377 + $0x58] sm:$0xff]
    %v390 = vld [vmem:[%s377 + $0x60] sm:$0xff]
    %v391 = vld [vmem:[%s377 + $0x68] sm:$0xff]
    %v392 = vld [vmem:[%s377 + $0x70] sm:$0xff]
    %v393 = vld [vmem:[%s377 + $0x78] sm:$0xff]
    %v394 = vld [vmem:[%s377 + $0x80] sm:$0xff]
    %v395 = vld [vmem:[%s377 + $0x88] sm:$0xff]
    %v396 = vld [vmem:[%s377 + $0x90] sm:$0xff]
    %v397 = vld [vmem:[%s377 + $0x98] sm:$0xff]
    %v398 = vld [vmem:[%s377 + $0xa0] sm:$0xff]
    %v399 = vld [vmem:[%s377 + $0xa8] sm:$0xff]
    %v400 = vld [vmem:[%s377 + $0xb0] sm:$0xff]
    %v401 = vld [vmem:[%s377 + $0xb8] sm:$0xff]
    %v402 = vld [vmem:[%s377 + $0xc0] sm:$0xff]
    %v403 = vld [vmem:[%s377 + $0xc8] sm:$0xff]
    %v404 = vld [vmem:[%s377 + $0xd0] sm:$0xff]
    %v405 = vld [vmem:[%s377 + $0xd8] sm:$0xff]
    %v406 = vld [vmem:[%s377 + $0xe0] sm:$0xff]
    %v407 = vld [vmem:[%s377 + $0xe8] sm:$0xff]
    %v408 = vld [vmem:[%s377 + $0xf0] sm:$0xff]
    %v409 = vld [vmem:[%s377 + $0xf8] sm:$0xff]
    %v410 = vpack.c.bf16 %v380, %v378
    %v411 = vpack.c.bf16 %v381, %v379
    %v412 = vpack.c.bf16 %v384, %v382
    %v413 = vpack.c.bf16 %v385, %v383
    %v414 = vpack.c.bf16 %v388, %v386
    %v415 = vpack.c.bf16 %v389, %v387
    %v416 = vpack.c.bf16 %v392, %v390
    %v417 = vpack.c.bf16 %v393, %v391
    %v418 = vpack.c.bf16 %v396, %v394
    %v419 = vpack.c.bf16 %v397, %v395
    %v420 = vpack.c.bf16 %v400, %v398
    %v421 = vpack.c.bf16 %v401, %v399
    %v422 = vpack.c.bf16 %v404, %v402
    %v423 = vpack.c.bf16 %v405, %v403
    %v424 = vpack.c.bf16 %v408, %v406
    %v425 = vpack.c.bf16 %v409, %v407
    %v427 = vrot.slane %v328, 1
    %429 = vmatprep.subr.bf16.mxu0 %v425
    %430 = vmatpush1.bf16.msra.mxu0 %v424
    %431 = vmatprep.subr.bf16.mxu0 %v423
    %432 = vmatpush1.bf16.msra.mxu0 %v422
    %433 = vmatprep.subr.bf16.mxu0 %v421
    %434 = vmatpush1.bf16.msra.mxu0 %v420
    %435 = vmatprep.subr.bf16.mxu0 %v419
    %436 = vmatpush1.bf16.msra.mxu0 %v418
    %437 = vmatprep.subr.bf16.mxu0 %v417
    %438 = vmatpush1.bf16.msra.mxu0 %v416
    %439 = vmatprep.subr.bf16.mxu0 %v415
    %440 = vmatpush1.bf16.msra.mxu0 %v414
    %441 = vmatprep.subr.bf16.mxu0 %v413
    %442 = vmatpush1.bf16.msra.mxu0 %v412
    %443 = vmatprep.subr.bf16.mxu0 %v411
    %444 = vmatpush1.bf16.msra.mxu0 %v410
    %445 = vmatprep.subr.bf16.mxu0 0
    %446 = vmatpush2.bf16.msra.mxu0 0
    %447 = vmatprep.subr.bf16.mxu0 0
    %448 = vmatpush2.bf16.msra.mxu0 0
    %449 = vmatprep.subr.bf16.mxu0 0
    %450 = vmatpush2.bf16.msra.mxu0 0
    %451 = vmatprep.subr.bf16.mxu0 0
    %452 = vmatpush2.bf16.msra.mxu0 0
    %453 = vmatprep.subr.bf16.mxu0 0
    %454 = vmatpush2.bf16.msra.mxu0 0
    %455 = vmatprep.subr.bf16.mxu0 0
    %456 = vmatpush2.bf16.msra.mxu0 0
    %457 = vmatprep.subr.bf16.mxu0 0
    %458 = vmatpush2.bf16.msra.mxu0 0
    %459 = vmatprep.subr.bf16.mxu0 0
    %460 = vmatpush2.bf16.msra.mxu0 0
    %461 = vmatprep.mubr.bf16.mxu0 0
    %462 = vmatmul.mubr.bf16.gmra.mxu0 %v427
    %v463 = vpop.f32.mrf.mxu0
    %v464 = vadd.f32 0.0, %v463
    %v465 = vpop.f32.mrf.mxu0
    %v466 = vadd.f32 0.0, %v465
    %v467 = vpop.f32.mrf.mxu0
    %v468 = vpop.f32.mrf.mxu0
    %469 = vdwg.mxu0
    %470 = vmatprep.subr.bf16.mxu0 %v376
    %471 = vmatpush1.bf16.msra.mxu0 %v375
    %472 = vmatprep.subr.bf16.mxu0 %v374
    %473 = vmatpush1.bf16.msra.mxu0 %v373
    %474 = vmatprep.subr.bf16.mxu0 %v372
    %475 = vmatpush1.bf16.msra.mxu0 %v371
    %476 = vmatprep.subr.bf16.mxu0 %v370
    %477 = vmatpush1.bf16.msra.mxu0 %v369
    %478 = vmatprep.subr.bf16.mxu0 %v368
    %479 = vmatpush1.bf16.msra.mxu0 %v367
    %480 = vmatprep.subr.bf16.mxu0 %v366
    %481 = vmatpush1.bf16.msra.mxu0 %v365
    %482 = vmatprep.subr.bf16.mxu0 %v364
    %483 = vmatpush1.bf16.msra.mxu0 %v363
    %484 = vmatprep.subr.bf16.mxu0 %v362
    %485 = vmatpush1.bf16.msra.mxu0 %v361
    %486 = vmatprep.subr.bf16.mxu0 0
    %487 = vmatpush2.bf16.msra.mxu0 0
    %488 = vmatprep.subr.bf16.mxu0 0
    %489 = vmatpush2.bf16.msra.mxu0 0
    %490 = vmatprep.subr.bf16.mxu0 0
    %491 = vmatpush2.bf16.msra.mxu0 0
    %492 = vmatprep.subr.bf16.mxu0 0
    %493 = vmatpush2.bf16.msra.mxu0 0
    %494 = vmatprep.subr.bf16.mxu0 0
    %495 = vmatpush2.bf16.msra.mxu0 0
    %496 = vmatprep.subr.bf16.mxu0 0
    %497 = vmatpush2.bf16.msra.mxu0 0
    %498 = vmatprep.subr.bf16.mxu0 0
    %499 = vmatpush2.bf16.msra.mxu0 0
    %500 = vmatprep.subr.bf16.mxu0 0
    %501 = vmatpush2.bf16.msra.mxu0 0
    %502 = vmatprep.mubr.bf16.mxu0 0
    %503 = vmatmul.mubr.bf16.gmra.mxu0 %v328
    %v504 = vpop.f32.mrf.mxu0
    %v505 = vadd.f32 %v464, %v504
    %v506 = vpop.f32.mrf.mxu0
    %v507 = vadd.f32 %v466, %v506
    %v508 = vpop.f32.mrf.mxu0
    %v509 = vpop.f32.mrf.mxu0
    %510 = vdwg.mxu0
    %s511 = scalar_lea.vmem %s3, 512
    %v512 = vld [vmem:[%s511] sm:$0xff]
    %v513 = vld [vmem:[%s511 + $0x8] sm:$0xff]
    %v514 = vld [vmem:[%s511 + $0x10] sm:$0xff]
    %v515 = vld [vmem:[%s511 + $0x18] sm:$0xff]
    %v516 = vld [vmem:[%s511 + $0x20] sm:$0xff]
    %v517 = vld [vmem:[%s511 + $0x28] sm:$0xff]
    %v518 = vld [vmem:[%s511 + $0x30] sm:$0xff]
    %v519 = vld [vmem:[%s511 + $0x38] sm:$0xff]
    %v520 = vld [vmem:[%s511 + $0x40] sm:$0xff]
    %v521 = vld [vmem:[%s511 + $0x48] sm:$0xff]
    %v522 = vld [vmem:[%s511 + $0x50] sm:$0xff]
    %v523 = vld [vmem:[%s511 + $0x58] sm:$0xff]
    %v524 = vld [vmem:[%s511 + $0x60] sm:$0xff]
    %v525 = vld [vmem:[%s511 + $0x68] sm:$0xff]
    %v526 = vld [vmem:[%s511 + $0x70] sm:$0xff]
    %v527 = vld [vmem:[%s511 + $0x78] sm:$0xff]
    %v528 = vld [vmem:[%s511 + $0x80] sm:$0xff]
    %v529 = vld [vmem:[%s511 + $0x88] sm:$0xff]
    %v530 = vld [vmem:[%s511 + $0x90] sm:$0xff]
    %v531 = vld [vmem:[%s511 + $0x98] sm:$0xff]
    %v532 = vld [vmem:[%s511 + $0xa0] sm:$0xff]
    %v533 = vld [vmem:[%s511 + $0xa8] sm:$0xff]
    %v534 = vld [vmem:[%s511 + $0xb0] sm:$0xff]
    %v535 = vld [vmem:[%s511 + $0xb8] sm:$0xff]
    %v536 = vld [vmem:[%s511 + $0xc0] sm:$0xff]
    %v537 = vld [vmem:[%s511 + $0xc8] sm:$0xff]
    %v538 = vld [vmem:[%s511 + $0xd0] sm:$0xff]
    %v539 = vld [vmem:[%s511 + $0xd8] sm:$0xff]
    %v540 = vld [vmem:[%s511 + $0xe0] sm:$0xff]
    %v541 = vld [vmem:[%s511 + $0xe8] sm:$0xff]
    %v542 = vld [vmem:[%s511 + $0xf0] sm:$0xff]
    %v543 = vld [vmem:[%s511 + $0xf8] sm:$0xff]
    %v544 = vpack.c.bf16 %v514, %v512
    %v545 = vpack.c.bf16 %v515, %v513
    %v546 = vpack.c.bf16 %v518, %v516
    %v547 = vpack.c.bf16 %v519, %v517
    %v548 = vpack.c.bf16 %v522, %v520
    %v549 = vpack.c.bf16 %v523, %v521
    %v550 = vpack.c.bf16 %v526, %v524
    %v551 = vpack.c.bf16 %v527, %v525
    %v552 = vpack.c.bf16 %v530, %v528
    %v553 = vpack.c.bf16 %v531, %v529
    %v554 = vpack.c.bf16 %v534, %v532
    %v555 = vpack.c.bf16 %v535, %v533
    %v556 = vpack.c.bf16 %v538, %v536
    %v557 = vpack.c.bf16 %v539, %v537
    %v558 = vpack.c.bf16 %v542, %v540
    %v559 = vpack.c.bf16 %v543, %v541
    %v560 = vrot.slane %v328, 2
    %562 = vmatprep.subr.bf16.mxu0 %v559
    %563 = vmatpush1.bf16.msra.mxu0 %v558
    %564 = vmatprep.subr.bf16.mxu0 %v557
    %565 = vmatpush1.bf16.msra.mxu0 %v556
    %566 = vmatprep.subr.bf16.mxu0 %v555
    %567 = vmatpush1.bf16.msra.mxu0 %v554
    %568 = vmatprep.subr.bf16.mxu0 %v553
    %569 = vmatpush1.bf16.msra.mxu0 %v552
    %570 = vmatprep.subr.bf16.mxu0 %v551
    %571 = vmatpush1.bf16.msra.mxu0 %v550
    %572 = vmatprep.subr.bf16.mxu0 %v549
    %573 = vmatpush1.bf16.msra.mxu0 %v548
    %574 = vmatprep.subr.bf16.mxu0 %v547
    %575 = vmatpush1.bf16.msra.mxu0 %v546
    %576 = vmatprep.subr.bf16.mxu0 %v545
    %577 = vmatpush1.bf16.msra.mxu0 %v544
    %578 = vmatprep.subr.bf16.mxu0 0
    %579 = vmatpush2.bf16.msra.mxu0 0
    %580 = vmatprep.subr.bf16.mxu0 0
    %581 = vmatpush2.bf16.msra.mxu0 0
    %582 = vmatprep.subr.bf16.mxu0 0
    %583 = vmatpush2.bf16.msra.mxu0 0
    %584 = vmatprep.subr.bf16.mxu0 0
    %585 = vmatpush2.bf16.msra.mxu0 0
    %586 = vmatprep.subr.bf16.mxu0 0
    %587 = vmatpush2.bf16.msra.mxu0 0
    %588 = vmatprep.subr.bf16.mxu0 0
    %589 = vmatpush2.bf16.msra.mxu0 0
    %590 = vmatprep.subr.bf16.mxu0 0
    %591 = vmatpush2.bf16.msra.mxu0 0
    %592 = vmatprep.subr.bf16.mxu0 0
    %593 = vmatpush2.bf16.msra.mxu0 0
    %594 = vmatprep.mubr.bf16.mxu0 0
    %595 = vmatmul.mubr.bf16.gmra.mxu0 %v560
    %v596 = vpop.f32.mrf.mxu0
    %v597 = vadd.f32 0.0, %v596
    %v598 = vpop.f32.mrf.mxu0
    %v599 = vadd.f32 0.0, %v598
    %v600 = vpop.f32.mrf.mxu0
    %v601 = vpop.f32.mrf.mxu0
    %602 = vdwg.mxu0
    %v603 = vadd.f32 %v505, %v597
    %v604 = vadd.f32 %v507, %v599
    %s605 = scalar_lea.vmem %s3, 768
    %v606 = vld [vmem:[%s605] sm:$0xff]
    %v607 = vld [vmem:[%s605 + $0x8] sm:$0xff]
    %v608 = vld [vmem:[%s605 + $0x10] sm:$0xff]
    %v609 = vld [vmem:[%s605 + $0x18] sm:$0xff]
    %v610 = vld [vmem:[%s605 + $0x20] sm:$0xff]
    %v611 = vld [vmem:[%s605 + $0x28] sm:$0xff]
    %v612 = vld [vmem:[%s605 + $0x30] sm:$0xff]
    %v613 = vld [vmem:[%s605 + $0x38] sm:$0xff]
    %v614 = vld [vmem:[%s605 + $0x40] sm:$0xff]
    %v615 = vld [vmem:[%s605 + $0x48] sm:$0xff]
    %v616 = vld [vmem:[%s605 + $0x50] sm:$0xff]
    %v617 = vld [vmem:[%s605 + $0x58] sm:$0xff]
    %v618 = vld [vmem:[%s605 + $0x60] sm:$0xff]
    %v619 = vld [vmem:[%s605 + $0x68] sm:$0xff]
    %v620 = vld [vmem:[%s605 + $0x70] sm:$0xff]
    %v621 = vld [vmem:[%s605 + $0x78] sm:$0xff]
    %v622 = vld [vmem:[%s605 + $0x80] sm:$0xff]
    %v623 = vld [vmem:[%s605 + $0x88] sm:$0xff]
    %v624 = vld [vmem:[%s605 + $0x90] sm:$0xff]
    %v625 = vld [vmem:[%s605 + $0x98] sm:$0xff]
    %v626 = vld [vmem:[%s605 + $0xa0] sm:$0xff]
    %v627 = vld [vmem:[%s605 + $0xa8] sm:$0xff]
    %v628 = vld [vmem:[%s605 + $0xb0] sm:$0xff]
    %v629 = vld [vmem:[%s605 + $0xb8] sm:$0xff]
    %v630 = vld [vmem:[%s605 + $0xc0] sm:$0xff]
    %v631 = vld [vmem:[%s605 + $0xc8] sm:$0xff]
    %v632 = vld [vmem:[%s605 + $0xd0] sm:$0xff]
    %v633 = vld [vmem:[%s605 + $0xd8] sm:$0xff]
    %v634 = vld [vmem:[%s605 + $0xe0] sm:$0xff]
    %v635 = vld [vmem:[%s605 + $0xe8] sm:$0xff]
    %v636 = vld [vmem:[%s605 + $0xf0] sm:$0xff]
    %v637 = vld [vmem:[%s605 + $0xf8] sm:$0xff]
    %v638 = vpack.c.bf16 %v608, %v606
    %v639 = vpack.c.bf16 %v609, %v607
    %v640 = vpack.c.bf16 %v612, %v610
    %v641 = vpack.c.bf16 %v613, %v611
    %v642 = vpack.c.bf16 %v616, %v614
    %v643 = vpack.c.bf16 %v617, %v615
    %v644 = vpack.c.bf16 %v620, %v618
    %v645 = vpack.c.bf16 %v621, %v619
    %v646 = vpack.c.bf16 %v624, %v622
    %v647 = vpack.c.bf16 %v625, %v623
    %v648 = vpack.c.bf16 %v628, %v626
    %v649 = vpack.c.bf16 %v629, %v627
    %v650 = vpack.c.bf16 %v632, %v630
    %v651 = vpack.c.bf16 %v633, %v631
    %v652 = vpack.c.bf16 %v636, %v634
    %v653 = vpack.c.bf16 %v637, %v635
    %v654 = vrot.slane %v328, 3
    %656 = vmatprep.subr.bf16.mxu0 %v653
    %657 = vmatpush1.bf16.msra.mxu0 %v652
    %658 = vmatprep.subr.bf16.mxu0 %v651
    %659 = vmatpush1.bf16.msra.mxu0 %v650
    %660 = vmatprep.subr.bf16.mxu0 %v649
    %661 = vmatpush1.bf16.msra.mxu0 %v648
    %662 = vmatprep.subr.bf16.mxu0 %v647
    %663 = vmatpush1.bf16.msra.mxu0 %v646
    %664 = vmatprep.subr.bf16.mxu0 %v645
    %665 = vmatpush1.bf16.msra.mxu0 %v644
    %666 = vmatprep.subr.bf16.mxu0 %v643
    %667 = vmatpush1.bf16.msra.mxu0 %v642
    %668 = vmatprep.subr.bf16.mxu0 %v641
    %669 = vmatpush1.bf16.msra.mxu0 %v640
    %670 = vmatprep.subr.bf16.mxu0 %v639
    %671 = vmatpush1.bf16.msra.mxu0 %v638
    %672 = vmatprep.subr.bf16.mxu0 0
    %673 = vmatpush2.bf16.msra.mxu0 0
    %674 = vmatprep.subr.bf16.mxu0 0
    %675 = vmatpush2.bf16.msra.mxu0 0
    %676 = vmatprep.subr.bf16.mxu0 0
    %677 = vmatpush2.bf16.msra.mxu0 0
    %678 = vmatprep.subr.bf16.mxu0 0
    %679 = vmatpush2.bf16.msra.mxu0 0
    %680 = vmatprep.subr.bf16.mxu0 0
    %681 = vmatpush2.bf16.msra.mxu0 0
    %682 = vmatprep.subr.bf16.mxu0 0
    %683 = vmatpush2.bf16.msra.mxu0 0
    %684 = vmatprep.subr.bf16.mxu0 0
    %685 = vmatpush2.bf16.msra.mxu0 0
    %686 = vmatprep.subr.bf16.mxu0 0
    %687 = vmatpush2.bf16.msra.mxu0 0
    %688 = vmatprep.mubr.bf16.mxu0 0
    %689 = vmatmul.mubr.bf16.gmra.mxu0 %v654
    %v690 = vpop.f32.mrf.mxu0
    %v691 = vadd.f32 0.0, %v690
    %v692 = vpop.f32.mrf.mxu0
    %v693 = vadd.f32 0.0, %v692
    %v694 = vpop.f32.mrf.mxu0
    %v695 = vpop.f32.mrf.mxu0
    %696 = vdwg.mxu0
    %v697 = vadd.f32 %v603, %v691
    %v698 = vadd.f32 %v604, %v693
    %v699 = vpack.c.bf16 %v326, %v326
    %s700 = scalar_lea.vmem %s3, 1024
    %v701 = vld [vmem:[%s700] sm:$0xff]
    %v702 = vld [vmem:[%s700 + $0x8] sm:$0xff]
    %v703 = vld [vmem:[%s700 + $0x10] sm:$0xff]
    %v704 = vld [vmem:[%s700 + $0x18] sm:$0xff]
    %v705 = vld [vmem:[%s700 + $0x20] sm:$0xff]
    %v706 = vld [vmem:[%s700 + $0x28] sm:$0xff]
    %v707 = vld [vmem:[%s700 + $0x30] sm:$0xff]
    %v708 = vld [vmem:[%s700 + $0x38] sm:$0xff]
    %v709 = vld [vmem:[%s700 + $0x40] sm:$0xff]
    %v710 = vld [vmem:[%s700 + $0x48] sm:$0xff]
    %v711 = vld [vmem:[%s700 + $0x50] sm:$0xff]
    %v712 = vld [vmem:[%s700 + $0x58] sm:$0xff]
    %v713 = vld [vmem:[%s700 + $0x60] sm:$0xff]
    %v714 = vld [vmem:[%s700 + $0x68] sm:$0xff]
    %v715 = vld [vmem:[%s700 + $0x70] sm:$0xff]
    %v716 = vld [vmem:[%s700 + $0x78] sm:$0xff]
    %v717 = vld [vmem:[%s700 + $0x80] sm:$0xff]
    %v718 = vld [vmem:[%s700 + $0x88] sm:$0xff]
    %v719 = vld [vmem:[%s700 + $0x90] sm:$0xff]
    %v720 = vld [vmem:[%s700 + $0x98] sm:$0xff]
    %v721 = vld [vmem:[%s700 + $0xa0] sm:$0xff]
    %v722 = vld [vmem:[%s700 + $0xa8] sm:$0xff]
    %v723 = vld [vmem:[%s700 + $0xb0] sm:$0xff]
    %v724 = vld [vmem:[%s700 + $0xb8] sm:$0xff]
    %v725 = vld [vmem:[%s700 + $0xc0] sm:$0xff]
    %v726 = vld [vmem:[%s700 + $0xc8] sm:$0xff]
    %v727 = vld [vmem:[%s700 + $0xd0] sm:$0xff]
    %v728 = vld [vmem:[%s700 + $0xd8] sm:$0xff]
    %v729 = vld [vmem:[%s700 + $0xe0] sm:$0xff]
    %v730 = vld [vmem:[%s700 + $0xe8] sm:$0xff]
    %v731 = vld [vmem:[%s700 + $0xf0] sm:$0xff]
    %v732 = vld [vmem:[%s700 + $0xf8] sm:$0xff]
    %v733 = vpack.c.bf16 %v703, %v701
    %v734 = vpack.c.bf16 %v704, %v702
    %v735 = vpack.c.bf16 %v707, %v705
    %v736 = vpack.c.bf16 %v708, %v706
    %v737 = vpack.c.bf16 %v711, %v709
    %v738 = vpack.c.bf16 %v712, %v710
    %v739 = vpack.c.bf16 %v715, %v713
    %v740 = vpack.c.bf16 %v716, %v714
    %v741 = vpack.c.bf16 %v719, %v717
    %v742 = vpack.c.bf16 %v720, %v718
    %v743 = vpack.c.bf16 %v723, %v721
    %v744 = vpack.c.bf16 %v724, %v722
    %v745 = vpack.c.bf16 %v727, %v725
    %v746 = vpack.c.bf16 %v728, %v726
    %v747 = vpack.c.bf16 %v731, %v729
    %v748 = vpack.c.bf16 %v732, %v730
    %749 = vmatprep.subr.bf16.mxu0 %v748
    %750 = vmatpush1.bf16.msra.mxu0 %v747
    %751 = vmatprep.subr.bf16.mxu0 %v746
    %752 = vmatpush1.bf16.msra.mxu0 %v745
    %753 = vmatprep.subr.bf16.mxu0 %v744
    %754 = vmatpush1.bf16.msra.mxu0 %v743
    %755 = vmatprep.subr.bf16.mxu0 %v742
    %756 = vmatpush1.bf16.msra.mxu0 %v741
    %757 = vmatprep.subr.bf16.mxu0 %v740
    %758 = vmatpush1.bf16.msra.mxu0 %v739
    %759 = vmatprep.subr.bf16.mxu0 %v738
    %760 = vmatpush1.bf16.msra.mxu0 %v737
    %761 = vmatprep.subr.bf16.mxu0 %v736
    %762 = vmatpush1.bf16.msra.mxu0 %v735
    %763 = vmatprep.subr.bf16.mxu0 %v734
    %764 = vmatpush1.bf16.msra.mxu0 %v733
    %765 = vmatprep.subr.bf16.mxu0 0
    %766 = vmatpush2.bf16.msra.mxu0 0
    %767 = vmatprep.subr.bf16.mxu0 0
    %768 = vmatpush2.bf16.msra.mxu0 0
    %769 = vmatprep.subr.bf16.mxu0 0
    %770 = vmatpush2.bf16.msra.mxu0 0
    %771 = vmatprep.subr.bf16.mxu0 0
    %772 = vmatpush2.bf16.msra.mxu0 0
    %773 = vmatprep.subr.bf16.mxu0 0
    %774 = vmatpush2.bf16.msra.mxu0 0
    %775 = vmatprep.subr.bf16.mxu0 0
    %776 = vmatpush2.bf16.msra.mxu0 0
    %777 = vmatprep.subr.bf16.mxu0 0
    %778 = vmatpush2.bf16.msra.mxu0 0
    %779 = vmatprep.subr.bf16.mxu0 0
    %780 = vmatpush2.bf16.msra.mxu0 0
    %781 = vmatprep.mubr.bf16.mxu0 0
    %782 = vmatmul.mubr.bf16.gmra.mxu0 %v699
    %v783 = vpop.f32.mrf.mxu0
    %v784 = vadd.f32 0.0, %v783
    %v785 = vpop.f32.mrf.mxu0
    %v786 = vadd.f32 0.0, %v785
    %v787 = vpop.f32.mrf.mxu0
    %v788 = vpop.f32.mrf.mxu0
    %789 = vdwg.mxu0
    %v790 = vadd.f32 %v697, %v784
    %v791 = vadd.f32 %v698, %v786
    %s792 = scalar_lea.vmem %s3, 1280
    %v793 = vld [vmem:[%s792] sm:$0xff]
    %v794 = vld [vmem:[%s792 + $0x8] sm:$0xff]
    %v795 = vld [vmem:[%s792 + $0x10] sm:$0xff]
    %v796 = vld [vmem:[%s792 + $0x18] sm:$0xff]
    %v797 = vld [vmem:[%s792 + $0x20] sm:$0xff]
    %v798 = vld [vmem:[%s792 + $0x28] sm:$0xff]
    %v799 = vld [vmem:[%s792 + $0x30] sm:$0xff]
    %v800 = vld [vmem:[%s792 + $0x38] sm:$0xff]
    %v801 = vld [vmem:[%s792 + $0x40] sm:$0xff]
    %v802 = vld [vmem:[%s792 + $0x48] sm:$0xff]
    %v803 = vld [vmem:[%s792 + $0x50] sm:$0xff]
    %v804 = vld [vmem:[%s792 + $0x58] sm:$0xff]
    %v805 = vld [vmem:[%s792 + $0x60] sm:$0xff]
    %v806 = vld [vmem:[%s792 + $0x68] sm:$0xff]
    %v807 = vld [vmem:[%s792 + $0x70] sm:$0xff]
    %v808 = vld [vmem:[%s792 + $0x78] sm:$0xff]
    %v809 = vld [vmem:[%s792 + $0x80] sm:$0xff]
    %v810 = vld [vmem:[%s792 + $0x88] sm:$0xff]
    %v811 = vld [vmem:[%s792 + $0x90] sm:$0xff]
    %v812 = vld [vmem:[%s792 + $0x98] sm:$0xff]
    %v813 = vld [vmem:[%s792 + $0xa0] sm:$0xff]
    %v814 = vld [vmem:[%s792 + $0xa8] sm:$0xff]
    %v815 = vld [vmem:[%s792 + $0xb0] sm:$0xff]
    %v816 = vld [vmem:[%s792 + $0xb8] sm:$0xff]
    %v817 = vld [vmem:[%s792 + $0xc0] sm:$0xff]
    %v818 = vld [vmem:[%s792 + $0xc8] sm:$0xff]
    %v819 = vld [vmem:[%s792 + $0xd0] sm:$0xff]
    %v820 = vld [vmem:[%s792 + $0xd8] sm:$0xff]
    %v821 = vld [vmem:[%s792 + $0xe0] sm:$0xff]
    %v822 = vld [vmem:[%s792 + $0xe8] sm:$0xff]
    %v823 = vld [vmem:[%s792 + $0xf0] sm:$0xff]
    %v824 = vld [vmem:[%s792 + $0xf8] sm:$0xff]
    %v825 = vpack.c.bf16 %v795, %v793
    %v826 = vpack.c.bf16 %v796, %v794
    %v827 = vpack.c.bf16 %v799, %v797
    %v828 = vpack.c.bf16 %v800, %v798
    %v829 = vpack.c.bf16 %v803, %v801
    %v830 = vpack.c.bf16 %v804, %v802
    %v831 = vpack.c.bf16 %v807, %v805
    %v832 = vpack.c.bf16 %v808, %v806
    %v833 = vpack.c.bf16 %v811, %v809
    %v834 = vpack.c.bf16 %v812, %v810
    %v835 = vpack.c.bf16 %v815, %v813
    %v836 = vpack.c.bf16 %v816, %v814
    %v837 = vpack.c.bf16 %v819, %v817
    %v838 = vpack.c.bf16 %v820, %v818
    %v839 = vpack.c.bf16 %v823, %v821
    %v840 = vpack.c.bf16 %v824, %v822
    %v842 = vrot.slane %v699, 1
    %844 = vmatprep.subr.bf16.mxu0 %v840
    %845 = vmatpush1.bf16.msra.mxu0 %v839
    %846 = vmatprep.subr.bf16.mxu0 %v838
    %847 = vmatpush1.bf16.msra.mxu0 %v837
    %848 = vmatprep.subr.bf16.mxu0 %v836
    %849 = vmatpush1.bf16.msra.mxu0 %v835
    %850 = vmatprep.subr.bf16.mxu0 %v834
    %851 = vmatpush1.bf16.msra.mxu0 %v833
    %852 = vmatprep.subr.bf16.mxu0 %v832
    %853 = vmatpush1.bf16.msra.mxu0 %v831
    %854 = vmatprep.subr.bf16.mxu0 %v830
    %855 = vmatpush1.bf16.msra.mxu0 %v829
    %856 = vmatprep.subr.bf16.mxu0 %v828
    %857 = vmatpush1.bf16.msra.mxu0 %v827
    %858 = vmatprep.subr.bf16.mxu0 %v826
    %859 = vmatpush1.bf16.msra.mxu0 %v825
    %860 = vmatprep.subr.bf16.mxu0 0
    %861 = vmatpush2.bf16.msra.mxu0 0
    %862 = vmatprep.subr.bf16.mxu0 0
    %863 = vmatpush2.bf16.msra.mxu0 0
    %864 = vmatprep.subr.bf16.mxu0 0
    %865 = vmatpush2.bf16.msra.mxu0 0
    %866 = vmatprep.subr.bf16.mxu0 0
    %867 = vmatpush2.bf16.msra.mxu0 0
    %868 = vmatprep.subr.bf16.mxu0 0
    %869 = vmatpush2.bf16.msra.mxu0 0
    %870 = vmatprep.subr.bf16.mxu0 0
    %871 = vmatpush2.bf16.msra.mxu0 0
    %872 = vmatprep.subr.bf16.mxu0 0
    %873 = vmatpush2.bf16.msra.mxu0 0
    %874 = vmatprep.subr.bf16.mxu0 0
    %875 = vmatpush2.bf16.msra.mxu0 0
    %876 = vmatprep.mubr.bf16.mxu0 0
    %877 = vmatmul.mubr.bf16.gmra.mxu0 %v842
    %v878 = vpop.f32.mrf.mxu0
    %v879 = vadd.f32 0.0, %v878
    %v880 = vpop.f32.mrf.mxu0
    %v881 = vadd.f32 0.0, %v880
    %v882 = vpop.f32.mrf.mxu0
    %v883 = vpop.f32.mrf.mxu0
    %884 = vdwg.mxu0
    %v885 = vadd.f32 %v790, %v879
    %v886 = vadd.f32 %v791, %v881
    %s887 = scalar_lea.vmem %s3, 1536
    %v888 = vld [vmem:[%s887] sm:$0xff]
    %v889 = vld [vmem:[%s887 + $0x8] sm:$0xff]
    %v890 = vld [vmem:[%s887 + $0x10] sm:$0xff]
    %v891 = vld [vmem:[%s887 + $0x18] sm:$0xff]
    %v892 = vld [vmem:[%s887 + $0x20] sm:$0xff]
    %v893 = vld [vmem:[%s887 + $0x28] sm:$0xff]
    %v894 = vld [vmem:[%s887 + $0x30] sm:$0xff]
    %v895 = vld [vmem:[%s887 + $0x38] sm:$0xff]
    %v896 = vld [vmem:[%s887 + $0x40] sm:$0xff]
    %v897 = vld [vmem:[%s887 + $0x48] sm:$0xff]
    %v898 = vld [vmem:[%s887 + $0x50] sm:$0xff]
    %v899 = vld [vmem:[%s887 + $0x58] sm:$0xff]
    %v900 = vld [vmem:[%s887 + $0x60] sm:$0xff]
    %v901 = vld [vmem:[%s887 + $0x68] sm:$0xff]
    %v902 = vld [vmem:[%s887 + $0x70] sm:$0xff]
    %v903 = vld [vmem:[%s887 + $0x78] sm:$0xff]
    %v904 = vld [vmem:[%s887 + $0x80] sm:$0xff]
    %v905 = vld [vmem:[%s887 + $0x88] sm:$0xff]
    %v906 = vld [vmem:[%s887 + $0x90] sm:$0xff]
    %v907 = vld [vmem:[%s887 + $0x98] sm:$0xff]
    %v908 = vld [vmem:[%s887 + $0xa0] sm:$0xff]
    %v909 = vld [vmem:[%s887 + $0xa8] sm:$0xff]
    %v910 = vld [vmem:[%s887 + $0xb0] sm:$0xff]
    %v911 = vld [vmem:[%s887 + $0xb8] sm:$0xff]
    %v912 = vld [vmem:[%s887 + $0xc0] sm:$0xff]
    %v913 = vld [vmem:[%s887 + $0xc8] sm:$0xff]
    %v914 = vld [vmem:[%s887 + $0xd0] sm:$0xff]
    %v915 = vld [vmem:[%s887 + $0xd8] sm:$0xff]
    %v916 = vld [vmem:[%s887 + $0xe0] sm:$0xff]
    %v917 = vld [vmem:[%s887 + $0xe8] sm:$0xff]
    %v918 = vld [vmem:[%s887 + $0xf0] sm:$0xff]
    %v919 = vld [vmem:[%s887 + $0xf8] sm:$0xff]
    %v920 = vpack.c.bf16 %v890, %v888
    %v921 = vpack.c.bf16 %v891, %v889
    %v922 = vpack.c.bf16 %v894, %v892
    %v923 = vpack.c.bf16 %v895, %v893
    %v924 = vpack.c.bf16 %v898, %v896
    %v925 = vpack.c.bf16 %v899, %v897
    %v926 = vpack.c.bf16 %v902, %v900
    %v927 = vpack.c.bf16 %v903, %v901
    %v928 = vpack.c.bf16 %v906, %v904
    %v929 = vpack.c.bf16 %v907, %v905
    %v930 = vpack.c.bf16 %v910, %v908
    %v931 = vpack.c.bf16 %v911, %v909
    %v932 = vpack.c.bf16 %v914, %v912
    %v933 = vpack.c.bf16 %v915, %v913
    %v934 = vpack.c.bf16 %v918, %v916
    %v935 = vpack.c.bf16 %v919, %v917
    %v936 = vrot.slane %v699, 2
    %938 = vmatprep.subr.bf16.mxu0 %v935
    %939 = vmatpush1.bf16.msra.mxu0 %v934
    %940 = vmatprep.subr.bf16.mxu0 %v933
    %941 = vmatpush1.bf16.msra.mxu0 %v932
    %942 = vmatprep.subr.bf16.mxu0 %v931
    %943 = vmatpush1.bf16.msra.mxu0 %v930
    %944 = vmatprep.subr.bf16.mxu0 %v929
    %945 = vmatpush1.bf16.msra.mxu0 %v928
    %946 = vmatprep.subr.bf16.mxu0 %v927
    %947 = vmatpush1.bf16.msra.mxu0 %v926
    %948 = vmatprep.subr.bf16.mxu0 %v925
    %949 = vmatpush1.bf16.msra.mxu0 %v924
    %950 = vmatprep.subr.bf16.mxu0 %v923
    %951 = vmatpush1.bf16.msra.mxu0 %v922
    %952 = vmatprep.subr.bf16.mxu0 %v921
    %953 = vmatpush1.bf16.msra.mxu0 %v920
    %954 = vmatprep.subr.bf16.mxu0 0
    %955 = vmatpush2.bf16.msra.mxu0 0
    %956 = vmatprep.subr.bf16.mxu0 0
    %957 = vmatpush2.bf16.msra.mxu0 0
    %958 = vmatprep.subr.bf16.mxu0 0
    %959 = vmatpush2.bf16.msra.mxu0 0
    %960 = vmatprep.subr.bf16.mxu0 0
    %961 = vmatpush2.bf16.msra.mxu0 0
    %962 = vmatprep.subr.bf16.mxu0 0
    %963 = vmatpush2.bf16.msra.mxu0 0
    %964 = vmatprep.subr.bf16.mxu0 0
    %965 = vmatpush2.bf16.msra.mxu0 0
    %966 = vmatprep.subr.bf16.mxu0 0
    %967 = vmatpush2.bf16.msra.mxu0 0
    %968 = vmatprep.subr.bf16.mxu0 0
    %969 = vmatpush2.bf16.msra.mxu0 0
    %970 = vmatprep.mubr.bf16.mxu0 0
    %971 = vmatmul.mubr.bf16.gmra.mxu0 %v936
    %v972 = vpop.f32.mrf.mxu0
    %v973 = vadd.f32 0.0, %v972
    %v974 = vpop.f32.mrf.mxu0
    %v975 = vadd.f32 0.0, %v974
    %v976 = vpop.f32.mrf.mxu0
    %v977 = vpop.f32.mrf.mxu0
    %978 = vdwg.mxu0
    %v979 = vadd.f32 %v885, %v973
    %v980 = vadd.f32 %v886, %v975
    %s981 = scalar_lea.vmem %s3, 1792
    %v982 = vld [vmem:[%s981] sm:$0xff]
    %v983 = vld [vmem:[%s981 + $0x8] sm:$0xff]
    %v984 = vld [vmem:[%s981 + $0x10] sm:$0xff]
    %v985 = vld [vmem:[%s981 + $0x18] sm:$0xff]
    %v986 = vld [vmem:[%s981 + $0x20] sm:$0xff]
    %v987 = vld [vmem:[%s981 + $0x28] sm:$0xff]
    %v988 = vld [vmem:[%s981 + $0x30] sm:$0xff]
    %v989 = vld [vmem:[%s981 + $0x38] sm:$0xff]
    %v990 = vld [vmem:[%s981 + $0x40] sm:$0xff]
    %v991 = vld [vmem:[%s981 + $0x48] sm:$0xff]
    %v992 = vld [vmem:[%s981 + $0x50] sm:$0xff]
    %v993 = vld [vmem:[%s981 + $0x58] sm:$0xff]
    %v994 = vld [vmem:[%s981 + $0x60] sm:$0xff]
    %v995 = vld [vmem:[%s981 + $0x68] sm:$0xff]
    %v996 = vld [vmem:[%s981 + $0x70] sm:$0xff]
    %v997 = vld [vmem:[%s981 + $0x78] sm:$0xff]
    %v998 = vld [vmem:[%s981 + $0x80] sm:$0xff]
    %v999 = vld [vmem:[%s981 + $0x88] sm:$0xff]
    %v1000 = vld [vmem:[%s981 + $0x90] sm:$0xff]
    %v1001 = vld [vmem:[%s981 + $0x98] sm:$0xff]
    %v1002 = vld [vmem:[%s981 + $0xa0] sm:$0xff]
    %v1003 = vld [vmem:[%s981 + $0xa8] sm:$0xff]
    %v1004 = vld [vmem:[%s981 + $0xb0] sm:$0xff]
    %v1005 = vld [vmem:[%s981 + $0xb8] sm:$0xff]
    %v1006 = vld [vmem:[%s981 + $0xc0] sm:$0xff]
    %v1007 = vld [vmem:[%s981 + $0xc8] sm:$0xff]
    %v1008 = vld [vmem:[%s981 + $0xd0] sm:$0xff]
    %v1009 = vld [vmem:[%s981 + $0xd8] sm:$0xff]
    %v1010 = vld [vmem:[%s981 + $0xe0] sm:$0xff]
    %v1011 = vld [vmem:[%s981 + $0xe8] sm:$0xff]
    %v1012 = vld [vmem:[%s981 + $0xf0] sm:$0xff]
    %v1013 = vld [vmem:[%s981 + $0xf8] sm:$0xff]
    %v1014 = vpack.c.bf16 %v984, %v982
    %v1015 = vpack.c.bf16 %v985, %v983
    %v1016 = vpack.c.bf16 %v988, %v986
    %v1017 = vpack.c.bf16 %v989, %v987
    %v1018 = vpack.c.bf16 %v992, %v990
    %v1019 = vpack.c.bf16 %v993, %v991
    %v1020 = vpack.c.bf16 %v996, %v994
    %v1021 = vpack.c.bf16 %v997, %v995
    %v1022 = vpack.c.bf16 %v1000, %v998
    %v1023 = vpack.c.bf16 %v1001, %v999
    %v1024 = vpack.c.bf16 %v1004, %v1002
    %v1025 = vpack.c.bf16 %v1005, %v1003
    %v1026 = vpack.c.bf16 %v1008, %v1006
    %v1027 = vpack.c.bf16 %v1009, %v1007
    %v1028 = vpack.c.bf16 %v1012, %v1010
    %v1029 = vpack.c.bf16 %v1013, %v1011
    %v1030 = vrot.slane %v699, 3
    %1032 = vmatprep.subr.bf16.mxu0 %v1029
    %1033 = vmatpush1.bf16.msra.mxu0 %v1028
    %1034 = vmatprep.subr.bf16.mxu0 %v1027
    %1035 = vmatpush1.bf16.msra.mxu0 %v1026
    %1036 = vmatprep.subr.bf16.mxu0 %v1025
    %1037 = vmatpush1.bf16.msra.mxu0 %v1024
    %1038 = vmatprep.subr.bf16.mxu0 %v1023
    %1039 = vmatpush1.bf16.msra.mxu0 %v1022
    %1040 = vmatprep.subr.bf16.mxu0 %v1021
    %1041 = vmatpush1.bf16.msra.mxu0 %v1020
    %1042 = vmatprep.subr.bf16.mxu0 %v1019
    %1043 = vmatpush1.bf16.msra.mxu0 %v1018
    %1044 = vmatprep.subr.bf16.mxu0 %v1017
    %1045 = vmatpush1.bf16.msra.mxu0 %v1016
    %1046 = vmatprep.subr.bf16.mxu0 %v1015
    %1047 = vmatpush1.bf16.msra.mxu0 %v1014
    %1048 = vmatprep.subr.bf16.mxu0 0
    %1049 = vmatpush2.bf16.msra.mxu0 0
    %1050 = vmatprep.subr.bf16.mxu0 0
    %1051 = vmatpush2.bf16.msra.mxu0 0
    %1052 = vmatprep.subr.bf16.mxu0 0
    %1053 = vmatpush2.bf16.msra.mxu0 0
    %1054 = vmatprep.subr.bf16.mxu0 0
    %1055 = vmatpush2.bf16.msra.mxu0 0
    %1056 = vmatprep.subr.bf16.mxu0 0
    %1057 = vmatpush2.bf16.msra.mxu0 0
    %1058 = vmatprep.subr.bf16.mxu0 0
    %1059 = vmatpush2.bf16.msra.mxu0 0
    %1060 = vmatprep.subr.bf16.mxu0 0
    %1061 = vmatpush2.bf16.msra.mxu0 0
    %1062 = vmatprep.subr.bf16.mxu0 0
    %1063 = vmatpush2.bf16.msra.mxu0 0
    %1064 = vmatprep.mubr.bf16.mxu0 0
    %1065 = vmatmul.mubr.bf16.gmra.mxu0 %v1030
    %v1066 = vpop.f32.mrf.mxu0
    %v1067 = vadd.f32 0.0, %v1066
    %v1068 = vpop.f32.mrf.mxu0
    %v1069 = vadd.f32 0.0, %v1068
    %v1070 = vpop.f32.mrf.mxu0
    %v1071 = vpop.f32.mrf.mxu0
    %1072 = vdwg.mxu0
    %v1073 = vadd.f32 %v979, %v1067
    %v1074 = vadd.f32 %v980, %v1069
    %v1075 = vpack.c.bf16 %v327, %v327
    %s1076 = scalar_lea.vmem %s3, 2048
    %v1077 = vld [vmem:[%s1076] sm:$0xff]
    %v1078 = vld [vmem:[%s1076 + $0x8] sm:$0xff]
    %v1079 = vld [vmem:[%s1076 + $0x10] sm:$0xff]
    %v1080 = vld [vmem:[%s1076 + $0x18] sm:$0xff]
    %v1081 = vld [vmem:[%s1076 + $0x20] sm:$0xff]
    %v1082 = vld [vmem:[%s1076 + $0x28] sm:$0xff]
    %v1083 = vld [vmem:[%s1076 + $0x30] sm:$0xff]
    %v1084 = vld [vmem:[%s1076 + $0x38] sm:$0xff]
    %v1085 = vld [vmem:[%s1076 + $0x40] sm:$0xff]
    %v1086 = vld [vmem:[%s1076 + $0x48] sm:$0xff]
    %v1087 = vld [vmem:[%s1076 + $0x50] sm:$0xff]
    %v1088 = vld [vmem:[%s1076 + $0x58] sm:$0xff]
    %v1089 = vld [vmem:[%s1076 + $0x60] sm:$0xff]
    %v1090 = vld [vmem:[%s1076 + $0x68] sm:$0xff]
    %v1091 = vld [vmem:[%s1076 + $0x70] sm:$0xff]
    %v1092 = vld [vmem:[%s1076 + $0x78] sm:$0xff]
    %v1093 = vld [vmem:[%s1076 + $0x80] sm:$0xff]
    %v1094 = vld [vmem:[%s1076 + $0x88] sm:$0xff]
    %v1095 = vld [vmem:[%s1076 + $0x90] sm:$0xff]
    %v1096 = vld [vmem:[%s1076 + $0x98] sm:$0xff]
    %v1097 = vld [vmem:[%s1076 + $0xa0] sm:$0xff]
    %v1098 = vld [vmem:[%s1076 + $0xa8] sm:$0xff]
    %v1099 = vld [vmem:[%s1076 + $0xb0] sm:$0xff]
    %v1100 = vld [vmem:[%s1076 + $0xb8] sm:$0xff]
    %v1101 = vld [vmem:[%s1076 + $0xc0] sm:$0xff]
    %v1102 = vld [vmem:[%s1076 + $0xc8] sm:$0xff]
    %v1103 = vld [vmem:[%s1076 + $0xd0] sm:$0xff]
    %v1104 = vld [vmem:[%s1076 + $0xd8] sm:$0xff]
    %v1105 = vld [vmem:[%s1076 + $0xe0] sm:$0xff]
    %v1106 = vld [vmem:[%s1076 + $0xe8] sm:$0xff]
    %v1107 = vld [vmem:[%s1076 + $0xf0] sm:$0xff]
    %v1108 = vld [vmem:[%s1076 + $0xf8] sm:$0xff]
    %v1109 = vpack.c.bf16 %v1079, %v1077
    %v1110 = vpack.c.bf16 %v1080, %v1078
    %v1111 = vpack.c.bf16 %v1083, %v1081
    %v1112 = vpack.c.bf16 %v1084, %v1082
    %v1113 = vpack.c.bf16 %v1087, %v1085
    %v1114 = vpack.c.bf16 %v1088, %v1086
    %v1115 = vpack.c.bf16 %v1091, %v1089
    %v1116 = vpack.c.bf16 %v1092, %v1090
    %v1117 = vpack.c.bf16 %v1095, %v1093
    %v1118 = vpack.c.bf16 %v1096, %v1094
    %v1119 = vpack.c.bf16 %v1099, %v1097
    %v1120 = vpack.c.bf16 %v1100, %v1098
    %v1121 = vpack.c.bf16 %v1103, %v1101
    %v1122 = vpack.c.bf16 %v1104, %v1102
    %v1123 = vpack.c.bf16 %v1107, %v1105
    %v1124 = vpack.c.bf16 %v1108, %v1106
    %1125 = vmatprep.subr.bf16.mxu0 %v1124
    %1126 = vmatpush1.bf16.msra.mxu0 %v1123
    %1127 = vmatprep.subr.bf16.mxu0 %v1122
    %1128 = vmatpush1.bf16.msra.mxu0 %v1121
    %1129 = vmatprep.subr.bf16.mxu0 %v1120
    %1130 = vmatpush1.bf16.msra.mxu0 %v1119
    %1131 = vmatprep.subr.bf16.mxu0 %v1118
    %1132 = vmatpush1.bf16.msra.mxu0 %v1117
    %1133 = vmatprep.subr.bf16.mxu0 %v1116
    %1134 = vmatpush1.bf16.msra.mxu0 %v1115
    %1135 = vmatprep.subr.bf16.mxu0 %v1114
    %1136 = vmatpush1.bf16.msra.mxu0 %v1113
    %1137 = vmatprep.subr.bf16.mxu0 %v1112
    %1138 = vmatpush1.bf16.msra.mxu0 %v1111
    %1139 = vmatprep.subr.bf16.mxu0 %v1110
    %1140 = vmatpush1.bf16.msra.mxu0 %v1109
    %1141 = vmatprep.subr.bf16.mxu0 0
    %1142 = vmatpush2.bf16.msra.mxu0 0
    %1143 = vmatprep.subr.bf16.mxu0 0
    %1144 = vmatpush2.bf16.msra.mxu0 0
    %1145 = vmatprep.subr.bf16.mxu0 0
    %1146 = vmatpush2.bf16.msra.mxu0 0
    %1147 = vmatprep.subr.bf16.mxu0 0
    %1148 = vmatpush2.bf16.msra.mxu0 0
    %1149 = vmatprep.subr.bf16.mxu0 0
    %1150 = vmatpush2.bf16.msra.mxu0 0
    %1151 = vmatprep.subr.bf16.mxu0 0
    %1152 = vmatpush2.bf16.msra.mxu0 0
    %1153 = vmatprep.subr.bf16.mxu0 0
    %1154 = vmatpush2.bf16.msra.mxu0 0
    %1155 = vmatprep.subr.bf16.mxu0 0
    %1156 = vmatpush2.bf16.msra.mxu0 0
    %1157 = vmatprep.mubr.bf16.mxu0 0
    %1158 = vmatmul.mubr.bf16.gmra.mxu0 %v1075
    %v1159 = vpop.f32.mrf.mxu0
    %v1160 = vadd.f32 0.0, %v1159
    %v1161 = vpop.f32.mrf.mxu0
    %v1162 = vadd.f32 0.0, %v1161
    %v1163 = vpop.f32.mrf.mxu0
    %v1164 = vpop.f32.mrf.mxu0
    %1165 = vdwg.mxu0
    %v1166 = vadd.f32 %v1073, %v1160
    %v1167 = vadd.f32 %v1074, %v1162
    %v1168 = vld [vmem:[%s4] sm:$0x3]
    %v1170 = vlaneseq
    %v1171 = vshrl.u32 %v1170, 7
    %v1172 = vsub.s32 0, %v1171
    %v1173 = vrot.slane %v1168, %v1172
    %v1174 = vlaneseq
    %v1175 = vshrl.u32 %v1174, 7
    %v1176 = vsub.s32 1, %v1175
    %v1177 = vrot.slane %v1168, %v1176
    %v1180 = vadd.f32 %v1166, %v1173
    %v1181 = vadd.f32 %v1167, %v1177
    %v1182 = vmax.f32 %v1180, 0.0
    %v1183 = vmax.f32 %v1181, 0.0
    %v1184 = vpack.c.bf16 %v1182, %v1182
    %v1185 = vpack.c.bf16 %v1183, %v1183
    %v1186 = vld [vmem:[%s5] sm:$0xff]
    %v1187 = vld [vmem:[%s5 + $0x8] sm:$0xff]
    %v1188 = vld [vmem:[%s5 + $0x10] sm:$0xff]
    %v1189 = vld [vmem:[%s5 + $0x18] sm:$0xff]
    %v1190 = vld [vmem:[%s5 + $0x20] sm:$0xff]
    %v1191 = vld [vmem:[%s5 + $0x28] sm:$0xff]
    %v1192 = vld [vmem:[%s5 + $0x30] sm:$0xff]
    %v1193 = vld [vmem:[%s5 + $0x38] sm:$0xff]
    %v1194 = vld [vmem:[%s5 + $0x40] sm:$0xff]
    %v1195 = vld [vmem:[%s5 + $0x48] sm:$0xff]
    %v1196 = vld [vmem:[%s5 + $0x50] sm:$0xff]
    %v1197 = vld [vmem:[%s5 + $0x58] sm:$0xff]
    %v1198 = vld [vmem:[%s5 + $0x60] sm:$0xff]
    %v1199 = vld [vmem:[%s5 + $0x68] sm:$0xff]
    %v1200 = vld [vmem:[%s5 + $0x70] sm:$0xff]
    %v1201 = vld [vmem:[%s5 + $0x78] sm:$0xff]
    %v1202 = vld [vmem:[%s5 + $0x80] sm:$0xff]
    %v1203 = vld [vmem:[%s5 + $0x88] sm:$0xff]
    %v1204 = vld [vmem:[%s5 + $0x90] sm:$0xff]
    %v1205 = vld [vmem:[%s5 + $0x98] sm:$0xff]
    %v1206 = vld [vmem:[%s5 + $0xa0] sm:$0xff]
    %v1207 = vld [vmem:[%s5 + $0xa8] sm:$0xff]
    %v1208 = vld [vmem:[%s5 + $0xb0] sm:$0xff]
    %v1209 = vld [vmem:[%s5 + $0xb8] sm:$0xff]
    %v1210 = vld [vmem:[%s5 + $0xc0] sm:$0xff]
    %v1211 = vld [vmem:[%s5 + $0xc8] sm:$0xff]
    %v1212 = vld [vmem:[%s5 + $0xd0] sm:$0xff]
    %v1213 = vld [vmem:[%s5 + $0xd8] sm:$0xff]
    %v1214 = vld [vmem:[%s5 + $0xe0] sm:$0xff]
    %v1215 = vld [vmem:[%s5 + $0xe8] sm:$0xff]
    %v1216 = vld [vmem:[%s5 + $0xf0] sm:$0xff]
    %v1217 = vld [vmem:[%s5 + $0xf8] sm:$0xff]
    %v1218 = vpack.c.bf16 %v1187, %v1186
    %v1219 = vpack.c.bf16 %v1189, %v1188
    %v1220 = vpack.c.bf16 %v1191, %v1190
    %v1221 = vpack.c.bf16 %v1193, %v1192
    %v1222 = vpack.c.bf16 %v1195, %v1194
    %v1223 = vpack.c.bf16 %v1197, %v1196
    %v1224 = vpack.c.bf16 %v1199, %v1198
    %v1225 = vpack.c.bf16 %v1201, %v1200
    %v1226 = vpack.c.bf16 %v1203, %v1202
    %v1227 = vpack.c.bf16 %v1205, %v1204
    %v1228 = vpack.c.bf16 %v1207, %v1206
    %v1229 = vpack.c.bf16 %v1209, %v1208
    %v1230 = vpack.c.bf16 %v1211, %v1210
    %v1231 = vpack.c.bf16 %v1213, %v1212
    %v1232 = vpack.c.bf16 %v1215, %v1214
    %v1233 = vpack.c.bf16 %v1217, %v1216
    %v1234 = vld [vmem:[%s6] sm:$0x1]
    %v1236 = vlaneseq
    %v1237 = vshrl.u32 %v1236, 7
    %v1238 = vsub.s32 0, %v1237
    %v1239 = vrot.slane %v1234, %v1238
    %1241 = vmatprep.subr.bf16.mxu0 0
    %1242 = vmatpush1.bf16.msra.mxu0 %v1225
    %1243 = vmatprep.subr.bf16.mxu0 0
    %1244 = vmatpush1.bf16.msra.mxu0 %v1224
    %1245 = vmatprep.subr.bf16.mxu0 0
    %1246 = vmatpush1.bf16.msra.mxu0 %v1223
    %1247 = vmatprep.subr.bf16.mxu0 0
    %1248 = vmatpush1.bf16.msra.mxu0 %v1222
    %1249 = vmatprep.subr.bf16.mxu0 0
    %1250 = vmatpush1.bf16.msra.mxu0 %v1221
    %1251 = vmatprep.subr.bf16.mxu0 0
    %1252 = vmatpush1.bf16.msra.mxu0 %v1220
    %1253 = vmatprep.subr.bf16.mxu0 0
    %1254 = vmatpush1.bf16.msra.mxu0 %v1219
    %1255 = vmatprep.subr.bf16.mxu0 0
    %1256 = vmatpush1.bf16.msra.mxu0 %v1218
    %1257 = vmatprep.subr.bf16.mxu0 0
    %1258 = vmatpush2.bf16.msra.mxu0 %v1233
    %1259 = vmatprep.subr.bf16.mxu0 0
    %1260 = vmatpush2.bf16.msra.mxu0 %v1232
    %1261 = vmatprep.subr.bf16.mxu0 0
    %1262 = vmatpush2.bf16.msra.mxu0 %v1231
    %1263 = vmatprep.subr.bf16.mxu0 0
    %1264 = vmatpush2.bf16.msra.mxu0 %v1230
    %1265 = vmatprep.subr.bf16.mxu0 0
    %1266 = vmatpush2.bf16.msra.mxu0 %v1229
    %1267 = vmatprep.subr.bf16.mxu0 0
    %1268 = vmatpush2.bf16.msra.mxu0 %v1228
    %1269 = vmatprep.subr.bf16.mxu0 0
    %1270 = vmatpush2.bf16.msra.mxu0 %v1227
    %1271 = vmatprep.subr.bf16.mxu0 0
    %1272 = vmatpush2.bf16.msra.mxu0 %v1226
    %1273 = vmatprep.mubr.bf16.mxu0 %v1185
    %1274 = vmatmul.mubr.bf16.gmra.mxu0 %v1184
    %v1275 = vpop.f32.mrf.mxu0
    %v1276 = vadd.f32 %v1239, %v1275
    %v1277 = vpop.f32.mrf.mxu0
    %v1278 = vpop.f32.mrf.mxu0
    %v1279 = vpop.f32.mrf.mxu0
    %1280 = vdwg.mxu0
    %v1281 = vmax.f32 %v1276, 0.0
    %v1282 = vpack.c.bf16 %v1281, %v1281
    %v1283 = vld [vmem:[%s7] sm:$0xff]
    %v1284 = vld [vmem:[%s7 + $0x8] sm:$0xff]
    %v1285 = vld [vmem:[%s7 + $0x10] sm:$0xff]
    %v1286 = vld [vmem:[%s7 + $0x18] sm:$0xff]
    %v1287 = vld [vmem:[%s7 + $0x20] sm:$0xff]
    %v1288 = vld [vmem:[%s7 + $0x28] sm:$0xff]
    %v1289 = vld [vmem:[%s7 + $0x30] sm:$0xff]
    %v1290 = vld [vmem:[%s7 + $0x38] sm:$0xff]
    %v1291 = vld [vmem:[%s7 + $0x40] sm:$0xff]
    %v1292 = vld [vmem:[%s7 + $0x48] sm:$0xff]
    %v1293 = vld [vmem:[%s7 + $0x50] sm:$0xff]
    %v1294 = vld [vmem:[%s7 + $0x58] sm:$0xff]
    %v1295 = vld [vmem:[%s7 + $0x60] sm:$0xf]
    %v1296 = vpack.c.bf16 %v1284, %v1283
    %v1297 = vpack.c.bf16 %v1286, %v1285
    %v1298 = vpack.c.bf16 %v1288, %v1287
    %v1299 = vpack.c.bf16 %v1290, %v1289
    %v1300 = vpack.c.bf16 %v1292, %v1291
    %v1301 = vpack.c.bf16 %v1294, %v1293
    %v1302 = vpack.c.bf16 %v1295, %v1295
    %v1303 = vld [vmem:[%s8] sm:$0x1]
    %v1305 = vlaneseq
    %v1306 = vshrl.u32 %v1305, 7
    %v1307 = vsub.s32 0, %v1306
    %v1308 = vrot.slane %v1303, %v1307
    %vm1310 = vcmask 818176
    %v1312 = vsel %vm1310, %v1282, 0
    %vm1314 = vcmask 1041408
    %v1316 = vsel %vm1314, %v1302, 0
    %1318 = vmatprep.subr.bf16.mxu0 0
    %1319 = vmatpush1.bf16.msra.mxu0 0
    %1320 = vmatprep.subr.bf16.mxu0 0
    %1321 = vmatpush1.bf16.msra.mxu0 %v1316
    %1322 = vmatprep.subr.bf16.mxu0 0
    %1323 = vmatpush1.bf16.msra.mxu0 %v1301
    %1324 = vmatprep.subr.bf16.mxu0 0
    %1325 = vmatpush1.bf16.msra.mxu0 %v1300
    %1326 = vmatprep.subr.bf16.mxu0 0
    %1327 = vmatpush1.bf16.msra.mxu0 %v1299
    %1328 = vmatprep.subr.bf16.mxu0 0
    %1329 = vmatpush1.bf16.msra.mxu0 %v1298
    %1330 = vmatprep.subr.bf16.mxu0 0
    %1331 = vmatpush1.bf16.msra.mxu0 %v1297
    %1332 = vmatprep.subr.bf16.mxu0 0
    %1333 = vmatpush1.bf16.msra.mxu0 %v1296
    %1334 = vmatprep.subr.bf16.mxu0 0
    %1335 = vmatpush2.bf16.msra.mxu0 0
    %1336 = vmatprep.subr.bf16.mxu0 0
    %1337 = vmatpush2.bf16.msra.mxu0 0
    %1338 = vmatprep.subr.bf16.mxu0 0
    %1339 = vmatpush2.bf16.msra.mxu0 0
    %1340 = vmatprep.subr.bf16.mxu0 0
    %1341 = vmatpush2.bf16.msra.mxu0 0
    %1342 = vmatprep.subr.bf16.mxu0 0
    %1343 = vmatpush2.bf16.msra.mxu0 0
    %1344 = vmatprep.subr.bf16.mxu0 0
    %1345 = vmatpush2.bf16.msra.mxu0 0
    %1346 = vmatprep.subr.bf16.mxu0 0
    %1347 = vmatpush2.bf16.msra.mxu0 0
    %1348 = vmatprep.subr.bf16.mxu0 0
    %1349 = vmatpush2.bf16.msra.mxu0 0
    %1350 = vmatprep.mubr.bf16.mxu0 0
    %1351 = vmatmul.mubr.bf16.gmra.mxu0 %v1312
    %v1352 = vpop.f32.mrf.mxu0
    %v1353 = vadd.f32 %v1308, %v1352
    %v1354 = vpop.f32.mrf.mxu0
    %v1355 = vpop.f32.mrf.mxu0
    %v1356 = vpop.f32.mrf.mxu0
    %1357 = vdwg.mxu0
    %v1358 = vlaneseq
    %v1359 = vand.u32 %v1358, 127
    %vm1360 = vcmp.lt.s32.totalorder %v1359, 1
    %v1361 = vtanh.pop %v1353
    %v1362 = vxor.u32 %v1353, 2147483648
    %v1363 = vmul.f32 %v1362, 1.442695
    %v1364 = vpow.pop %v1363
    %v1365 = vadd.f32 %v1364, 1.0
    %v1366 = vrcp.pop %v1365
    %v1367 = vmul.f32 1.0, %v1366
    %v1368 = vsel %vm1360, %v1361, %v1367
    %vm1369 = vcmask 17408
    %1370 = vst.msk [vmem:[#allocation2] sm:$0x3] %vm1369, %v1368
    // Predicated region
    $region38: #{actor_forward.9} parent=1 // pred_check
      _
    $region39: #{actor_forward.9} parent=1 // pred_check_branch
      %1372 = sbr.rel (0) target = $region41
    $region40: #{actor_forward.9} parent=1 // pred_region
      %s1374 = ssub.s32 32, 32
      %1375 = vsyncadd [#allocation3], %s1374
      %s1377 = sshll.u32 [#allocation2], 4
      %s1378 = int_to_ptr.vmem [resolvable:$true] %s1377
      %1380 = dma.vmem_to_hbm [thread:$0]  %s1378, 32, %s9, [#allocation3]
    $region41: #{actor_forward.9} parent=1 // pred_fallthru
      _
    // Predicated region
    $region42: #{actor_forward.9} parent=1 // pred_check
      _
    $region43: #{actor_forward.9} parent=1 // pred_check_branch
      %1382 = sbr.rel (0) target = $region45
    $region44: #{actor_forward.9} parent=1 // pred_region
      %1383 = dma.done [#allocation3], 32
    $region45: #{actor_forward.9} parent=1 // pred_fallthru
      _
    %1384 = vsyncpa [#allocation3], 1

</llo_original>
